<compile_context>
chip_gen: v7x
topology: tpu7x:2x2x1
jax: 0.10.0
libtpu: 0.0.40
codegen_flags: <defaults>
</compile_context>

<pallas_src>
import functools

import jax
import jax.numpy as jnp
from jax import lax
from jax.experimental import pallas as pl
from jax.experimental.pallas import tpu as pltpu

# ---- module hyper-parameters (small, consistent with the module defaults) ----
BATCH = 2
CHANNELS = 32          # args.channels
SEQ_LEN = 11           # seq_len default
INPUT_DIM = 2          # inputdim default (= output of output_projection)
NUM_LAYERS = 2         # config['layers']
NEG_SLOPE = 0.01       # F.leaky_relu default

_PREC = lax.Precision.HIGHEST
_CONTRACT_C0 = (((0,), (0,)), ((), ()))   # contract axis 0 of both operands (== a^T @ b)


def fc_kernel(x_ref, w_ref, b_ref, o_ref, *, num_layers, out_dim, batch):
    """Single grid step: all batch elements, all layers, fused.

    x_ref : (B, C, L) f32                 -- NCL input, whole array in VMEM
    w_ref : (num_layers+1, C, C) f32      -- (C_in, C_out) weights; index
                                             num_layers = output projection,
                                             zero-padded on columns >= out_dim
    b_ref : (num_layers+1, 1, C) f32      -- biases (same padding convention)
    o_ref : (B, L, out_dim) f32           -- already in permute(0, 2, 1) layout
    """
    for bi in range(batch):                                     # static unroll (B=2)
        x_cl = x_ref[bi]                                        # (C, L) f32
        # Layer 0 absorbs the NCL->NLC layout change into the MXU contraction:
        #   x_cl^T @ W0  ==  dot_general contracting axis 0 of both operands.
        h = lax.dot_general(x_cl, w_ref[0], _CONTRACT_C0,
                            precision=_PREC,
                            preferred_element_type=jnp.float32) + b_ref[0]
        h = jnp.where(h > 0, h, NEG_SLOPE * h)                  # leaky_relu, f32 VPU
        for i in range(1, num_layers):
            h = jnp.dot(h, w_ref[i], precision=_PREC,
                        preferred_element_type=jnp.float32) + b_ref[i]
            h = jnp.where(h > 0, h, NEG_SLOPE * h)
        # Output projection with the residual distributed through it (linear):
        #   (h + x_lc) @ Wout + bout  ==  h @ Wout + x_cl^T @ Wout + bout
        # -> no explicit transpose of the input tile anywhere in the kernel.
        w_out = w_ref[num_layers]
        y = jnp.dot(h, w_out, precision=_PREC,
                    preferred_element_type=jnp.float32)
        y = y + lax.dot_general(x_cl, w_out, _CONTRACT_C0,
                                precision=_PREC,
                                preferred_element_type=jnp.float32)
        y = y + b_ref[num_layers]                               # (L, C)
        # Masked 2-lane store: negligible at this size.  If L / out_dim ever
        # scale, present a lane-dense output instead (pad out_dim or emit
        # (B, L, C) and slice in the caller).
        o_ref[bi] = y[:, :out_dim]                              # (L, out_dim)


def fc_forward(x_ncl, weights, biases, *, out_dim=INPUT_DIM):
    """x_ncl: (B, C, L) f32; weights: (nl+1, C, C) f32; biases: (nl+1, 1, C) f32
       -> (B, L, out_dim) f32  (== the PyTorch forward output)."""
    B, C, L = x_ncl.shape
    num_layers = weights.shape[0] - 1
    assert num_layers >= 1

    flops = 2 * B * L * C * C * (num_layers + 2)   # +1 proj, +1 distributed residual
    bytes_accessed = 4 * (x_ncl.size + weights.size + biases.size + B * L * out_dim)

    kernel = functools.partial(fc_kernel, num_layers=num_layers,
                               out_dim=out_dim, batch=B)
    return pl.pallas_call(
        kernel,
        out_shape=jax.ShapeDtypeStruct((B, L, out_dim), jnp.float32),
        grid=(1,),                                  # single step: no per-step overhead
        in_specs=[
            pl.BlockSpec((B, C, L), lambda i: (0, 0, 0)),
            pl.BlockSpec(weights.shape, lambda i: (0, 0, 0)),
            pl.BlockSpec(biases.shape, lambda i: (0, 0, 0)),
        ],
        out_specs=pl.BlockSpec((B, L, out_dim), lambda i: (0, 0, 0)),
        compiler_params=pltpu.CompilerParams(
            dimension_semantics=("arbitrary",)),    # size-1 grid: nothing to split
        cost_estimate=pl.CostEstimate(flops=flops, transcendentals=0,
                                      bytes_accessed=bytes_accessed),
    )(x_ncl, weights, biases)


def pack_params(w_res, b_res, w_out, b_out):
    """Pack layer weights/biases (f32, no host-side dtype games needed now)."""
    nl, C, _ = w_res.shape
    out_dim = w_out.shape[-1]
    weights = jnp.zeros((nl + 1, C, C), jnp.float32)
    weights = weights.at[:nl].set(w_res)
    weights = weights.at[nl, :, :out_dim].set(w_out)
    biases = jnp.zeros((nl + 1, 1, C), jnp.float32)
    biases = biases.at[:nl, 0, :].set(b_res)
    biases = biases.at[nl, 0, :out_dim].set(b_out)
    return weights, biases


def init_params(key, zero_output_weight=True):
    k1, k2, k3, k4 = jax.random.split(key, 4)
    # residual layers: Conv1d(C, C, 1) realized as (C_in, C_out) matmul weights
    w_res = 0.1 * jax.random.normal(k1, (NUM_LAYERS, CHANNELS, CHANNELS),
                                    dtype=jnp.float32)
    b_res = 0.1 * jax.random.normal(k2, (NUM_LAYERS, CHANNELS), dtype=jnp.float32)
    # output_projection: Conv1d(C, INPUT_DIM, 1); nn.init.zeros_ on its weight
    if zero_output_weight:
        w_out = jnp.zeros((CHANNELS, INPUT_DIM), dtype=jnp.float32)
    else:
        w_out = 0.1 * jax.random.normal(k4, (CHANNELS, INPUT_DIM), dtype=jnp.float32)
    b_out = 0.1 * jax.random.normal(k3, (INPUT_DIM,), dtype=jnp.float32)
    return w_res, b_res, w_out, b_out


def reference_forward(x_ncl, w_res, b_res, w_out, b_out):
    """Pure-JAX f32 reference of the PyTorch forward (HIGHEST precision dots)."""
    x = jnp.transpose(x_ncl, (0, 2, 1))                      # (B, L, C)
    residual = x
    for i in range(w_res.shape[0]):
        x = jnp.einsum("blc,cd->bld", x, w_res[i],
                       precision=_PREC) + b_res[i][None, None, :]
        x = jnp.where(x > 0, x, NEG_SLOPE * x)
    x = x + residual
    return jnp.einsum("blc,cd->bld", x, w_out,
                      precision=_PREC) + b_out[None, None, :]


if __name__ == "__main__":
    key = jax.random.PRNGKey(0)
    kx, kp = jax.random.split(key)
    x = jax.random.normal(kx, (BATCH, CHANNELS, SEQ_LEN), dtype=jnp.float32)

    # f32 HIGHEST-precision dots everywhere -> tight tolerance.
    TOL = dict(atol=1e-4, rtol=1e-4)

    # 1) spec-faithful parameters (zero-init output-projection weight).
    w_res, b_res, w_out, b_out = init_params(kp, zero_output_weight=True)
    W, Bb = pack_params(w_res, b_res, w_out, b_out)
    out = jax.block_until_ready(fc_forward(x, W, Bb))
    ref = reference_forward(x, w_res, b_res, w_out, b_out)
    assert out.shape == (BATCH, SEQ_LEN, INPUT_DIM), out.shape
    assert jnp.allclose(out, ref, **TOL), "mismatch vs reference (zero-init proj)"

    # 2) non-zero projection weight so the residual stack is numerically observable.
    w_res, b_res, w_out, b_out = init_params(kp, zero_output_weight=False)
    W, Bb = pack_params(w_res, b_res, w_out, b_out)
    out2 = jax.block_until_ready(fc_forward(x, W, Bb))
    ref2 = reference_forward(x, w_res, b_res, w_out, b_out)
    assert out2.shape == (BATCH, SEQ_LEN, INPUT_DIM), out2.shape
    assert jnp.allclose(out2, ref2, **TOL), "mismatch vs reference (random proj)"

    print("KERNEL_OK")
</pallas_src>

<mosaic_0001>
module attributes {stable_mosaic.version = 11 : i64} {
  func.func @fc_kernel(%arg0: i32, %arg1: memref<2x32x11xf32, #tpu.memory_space<vmem>>, %arg2: memref<3x32x32xf32, #tpu.memory_space<vmem>>, %arg3: memref<3x1x32xf32, #tpu.memory_space<vmem>>, %arg4: memref<2x11x2xf32, #tpu.memory_space<vmem>>) attributes {dimension_semantics = [#tpu.dimension_semantics<arbitrary>], iteration_bounds = array<i64: 1>, scalar_prefetch = 0 : i64, scratch_operands = 0 : i64, tpu.core_type = #tpu.core_type<tc>, window_params = [{pipeline_mode = #tpu.pipeline_mode<synchronous>, transform_indices = @transform_0, window_bounds = array<i64: 2, 32, 11>}, {pipeline_mode = #tpu.pipeline_mode<synchronous>, transform_indices = @transform_1, window_bounds = array<i64: 3, 32, 32>}, {pipeline_mode = #tpu.pipeline_mode<synchronous>, transform_indices = @transform_2, window_bounds = array<i64: 3, 1, 32>}, {pipeline_mode = #tpu.pipeline_mode<synchronous>, transform_indices = @transform_3, window_bounds = array<i64: 2, 11, 2>}]} {
    %c0 = arith.constant 0 : index
    %c0_0 = arith.constant 0 : index
    %c0_1 = arith.constant 0 : index
    %0 = vector.load %arg1[%c0, %c0_0, %c0_1] : memref<2x32x11xf32, #tpu.memory_space<vmem>>, vector<1x32x11xf32>
    %1 = vector.shape_cast %0 : vector<1x32x11xf32> to vector<32x11xf32>
    %c0_2 = arith.constant 0 : index
    %c0_3 = arith.constant 0 : index
    %c0_4 = arith.constant 0 : index
    %2 = vector.load %arg2[%c0_2, %c0_3, %c0_4] : memref<3x32x32xf32, #tpu.memory_space<vmem>>, vector<1x32x32xf32>
    %3 = vector.shape_cast %2 : vector<1x32x32xf32> to vector<32x32xf32>
    %cst = arith.constant dense<0.000000e+00> : vector<11x32xf32>
    %4 = tpu.matmul %1, %3, %cst {dimension_numbers = #tpu.dot_dimension_numbers<[0], [0], [1], [1], [0, 1, 1, 1], [], []>, precision = #tpu.contract_precision<fp32>} : vector<32x11xf32>, vector<32x32xf32>, vector<11x32xf32> -> vector<11x32xf32>
    %c0_5 = arith.constant 0 : index
    %c0_6 = arith.constant 0 : index
    %c0_7 = arith.constant 0 : index
    %5 = vector.load %arg3[%c0_5, %c0_6, %c0_7] : memref<3x1x32xf32, #tpu.memory_space<vmem>>, vector<1x1x32xf32>
    %6 = vector.shape_cast %5 : vector<1x1x32xf32> to vector<1x32xf32>
    %7 = vector.broadcast %6 : vector<1x32xf32> to vector<11x32xf32>
    %8 = arith.addf %4, %7 : vector<11x32xf32>
    %cst_8 = arith.constant 0.000000e+00 : f32
    %9 = vector.broadcast %cst_8 : f32 to vector<11x32xf32>
    %10 = arith.cmpf ogt, %8, %9 : vector<11x32xf32>
    %cst_9 = arith.constant 0.00999999977 : f32
    %11 = vector.broadcast %cst_9 : f32 to vector<11x32xf32>
    %12 = arith.mulf %11, %8 : vector<11x32xf32>
    %13 = arith.select %10, %8, %12 : vector<11x32xi1>, vector<11x32xf32>
    %c1 = arith.constant 1 : index
    %c0_10 = arith.constant 0 : index
    %c0_11 = arith.constant 0 : index
    %14 = vector.load %arg2[%c1, %c0_10, %c0_11] : memref<3x32x32xf32, #tpu.memory_space<vmem>>, vector<1x32x32xf32>
    %15 = vector.shape_cast %14 : vector<1x32x32xf32> to vector<32x32xf32>
    %cst_12 = arith.constant dense<0.000000e+00> : vector<11x32xf32>
    %16 = tpu.matmul %13, %15, %cst_12 {dimension_numbers = #tpu.dot_dimension_numbers<[1], [0], [0], [1], [0, 0, 1, 1], [], []>, precision = #tpu.contract_precision<fp32>} : vector<11x32xf32>, vector<32x32xf32>, vector<11x32xf32> -> vector<11x32xf32>
    %c1_13 = arith.constant 1 : index
    %c0_14 = arith.constant 0 : index
    %c0_15 = arith.constant 0 : index
    %17 = vector.load %arg3[%c1_13, %c0_14, %c0_15] : memref<3x1x32xf32, #tpu.memory_space<vmem>>, vector<1x1x32xf32>
    %18 = vector.shape_cast %17 : vector<1x1x32xf32> to vector<1x32xf32>
    %19 = vector.broadcast %18 : vector<1x32xf32> to vector<11x32xf32>
    %20 = arith.addf %16, %19 : vector<11x32xf32>
    %cst_16 = arith.constant 0.000000e+00 : f32
    %21 = vector.broadcast %cst_16 : f32 to vector<11x32xf32>
    %22 = arith.cmpf ogt, %20, %21 : vector<11x32xf32>
    %cst_17 = arith.constant 0.00999999977 : f32
    %23 = vector.broadcast %cst_17 : f32 to vector<11x32xf32>
    %24 = arith.mulf %23, %20 : vector<11x32xf32>
    %25 = arith.select %22, %20, %24 : vector<11x32xi1>, vector<11x32xf32>
    %c2 = arith.constant 2 : index
    %c0_18 = arith.constant 0 : index
    %c0_19 = arith.constant 0 : index
    %26 = vector.load %arg2[%c2, %c0_18, %c0_19] : memref<3x32x32xf32, #tpu.memory_space<vmem>>, vector<1x32x32xf32>
    %27 = vector.shape_cast %26 : vector<1x32x32xf32> to vector<32x32xf32>
    %cst_20 = arith.constant dense<0.000000e+00> : vector<11x32xf32>
    %28 = tpu.matmul %25, %27, %cst_20 {dimension_numbers = #tpu.dot_dimension_numbers<[1], [0], [0], [1], [0, 0, 1, 1], [], []>, precision = #tpu.contract_precision<fp32>} : vector<11x32xf32>, vector<32x32xf32>, vector<11x32xf32> -> vector<11x32xf32>
    %cst_21 = arith.constant dense<0.000000e+00> : vector<11x32xf32>
    %29 = tpu.matmul %1, %27, %cst_21 {dimension_numbers = #tpu.dot_dimension_numbers<[0], [0], [1], [1], [0, 1, 1, 1], [], []>, precision = #tpu.contract_precision<fp32>} : vector<32x11xf32>, vector<32x32xf32>, vector<11x32xf32> -> vector<11x32xf32>
    %30 = arith.addf %28, %29 : vector<11x32xf32>
    %c2_22 = arith.constant 2 : index
    %c0_23 = arith.constant 0 : index
    %c0_24 = arith.constant 0 : index
    %31 = vector.load %arg3[%c2_22, %c0_23, %c0_24] : memref<3x1x32xf32, #tpu.memory_space<vmem>>, vector<1x1x32xf32>
    %32 = vector.shape_cast %31 : vector<1x1x32xf32> to vector<1x32xf32>
    %33 = vector.broadcast %32 : vector<1x32xf32> to vector<11x32xf32>
    %34 = arith.addf %30, %33 : vector<11x32xf32>
    %35 = vector.extract_strided_slice %34 {offsets = [0, 0], sizes = [11, 2], strides = [1, 1]} : vector<11x32xf32> to vector<11x2xf32>
    %c0_25 = arith.constant 0 : index
    %c0_26 = arith.constant 0 : index
    %c0_27 = arith.constant 0 : index
    %36 = vector.load %arg4[%c0_25, %c0_26, %c0_27] : memref<2x11x2xf32, #tpu.memory_space<vmem>>, vector<1x11x2xf32>
    %37 = vector.shape_cast %36 : vector<1x11x2xf32> to vector<11x2xf32>
    %38 = vector.shape_cast %35 : vector<11x2xf32> to vector<1x11x2xf32>
    tpu.vector_store %arg4[%c0_25, %c0_26, %c0_27], %38 {strides = array<i32>} : memref<2x11x2xf32, #tpu.memory_space<vmem>>, vector<1x11x2xf32>,
    %c1_28 = arith.constant 1 : index
    %c0_29 = arith.constant 0 : index
    %c0_30 = arith.constant 0 : index
    %39 = vector.load %arg1[%c1_28, %c0_29, %c0_30] : memref<2x32x11xf32, #tpu.memory_space<vmem>>, vector<1x32x11xf32>
    %40 = vector.shape_cast %39 : vector<1x32x11xf32> to vector<32x11xf32>
    %c0_31 = arith.constant 0 : index
    %c0_32 = arith.constant 0 : index
    %c0_33 = arith.constant 0 : index
    %41 = vector.load %arg2[%c0_31, %c0_32, %c0_33] : memref<3x32x32xf32, #tpu.memory_space<vmem>>, vector<1x32x32xf32>
    %42 = vector.shape_cast %41 : vector<1x32x32xf32> to vector<32x32xf32>
    %cst_34 = arith.constant dense<0.000000e+00> : vector<11x32xf32>
    %43 = tpu.matmul %40, %42, %cst_34 {dimension_numbers = #tpu.dot_dimension_numbers<[0], [0], [1], [1], [0, 1, 1, 1], [], []>, precision = #tpu.contract_precision<fp32>} : vector<32x11xf32>, vector<32x32xf32>, vector<11x32xf32> -> vector<11x32xf32>
    %c0_35 = arith.constant 0 : index
    %c0_36 = arith.constant 0 : index
    %c0_37 = arith.constant 0 : index
    %44 = vector.load %arg3[%c0_35, %c0_36, %c0_37] : memref<3x1x32xf32, #tpu.memory_space<vmem>>, vector<1x1x32xf32>
    %45 = vector.shape_cast %44 : vector<1x1x32xf32> to vector<1x32xf32>
    %46 = vector.broadcast %45 : vector<1x32xf32> to vector<11x32xf32>
    %47 = arith.addf %43, %46 : vector<11x32xf32>
    %cst_38 = arith.constant 0.000000e+00 : f32
    %48 = vector.broadcast %cst_38 : f32 to vector<11x32xf32>
    %49 = arith.cmpf ogt, %47, %48 : vector<11x32xf32>
    %cst_39 = arith.constant 0.00999999977 : f32
    %50 = vector.broadcast %cst_39 : f32 to vector<11x32xf32>
    %51 = arith.mulf %50, %47 : vector<11x32xf32>
    %52 = arith.select %49, %47, %51 : vector<11x32xi1>, vector<11x32xf32>
    %c1_40 = arith.constant 1 : index
    %c0_41 = arith.constant 0 : index
    %c0_42 = arith.constant 0 : index
    %53 = vector.load %arg2[%c1_40, %c0_41, %c0_42] : memref<3x32x32xf32, #tpu.memory_space<vmem>>, vector<1x32x32xf32>
    %54 = vector.shape_cast %53 : vector<1x32x32xf32> to vector<32x32xf32>
    %cst_43 = arith.constant dense<0.000000e+00> : vector<11x32xf32>
    %55 = tpu.matmul %52, %54, %cst_43 {dimension_numbers = #tpu.dot_dimension_numbers<[1], [0], [0], [1], [0, 0, 1, 1], [], []>, precision = #tpu.contract_precision<fp32>} : vector<11x32xf32>, vector<32x32xf32>, vector<11x32xf32> -> vector<11x32xf32>
    %c1_44 = arith.constant 1 : index
    %c0_45 = arith.constant 0 : index
    %c0_46 = arith.constant 0 : index
    %56 = vector.load %arg3[%c1_44, %c0_45, %c0_46] : memref<3x1x32xf32, #tpu.memory_space<vmem>>, vector<1x1x32xf32>
    %57 = vector.shape_cast %56 : vector<1x1x32xf32> to vector<1x32xf32>
    %58 = vector.broadcast %57 : vector<1x32xf32> to vector<11x32xf32>
    %59 = arith.addf %55, %58 : vector<11x32xf32>
    %cst_47 = arith.constant 0.000000e+00 : f32
    %60 = vector.broadcast %cst_47 : f32 to vector<11x32xf32>
    %61 = arith.cmpf ogt, %59, %60 : vector<11x32xf32>
    %cst_48 = arith.constant 0.00999999977 : f32
    %62 = vector.broadcast %cst_48 : f32 to vector<11x32xf32>
    %63 = arith.mulf %62, %59 : vector<11x32xf32>
    %64 = arith.select %61, %59, %63 : vector<11x32xi1>, vector<11x32xf32>
    %c2_49 = arith.constant 2 : index
    %c0_50 = arith.constant 0 : index
    %c0_51 = arith.constant 0 : index
    %65 = vector.load %arg2[%c2_49, %c0_50, %c0_51] : memref<3x32x32xf32, #tpu.memory_space<vmem>>, vector<1x32x32xf32>
    %66 = vector.shape_cast %65 : vector<1x32x32xf32> to vector<32x32xf32>
    %cst_52 = arith.constant dense<0.000000e+00> : vector<11x32xf32>
    %67 = tpu.matmul %64, %66, %cst_52 {dimension_numbers = #tpu.dot_dimension_numbers<[1], [0], [0], [1], [0, 0, 1, 1], [], []>, precision = #tpu.contract_precision<fp32>} : vector<11x32xf32>, vector<32x32xf32>, vector<11x32xf32> -> vector<11x32xf32>
    %cst_53 = arith.constant dense<0.000000e+00> : vector<11x32xf32>
    %68 = tpu.matmul %40, %66, %cst_53 {dimension_numbers = #tpu.dot_dimension_numbers<[0], [0], [1], [1], [0, 1, 1, 1], [], []>, precision = #tpu.contract_precision<fp32>} : vector<32x11xf32>, vector<32x32xf32>, vector<11x32xf32> -> vector<11x32xf32>
    %69 = arith.addf %67, %68 : vector<11x32xf32>
    %c2_54 = arith.constant 2 : index
    %c0_55 = arith.constant 0 : index
    %c0_56 = arith.constant 0 : index
    %70 = vector.load %arg3[%c2_54, %c0_55, %c0_56] : memref<3x1x32xf32, #tpu.memory_space<vmem>>, vector<1x1x32xf32>
    %71 = vector.shape_cast %70 : vector<1x1x32xf32> to vector<1x32xf32>
    %72 = vector.broadcast %71 : vector<1x32xf32> to vector<11x32xf32>
    %73 = arith.addf %69, %72 : vector<11x32xf32>
    %74 = vector.extract_strided_slice %73 {offsets = [0, 0], sizes = [11, 2], strides = [1, 1]} : vector<11x32xf32> to vector<11x2xf32>
    %c1_57 = arith.constant 1 : index
    %c0_58 = arith.constant 0 : index
    %c0_59 = arith.constant 0 : index
    %75 = vector.load %arg4[%c1_57, %c0_58, %c0_59] : memref<2x11x2xf32, #tpu.memory_space<vmem>>, vector<1x11x2xf32>
    %76 = vector.shape_cast %75 : vector<1x11x2xf32> to vector<11x2xf32>
    %77 = vector.shape_cast %74 : vector<11x2xf32> to vector<1x11x2xf32>
    tpu.vector_store %arg4[%c1_57, %c0_58, %c0_59], %77 {strides = array<i32>} : memref<2x11x2xf32, #tpu.memory_space<vmem>>, vector<1x11x2xf32>,
    return
  }
  func.func @transform_0(%arg0: i32) -> (i32, i32, i32) {
    %c0_i32 = arith.constant 0 : i32
    %c0_i32_0 = arith.constant 0 : i32
    %c0_i32_1 = arith.constant 0 : i32
    %c0_i32_2 = arith.constant 0 : i32
    return %c0_i32, %c0_i32_0, %c0_i32_1 : i32, i32, i32
  }
  func.func @transform_1(%arg0: i32) -> (i32, i32, i32) {
    %c0_i32 = arith.constant 0 : i32
    %c0_i32_0 = arith.constant 0 : i32
    %c0_i32_1 = arith.constant 0 : i32
    %c0_i32_2 = arith.constant 0 : i32
    return %c0_i32, %c0_i32_0, %c0_i32_1 : i32, i32, i32
  }
  func.func @transform_2(%arg0: i32) -> (i32, i32, i32) {
    %c0_i32 = arith.constant 0 : i32
    %c0_i32_0 = arith.constant 0 : i32
    %c0_i32_1 = arith.constant 0 : i32
    %c0_i32_2 = arith.constant 0 : i32
    return %c0_i32, %c0_i32_0, %c0_i32_1 : i32, i32, i32
  }
  func.func @transform_3(%arg0: i32) -> (i32, i32, i32) {
    %c0_i32 = arith.constant 0 : i32
    %c0_i32_0 = arith.constant 0 : i32
    %c0_i32_1 = arith.constant 0 : i32
    %c0_i32_2 = arith.constant 0 : i32
    return %c0_i32, %c0_i32_0, %c0_i32_1 : i32, i32, i32
  }
}

</mosaic_0001>

<llo_original>
// kernel: tpu_custom_call.1
$region0: #{tpu_custom_call.1}
  #allocation0 [shape = 'u32[]', space=smem, size = 0x4, offset = 0x4, fixed_abs, tag = 'smem constant byte address 0x4 - core index']
  #allocation1 [shape = 'u32[144,128]{1,0:T(1,128)}', space=vmem, size = 0x12000, scoped, tag = 'internal scratch']
  %s0 = inlined_call_operand.vmem [shape: f32[2,32,11], index: 0, kind: input, shape index: {}]
  %s1 = inlined_call_operand.hbm [shape: f32[3,32,32], index: 1, kind: input, shape index: {}]
  %s2 = inlined_call_operand.vmem [shape: f32[3,1,32], index: 2, kind: input, shape index: {}]
  %s3 = inlined_call_operand.vmem [shape: f32[2,11,2], index: 3, kind: output, shape index: {}]
  %s4 = sld [smem:[#allocation0]]
  $region26: #{tpu_custom_call.1} parent=0
    _
  %s6 = ssub.s32 1, %s4
  %s7 = scalar_select 0, %s6, %s4
  $region1: #{tpu_custom_call.1} parent=0
    #allocation2 [shape = 'u8[49152]{0}', space=vmem, size = 0xc000, scoped, tag = 'input window, operand 1, single buffered']
    #allocation3 [shape = 's32[1]{0}', space=sflag, size = 0x4, scoped, tag = 'scoped memory for tpu_custom_call.1']
    %8 = vsyncpa [#allocation3], 0
    // Predicated region
    $region2: #{tpu_custom_call.1} parent=1 // pred_check
      _
    $region3: #{tpu_custom_call.1} parent=1 // pred_check_branch
      %10 = sbr.rel (0) target = $region5
    $region4: #{tpu_custom_call.1} parent=1 // pred_region
      _
    $region5: #{tpu_custom_call.1} parent=1 // pred_fallthru
      _
    // Predicated region
    $region6: #{tpu_custom_call.1} parent=1 // pred_check
      _
    $region7: #{tpu_custom_call.1} parent=1 // pred_check_branch
      %12 = sbr.rel (0) target = $region9
    $region8: #{tpu_custom_call.1} parent=1 // pred_region
      %s14 = ssub.s32 1536, 1536
      %15 = vsyncadd [#allocation3], %s14
      %s16 = sshll.u32 [#allocation2], 4
      %s17 = int_to_ptr.vmem [resolvable:$true] %s16
      %22 = dma.hbm_to_vmem [thread:$0]  %s1, 1536, %s17, [#allocation3], 128, 128, 8
    $region9: #{tpu_custom_call.1} parent=1 // pred_fallthru
      _
    // Predicated region
    $region10: #{tpu_custom_call.1} parent=1 // pred_check
      _
    $region11: #{tpu_custom_call.1} parent=1 // pred_check_branch
      %24 = sbr.rel (0) target = $region13
    $region12: #{tpu_custom_call.1} parent=1 // pred_region
      _
    $region13: #{tpu_custom_call.1} parent=1 // pred_fallthru
      _
    // Predicated region
    $region14: #{tpu_custom_call.1} parent=1 // pred_check
      _
    $region15: #{tpu_custom_call.1} parent=1 // pred_check_branch
      %26 = sbr.rel (0) target = $region17
    $region16: #{tpu_custom_call.1} parent=1 // pred_region
      %27 = dma.done [#allocation3], 1536
    $region17: #{tpu_custom_call.1} parent=1 // pred_fallthru
      _
    %v28 = vld [vmem:[%s0] sm:$0xff]
    %v29 = vld [vmem:[%s0 + $0x8] sm:$0xff]
    %v30 = vld [vmem:[%s0 + $0x10] sm:$0xff]
    %v31 = vld [vmem:[%s0 + $0x18] sm:$0xff]
    %v32 = vld [vmem:[#allocation2] sm:$0xff]
    %v33 = vld [vmem:[#allocation2 + $0x8] sm:$0xff]
    %v34 = vld [vmem:[#allocation2 + $0x10] sm:$0xff]
    %v35 = vld [vmem:[#allocation2 + $0x18] sm:$0xff]
    %v36 = vld [vmem:[%s2] sm:$0x1]
    %v38 = vlaneseq
    %v39 = vshrl.u32 %v38, 7
    %v40 = vsub.s32 0, %v39
    %v41 = vrot.slane %v36, %v40
    %43 = vxpose.xlu0.b32.start [1/16] %v28, 128
    %44 = vxpose.xlu0.b32.cont [2/16] %v29, 128
    %45 = vxpose.xlu0.b32.cont [3/16] %v30, 128
    %46 = vxpose.xlu0.b32.cont [4/16] %v31, 128
    %47 = vxpose.xlu0.b32.cont [5/16] 0.0, 128
    %48 = vxpose.xlu0.b32.cont [6/16] 0.0, 128
    %49 = vxpose.xlu0.b32.cont [7/16] 0.0, 128
    %50 = vxpose.xlu0.b32.cont [8/16] 0.0, 128
    %51 = vxpose.xlu0.b32.cont [9/16] 0.0, 128
    %52 = vxpose.xlu0.b32.cont [10/16] 0.0, 128
    %53 = vxpose.xlu0.b32.cont [11/16] 0.0, 128
    %54 = vxpose.xlu0.b32.cont [12/16] 0.0, 128
    %55 = vxpose.xlu0.b32.cont [13/16] 0.0, 128
    %56 = vxpose.xlu0.b32.cont [14/16] 0.0, 128
    %57 = vxpose.xlu0.b32.cont [15/16] 0.0, 128
    %58 = vxpose.xlu0.b32.end [16/16] 0.0, 128
    %v59 = vpop.trf.xlu0
    %v60 = vpop.trf.xlu0
    %v61 = vpop.trf.xlu0
    %v62 = vpop.trf.xlu0
    %v63 = vpop.trf.xlu0
    %v64 = vpop.trf.xlu0
    %v65 = vpop.trf.xlu0
    %v66 = vpop.trf.xlu0
    %v67 = vpop.trf.xlu0
    %v68 = vpop.trf.xlu0
    %v69 = vpop.trf.xlu0
    %v70 = vpop.trf.xlu0
    %v71 = vpop.trf.xlu0
    %v72 = vpop.trf.xlu0
    %v73 = vpop.trf.xlu0
    %v74 = vpop.trf.xlu0
    %vm75 = vcmask 261120
    %v77 = vsel %vm75, %v59, 0
    %v80 = vsel %vm75, %v60, 0
    %82 = vmatprep.subr.mxu0 0.0
    %v83 = vand.u32 %v32, 4294901760
    %84 = vmatpush1.msra.mxu0 %v83
    %85 = vmatprep.subr.mxu0 0.0
    %v86 = vand.u32 %v33, 4294901760
    %87 = vmatpush1.msra.mxu0 %v86
    %88 = vmatprep.subr.mxu0 0.0
    %v89 = vand.u32 %v34, 4294901760
    %90 = vmatpush1.msra.mxu0 %v89
    %91 = vmatprep.subr.mxu0 0.0
    %v92 = vand.u32 %v35, 4294901760
    %93 = vmatpush1.msra.mxu0 %v92
    %94 = vmatprep.subr.mxu0 0.0
    %95 = vmatpush1.msra.mxu0 0.0
    %96 = vmatprep.subr.mxu0 0.0
    %97 = vmatpush1.msra.mxu0 0.0
    %98 = vmatprep.subr.mxu0 0.0
    %99 = vmatpush1.msra.mxu0 0.0
    %100 = vmatprep.subr.mxu0 0.0
    %101 = vmatpush1.msra.mxu0 0.0
    %102 = vmatprep.subr.mxu0 0.0
    %103 = vmatpush1.msra.mxu0 0.0
    %104 = vmatprep.subr.mxu0 0.0
    %105 = vmatpush1.msra.mxu0 0.0
    %106 = vmatprep.subr.mxu0 0.0
    %107 = vmatpush1.msra.mxu0 0.0
    %108 = vmatprep.subr.mxu0 0.0
    %109 = vmatpush1.msra.mxu0 0.0
    %110 = vmatprep.subr.mxu0 0.0
    %111 = vmatpush1.msra.mxu0 0.0
    %112 = vmatprep.subr.mxu0 0.0
    %113 = vmatpush1.msra.mxu0 0.0
    %114 = vmatprep.subr.mxu0 0.0
    %115 = vmatpush1.msra.mxu0 0.0
    %116 = vmatprep.subr.mxu0 0.0
    %117 = vmatpush1.msra.mxu0 0.0
    %118 = vmatprep.subr.mxu0 0.0
    %119 = vmatpush1.msra.mxu0 0.0
    %120 = vmatprep.subr.mxu0 0.0
    %121 = vmatpush1.msra.mxu0 0.0
    %122 = vmatprep.subr.mxu0 0.0
    %123 = vmatpush1.msra.mxu0 0.0
    %124 = vmatprep.subr.mxu0 0.0
    %125 = vmatpush1.msra.mxu0 0.0
    %126 = vmatprep.subr.mxu0 0.0
    %127 = vmatpush1.msra.mxu0 0.0
    %128 = vmatprep.subr.mxu0 0.0
    %129 = vmatpush1.msra.mxu0 0.0
    %130 = vmatprep.subr.mxu0 0.0
    %131 = vmatpush1.msra.mxu0 0.0
    %132 = vmatprep.subr.mxu0 0.0
    %133 = vmatpush1.msra.mxu0 0.0
    %134 = vmatprep.subr.mxu0 0.0
    %135 = vmatpush1.msra.mxu0 0.0
    %136 = vmatprep.subr.mxu0 0.0
    %137 = vmatpush1.msra.mxu0 0.0
    %138 = vmatprep.subr.mxu0 0.0
    %139 = vmatpush1.msra.mxu0 0.0
    %140 = vmatprep.subr.mxu0 0.0
    %141 = vmatpush1.msra.mxu0 0.0
    %142 = vmatprep.subr.mxu0 0.0
    %143 = vmatpush1.msra.mxu0 0.0
    %144 = vmatprep.subr.mxu0 0.0
    %145 = vmatpush1.msra.mxu0 0.0
    %146 = vmatprep.subr.mxu0 0.0
    %147 = vmatpush1.msra.mxu0 0.0
    %148 = vmatprep.subr.mxu0 0.0
    %149 = vmatpush1.msra.mxu0 0.0
    %150 = vmatprep.mubr.f32.mxu0 0.0
    %v151 = vand.u32 %v77, 4294901760
    %v152 = vsub.f32 %v77, %v151
    %v153 = vand.u32 %v152, 4294901760
    %v154 = vsub.f32 %v152, %v153
    %v155 = vand.u32 %v154, 4294901760
    %156 = vmatmul.mubr.f32.gmra.mrb[0].mxu0 %v155
    %v157 = vpop.f32.mrb[0].mxu0
    %v158 = vadd.f32 %v41, %v157
    %v159 = vpop.f32.mrb[0].mxu0
    %160 = vmatprep.mubr.f32.mxu0 0.0
    %v161 = vand.u32 %v80, 4294901760
    %v162 = vsub.f32 %v80, %v161
    %v163 = vand.u32 %v162, 4294901760
    %v164 = vsub.f32 %v162, %v163
    %v165 = vand.u32 %v164, 4294901760
    %166 = vmatmul.mubr.f32.gmra.mrb[0].mxu0 %v165
    %v167 = vpop.f32.mrb[0].mxu0
    %v168 = vadd.f32 %v41, %v167
    %v169 = vpop.f32.mrb[0].mxu0
    %170 = vdwg.mxu0
    %171 = vmatprep.subr.mxu0 0.0
    %v172 = vand.u32 %v32, 4294901760
    %v173 = vsub.f32 %v32, %v172
    %v174 = vand.u32 %v173, 4294901760
    %v175 = vsub.f32 %v173, %v174
    %v176 = vand.u32 %v175, 4294901760
    %177 = vmatpush1.msra.mxu0 %v176
    %178 = vmatprep.subr.mxu0 0.0
    %v179 = vand.u32 %v33, 4294901760
    %v180 = vsub.f32 %v33, %v179
    %v181 = vand.u32 %v180, 4294901760
    %v182 = vsub.f32 %v180, %v181
    %v183 = vand.u32 %v182, 4294901760
    %184 = vmatpush1.msra.mxu0 %v183
    %185 = vmatprep.subr.mxu0 0.0
    %v186 = vand.u32 %v34, 4294901760
    %v187 = vsub.f32 %v34, %v186
    %v188 = vand.u32 %v187, 4294901760
    %v189 = vsub.f32 %v187, %v188
    %v190 = vand.u32 %v189, 4294901760
    %191 = vmatpush1.msra.mxu0 %v190
    %192 = vmatprep.subr.mxu0 0.0
    %v193 = vand.u32 %v35, 4294901760
    %v194 = vsub.f32 %v35, %v193
    %v195 = vand.u32 %v194, 4294901760
    %v196 = vsub.f32 %v194, %v195
    %v197 = vand.u32 %v196, 4294901760
    %198 = vmatpush1.msra.mxu0 %v197
    %199 = vmatprep.subr.mxu0 0.0
    %200 = vmatpush1.msra.mxu0 0.0
    %201 = vmatprep.subr.mxu0 0.0
    %202 = vmatpush1.msra.mxu0 0.0
    %203 = vmatprep.subr.mxu0 0.0
    %204 = vmatpush1.msra.mxu0 0.0
    %205 = vmatprep.subr.mxu0 0.0
    %206 = vmatpush1.msra.mxu0 0.0
    %207 = vmatprep.subr.mxu0 0.0
    %208 = vmatpush1.msra.mxu0 0.0
    %209 = vmatprep.subr.mxu0 0.0
    %210 = vmatpush1.msra.mxu0 0.0
    %211 = vmatprep.subr.mxu0 0.0
    %212 = vmatpush1.msra.mxu0 0.0
    %213 = vmatprep.subr.mxu0 0.0
    %214 = vmatpush1.msra.mxu0 0.0
    %215 = vmatprep.subr.mxu0 0.0
    %216 = vmatpush1.msra.mxu0 0.0
    %217 = vmatprep.subr.mxu0 0.0
    %218 = vmatpush1.msra.mxu0 0.0
    %219 = vmatprep.subr.mxu0 0.0
    %220 = vmatpush1.msra.mxu0 0.0
    %221 = vmatprep.subr.mxu0 0.0
    %222 = vmatpush1.msra.mxu0 0.0
    %223 = vmatprep.subr.mxu0 0.0
    %224 = vmatpush1.msra.mxu0 0.0
    %225 = vmatprep.subr.mxu0 0.0
    %226 = vmatpush1.msra.mxu0 0.0
    %227 = vmatprep.subr.mxu0 0.0
    %228 = vmatpush1.msra.mxu0 0.0
    %229 = vmatprep.subr.mxu0 0.0
    %230 = vmatpush1.msra.mxu0 0.0
    %231 = vmatprep.subr.mxu0 0.0
    %232 = vmatpush1.msra.mxu0 0.0
    %233 = vmatprep.subr.mxu0 0.0
    %234 = vmatpush1.msra.mxu0 0.0
    %235 = vmatprep.subr.mxu0 0.0
    %236 = vmatpush1.msra.mxu0 0.0
    %237 = vmatprep.subr.mxu0 0.0
    %238 = vmatpush1.msra.mxu0 0.0
    %239 = vmatprep.subr.mxu0 0.0
    %240 = vmatpush1.msra.mxu0 0.0
    %241 = vmatprep.subr.mxu0 0.0
    %242 = vmatpush1.msra.mxu0 0.0
    %243 = vmatprep.subr.mxu0 0.0
    %244 = vmatpush1.msra.mxu0 0.0
    %245 = vmatprep.subr.mxu0 0.0
    %246 = vmatpush1.msra.mxu0 0.0
    %247 = vmatprep.subr.mxu0 0.0
    %248 = vmatpush1.msra.mxu0 0.0
    %249 = vmatprep.subr.mxu0 0.0
    %250 = vmatpush1.msra.mxu0 0.0
    %251 = vmatprep.subr.mxu0 0.0
    %252 = vmatpush1.msra.mxu0 0.0
    %253 = vmatprep.subr.mxu0 0.0
    %254 = vmatpush1.msra.mxu0 0.0
    %255 = vmatprep.mubr.f32.mxu0 0.0
    %v256 = vand.u32 %v77, 4294901760
    %257 = vmatmul.mubr.f32.gmra.mrb[0].mxu0 %v256
    %v258 = vpop.f32.mrb[0].mxu0
    %v259 = vadd.f32 %v158, %v258
    %v260 = vpop.f32.mrb[0].mxu0
    %261 = vmatprep.mubr.f32.mxu0 0.0
    %v262 = vand.u32 %v80, 4294901760
    %263 = vmatmul.mubr.f32.gmra.mrb[0].mxu0 %v262
    %v264 = vpop.f32.mrb[0].mxu0
    %v265 = vadd.f32 %v168, %v264
    %v266 = vpop.f32.mrb[0].mxu0
    %267 = vdwg.mxu0
    %268 = vmatprep.subr.mxu0 0.0
    %v269 = vand.u32 %v32, 4294901760
    %v270 = vsub.f32 %v32, %v269
    %271 = vmatpush1.msra.mxu0 %v270
    %272 = vmatprep.subr.mxu0 0.0
    %v273 = vand.u32 %v33, 4294901760
    %v274 = vsub.f32 %v33, %v273
    %275 = vmatpush1.msra.mxu0 %v274
    %276 = vmatprep.subr.mxu0 0.0
    %v277 = vand.u32 %v34, 4294901760
    %v278 = vsub.f32 %v34, %v277
    %279 = vmatpush1.msra.mxu0 %v278
    %280 = vmatprep.subr.mxu0 0.0
    %v281 = vand.u32 %v35, 4294901760
    %v282 = vsub.f32 %v35, %v281
    %283 = vmatpush1.msra.mxu0 %v282
    %284 = vmatprep.subr.mxu0 0.0
    %285 = vmatpush1.msra.mxu0 0.0
    %286 = vmatprep.subr.mxu0 0.0
    %287 = vmatpush1.msra.mxu0 0.0
    %288 = vmatprep.subr.mxu0 0.0
    %289 = vmatpush1.msra.mxu0 0.0
    %290 = vmatprep.subr.mxu0 0.0
    %291 = vmatpush1.msra.mxu0 0.0
    %292 = vmatprep.subr.mxu0 0.0
    %293 = vmatpush1.msra.mxu0 0.0
    %294 = vmatprep.subr.mxu0 0.0
    %295 = vmatpush1.msra.mxu0 0.0
    %296 = vmatprep.subr.mxu0 0.0
    %297 = vmatpush1.msra.mxu0 0.0
    %298 = vmatprep.subr.mxu0 0.0
    %299 = vmatpush1.msra.mxu0 0.0
    %300 = vmatprep.subr.mxu0 0.0
    %301 = vmatpush1.msra.mxu0 0.0
    %302 = vmatprep.subr.mxu0 0.0
    %303 = vmatpush1.msra.mxu0 0.0
    %304 = vmatprep.subr.mxu0 0.0
    %305 = vmatpush1.msra.mxu0 0.0
    %306 = vmatprep.subr.mxu0 0.0
    %307 = vmatpush1.msra.mxu0 0.0
    %308 = vmatprep.subr.mxu0 0.0
    %309 = vmatpush1.msra.mxu0 0.0
    %310 = vmatprep.subr.mxu0 0.0
    %311 = vmatpush1.msra.mxu0 0.0
    %312 = vmatprep.subr.mxu0 0.0
    %313 = vmatpush1.msra.mxu0 0.0
    %314 = vmatprep.subr.mxu0 0.0
    %315 = vmatpush1.msra.mxu0 0.0
    %316 = vmatprep.subr.mxu0 0.0
    %317 = vmatpush1.msra.mxu0 0.0
    %318 = vmatprep.subr.mxu0 0.0
    %319 = vmatpush1.msra.mxu0 0.0
    %320 = vmatprep.subr.mxu0 0.0
    %321 = vmatpush1.msra.mxu0 0.0
    %322 = vmatprep.subr.mxu0 0.0
    %323 = vmatpush1.msra.mxu0 0.0
    %324 = vmatprep.subr.mxu0 0.0
    %325 = vmatpush1.msra.mxu0 0.0
    %326 = vmatprep.subr.mxu0 0.0
    %327 = vmatpush1.msra.mxu0 0.0
    %328 = vmatprep.subr.mxu0 0.0
    %329 = vmatpush1.msra.mxu0 0.0
    %330 = vmatprep.subr.mxu0 0.0
    %331 = vmatpush1.msra.mxu0 0.0
    %332 = vmatprep.subr.mxu0 0.0
    %333 = vmatpush1.msra.mxu0 0.0
    %334 = vmatprep.subr.mxu0 0.0
    %335 = vmatpush1.msra.mxu0 0.0
    %336 = vmatprep.subr.mxu0 0.0
    %337 = vmatpush1.msra.mxu0 0.0
    %338 = vmatprep.subr.mxu0 0.0
    %339 = vmatpush1.msra.mxu0 0.0
    %340 = vmatprep.mubr.f32.mxu0 0.0
    %v341 = vand.u32 %v77, 4294901760
    %v342 = vsub.f32 %v77, %v341
    %343 = vmatmul.mubr.f32.gmra.mrb[0].mxu0 %v342
    %v344 = vpop.f32.mrb[0].mxu0
    %v345 = vadd.f32 %v259, %v344
    %v346 = vpop.f32.mrb[0].mxu0
    %347 = vmatprep.mubr.f32.mxu0 0.0
    %v348 = vand.u32 %v80, 4294901760
    %v349 = vsub.f32 %v80, %v348
    %350 = vmatmul.mubr.f32.gmra.mrb[0].mxu0 %v349
    %v351 = vpop.f32.mrb[0].mxu0
    %v352 = vadd.f32 %v265, %v351
    %v353 = vpop.f32.mrb[0].mxu0
    %354 = vdwg.mxu0
    %355 = vmatprep.subr.mxu0 0.0
    %v356 = vand.u32 %v32, 4294901760
    %357 = vmatpush1.msra.mxu0 %v356
    %358 = vmatprep.subr.mxu0 0.0
    %v359 = vand.u32 %v33, 4294901760
    %360 = vmatpush1.msra.mxu0 %v359
    %361 = vmatprep.subr.mxu0 0.0
    %v362 = vand.u32 %v34, 4294901760
    %363 = vmatpush1.msra.mxu0 %v362
    %364 = vmatprep.subr.mxu0 0.0
    %v365 = vand.u32 %v35, 4294901760
    %366 = vmatpush1.msra.mxu0 %v365
    %367 = vmatprep.subr.mxu0 0.0
    %368 = vmatpush1.msra.mxu0 0.0
    %369 = vmatprep.subr.mxu0 0.0
    %370 = vmatpush1.msra.mxu0 0.0
    %371 = vmatprep.subr.mxu0 0.0
    %372 = vmatpush1.msra.mxu0 0.0
    %373 = vmatprep.subr.mxu0 0.0
    %374 = vmatpush1.msra.mxu0 0.0
    %375 = vmatprep.subr.mxu0 0.0
    %376 = vmatpush1.msra.mxu0 0.0
    %377 = vmatprep.subr.mxu0 0.0
    %378 = vmatpush1.msra.mxu0 0.0
    %379 = vmatprep.subr.mxu0 0.0
    %380 = vmatpush1.msra.mxu0 0.0
    %381 = vmatprep.subr.mxu0 0.0
    %382 = vmatpush1.msra.mxu0 0.0
    %383 = vmatprep.subr.mxu0 0.0
    %384 = vmatpush1.msra.mxu0 0.0
    %385 = vmatprep.subr.mxu0 0.0
    %386 = vmatpush1.msra.mxu0 0.0
    %387 = vmatprep.subr.mxu0 0.0
    %388 = vmatpush1.msra.mxu0 0.0
    %389 = vmatprep.subr.mxu0 0.0
    %390 = vmatpush1.msra.mxu0 0.0
    %391 = vmatprep.subr.mxu0 0.0
    %392 = vmatpush1.msra.mxu0 0.0
    %393 = vmatprep.subr.mxu0 0.0
    %394 = vmatpush1.msra.mxu0 0.0
    %395 = vmatprep.subr.mxu0 0.0
    %396 = vmatpush1.msra.mxu0 0.0
    %397 = vmatprep.subr.mxu0 0.0
    %398 = vmatpush1.msra.mxu0 0.0
    %399 = vmatprep.subr.mxu0 0.0
    %400 = vmatpush1.msra.mxu0 0.0
    %401 = vmatprep.subr.mxu0 0.0
    %402 = vmatpush1.msra.mxu0 0.0
    %403 = vmatprep.subr.mxu0 0.0
    %404 = vmatpush1.msra.mxu0 0.0
    %405 = vmatprep.subr.mxu0 0.0
    %406 = vmatpush1.msra.mxu0 0.0
    %407 = vmatprep.subr.mxu0 0.0
    %408 = vmatpush1.msra.mxu0 0.0
    %409 = vmatprep.subr.mxu0 0.0
    %410 = vmatpush1.msra.mxu0 0.0
    %411 = vmatprep.subr.mxu0 0.0
    %412 = vmatpush1.msra.mxu0 0.0
    %413 = vmatprep.subr.mxu0 0.0
    %414 = vmatpush1.msra.mxu0 0.0
    %415 = vmatprep.subr.mxu0 0.0
    %416 = vmatpush1.msra.mxu0 0.0
    %417 = vmatprep.subr.mxu0 0.0
    %418 = vmatpush1.msra.mxu0 0.0
    %419 = vmatprep.subr.mxu0 0.0
    %420 = vmatpush1.msra.mxu0 0.0
    %421 = vmatprep.subr.mxu0 0.0
    %422 = vmatpush1.msra.mxu0 0.0
    %423 = vmatprep.mubr.f32.mxu0 0.0
    %v424 = vand.u32 %v77, 4294901760
    %v425 = vsub.f32 %v77, %v424
    %v426 = vand.u32 %v425, 4294901760
    %427 = vmatmul.mubr.f32.gmra.mrb[0].mxu0 %v426
    %v428 = vpop.f32.mrb[0].mxu0
    %v429 = vadd.f32 %v345, %v428
    %v430 = vpop.f32.mrb[0].mxu0
    %431 = vmatprep.mubr.f32.mxu0 0.0
    %v432 = vand.u32 %v80, 4294901760
    %v433 = vsub.f32 %v80, %v432
    %v434 = vand.u32 %v433, 4294901760
    %435 = vmatmul.mubr.f32.gmra.mrb[0].mxu0 %v434
    %v436 = vpop.f32.mrb[0].mxu0
    %v437 = vadd.f32 %v352, %v436
    %v438 = vpop.f32.mrb[0].mxu0
    %439 = vdwg.mxu0
    %440 = vmatprep.subr.mxu0 0.0
    %v441 = vand.u32 %v32, 4294901760
    %v442 = vsub.f32 %v32, %v441
    %v443 = vand.u32 %v442, 4294901760
    %444 = vmatpush1.msra.mxu0 %v443
    %445 = vmatprep.subr.mxu0 0.0
    %v446 = vand.u32 %v33, 4294901760
    %v447 = vsub.f32 %v33, %v446
    %v448 = vand.u32 %v447, 4294901760
    %449 = vmatpush1.msra.mxu0 %v448
    %450 = vmatprep.subr.mxu0 0.0
    %v451 = vand.u32 %v34, 4294901760
    %v452 = vsub.f32 %v34, %v451
    %v453 = vand.u32 %v452, 4294901760
    %454 = vmatpush1.msra.mxu0 %v453
    %455 = vmatprep.subr.mxu0 0.0
    %v456 = vand.u32 %v35, 4294901760
    %v457 = vsub.f32 %v35, %v456
    %v458 = vand.u32 %v457, 4294901760
    %459 = vmatpush1.msra.mxu0 %v458
    %460 = vmatprep.subr.mxu0 0.0
    %461 = vmatpush1.msra.mxu0 0.0
    %462 = vmatprep.subr.mxu0 0.0
    %463 = vmatpush1.msra.mxu0 0.0
    %464 = vmatprep.subr.mxu0 0.0
    %465 = vmatpush1.msra.mxu0 0.0
    %466 = vmatprep.subr.mxu0 0.0
    %467 = vmatpush1.msra.mxu0 0.0
    %468 = vmatprep.subr.mxu0 0.0
    %469 = vmatpush1.msra.mxu0 0.0
    %470 = vmatprep.subr.mxu0 0.0
    %471 = vmatpush1.msra.mxu0 0.0
    %472 = vmatprep.subr.mxu0 0.0
    %473 = vmatpush1.msra.mxu0 0.0
    %474 = vmatprep.subr.mxu0 0.0
    %475 = vmatpush1.msra.mxu0 0.0
    %476 = vmatprep.subr.mxu0 0.0
    %477 = vmatpush1.msra.mxu0 0.0
    %478 = vmatprep.subr.mxu0 0.0
    %479 = vmatpush1.msra.mxu0 0.0
    %480 = vmatprep.subr.mxu0 0.0
    %481 = vmatpush1.msra.mxu0 0.0
    %482 = vmatprep.subr.mxu0 0.0
    %483 = vmatpush1.msra.mxu0 0.0
    %484 = vmatprep.subr.mxu0 0.0
    %485 = vmatpush1.msra.mxu0 0.0
    %486 = vmatprep.subr.mxu0 0.0
    %487 = vmatpush1.msra.mxu0 0.0
    %488 = vmatprep.subr.mxu0 0.0
    %489 = vmatpush1.msra.mxu0 0.0
    %490 = vmatprep.subr.mxu0 0.0
    %491 = vmatpush1.msra.mxu0 0.0
    %492 = vmatprep.subr.mxu0 0.0
    %493 = vmatpush1.msra.mxu0 0.0
    %494 = vmatprep.subr.mxu0 0.0
    %495 = vmatpush1.msra.mxu0 0.0
    %496 = vmatprep.subr.mxu0 0.0
    %497 = vmatpush1.msra.mxu0 0.0
    %498 = vmatprep.subr.mxu0 0.0
    %499 = vmatpush1.msra.mxu0 0.0
    %500 = vmatprep.subr.mxu0 0.0
    %501 = vmatpush1.msra.mxu0 0.0
    %502 = vmatprep.subr.mxu0 0.0
    %503 = vmatpush1.msra.mxu0 0.0
    %504 = vmatprep.subr.mxu0 0.0
    %505 = vmatpush1.msra.mxu0 0.0
    %506 = vmatprep.subr.mxu0 0.0
    %507 = vmatpush1.msra.mxu0 0.0
    %508 = vmatprep.subr.mxu0 0.0
    %509 = vmatpush1.msra.mxu0 0.0
    %510 = vmatprep.subr.mxu0 0.0
    %511 = vmatpush1.msra.mxu0 0.0
    %512 = vmatprep.subr.mxu0 0.0
    %513 = vmatpush1.msra.mxu0 0.0
    %514 = vmatprep.subr.mxu0 0.0
    %515 = vmatpush1.msra.mxu0 0.0
    %516 = vmatprep.mubr.f32.mxu0 0.0
    %v517 = vand.u32 %v77, 4294901760
    %518 = vmatmul.mubr.f32.gmra.mrb[0].mxu0 %v517
    %v519 = vpop.f32.mrb[0].mxu0
    %v520 = vadd.f32 %v429, %v519
    %v521 = vpop.f32.mrb[0].mxu0
    %522 = vmatprep.mubr.f32.mxu0 0.0
    %v523 = vand.u32 %v80, 4294901760
    %524 = vmatmul.mubr.f32.gmra.mrb[0].mxu0 %v523
    %v525 = vpop.f32.mrb[0].mxu0
    %v526 = vadd.f32 %v437, %v525
    %v527 = vpop.f32.mrb[0].mxu0
    %528 = vdwg.mxu0
    %529 = vmatprep.subr.mxu0 0.0
    %v530 = vand.u32 %v32, 4294901760
    %531 = vmatpush1.msra.mxu0 %v530
    %532 = vmatprep.subr.mxu0 0.0
    %v533 = vand.u32 %v33, 4294901760
    %534 = vmatpush1.msra.mxu0 %v533
    %535 = vmatprep.subr.mxu0 0.0
    %v536 = vand.u32 %v34, 4294901760
    %537 = vmatpush1.msra.mxu0 %v536
    %538 = vmatprep.subr.mxu0 0.0
    %v539 = vand.u32 %v35, 4294901760
    %540 = vmatpush1.msra.mxu0 %v539
    %541 = vmatprep.subr.mxu0 0.0
    %542 = vmatpush1.msra.mxu0 0.0
    %543 = vmatprep.subr.mxu0 0.0
    %544 = vmatpush1.msra.mxu0 0.0
    %545 = vmatprep.subr.mxu0 0.0
    %546 = vmatpush1.msra.mxu0 0.0
    %547 = vmatprep.subr.mxu0 0.0
    %548 = vmatpush1.msra.mxu0 0.0
    %549 = vmatprep.subr.mxu0 0.0
    %550 = vmatpush1.msra.mxu0 0.0
    %551 = vmatprep.subr.mxu0 0.0
    %552 = vmatpush1.msra.mxu0 0.0
    %553 = vmatprep.subr.mxu0 0.0
    %554 = vmatpush1.msra.mxu0 0.0
    %555 = vmatprep.subr.mxu0 0.0
    %556 = vmatpush1.msra.mxu0 0.0
    %557 = vmatprep.subr.mxu0 0.0
    %558 = vmatpush1.msra.mxu0 0.0
    %559 = vmatprep.subr.mxu0 0.0
    %560 = vmatpush1.msra.mxu0 0.0
    %561 = vmatprep.subr.mxu0 0.0
    %562 = vmatpush1.msra.mxu0 0.0
    %563 = vmatprep.subr.mxu0 0.0
    %564 = vmatpush1.msra.mxu0 0.0
    %565 = vmatprep.subr.mxu0 0.0
    %566 = vmatpush1.msra.mxu0 0.0
    %567 = vmatprep.subr.mxu0 0.0
    %568 = vmatpush1.msra.mxu0 0.0
    %569 = vmatprep.subr.mxu0 0.0
    %570 = vmatpush1.msra.mxu0 0.0
    %571 = vmatprep.subr.mxu0 0.0
    %572 = vmatpush1.msra.mxu0 0.0
    %573 = vmatprep.subr.mxu0 0.0
    %574 = vmatpush1.msra.mxu0 0.0
    %575 = vmatprep.subr.mxu0 0.0
    %576 = vmatpush1.msra.mxu0 0.0
    %577 = vmatprep.subr.mxu0 0.0
    %578 = vmatpush1.msra.mxu0 0.0
    %579 = vmatprep.subr.mxu0 0.0
    %580 = vmatpush1.msra.mxu0 0.0
    %581 = vmatprep.subr.mxu0 0.0
    %582 = vmatpush1.msra.mxu0 0.0
    %583 = vmatprep.subr.mxu0 0.0
    %584 = vmatpush1.msra.mxu0 0.0
    %585 = vmatprep.subr.mxu0 0.0
    %586 = vmatpush1.msra.mxu0 0.0
    %587 = vmatprep.subr.mxu0 0.0
    %588 = vmatpush1.msra.mxu0 0.0
    %589 = vmatprep.subr.mxu0 0.0
    %590 = vmatpush1.msra.mxu0 0.0
    %591 = vmatprep.subr.mxu0 0.0
    %592 = vmatpush1.msra.mxu0 0.0
    %593 = vmatprep.subr.mxu0 0.0
    %594 = vmatpush1.msra.mxu0 0.0
    %595 = vmatprep.subr.mxu0 0.0
    %596 = vmatpush1.msra.mxu0 0.0
    %597 = vmatprep.mubr.f32.mxu0 0.0
    %v598 = vand.u32 %v77, 4294901760
    %599 = vmatmul.mubr.f32.gmra.mrb[0].mxu0 %v598
    %v600 = vpop.f32.mrb[0].mxu0
    %v601 = vadd.f32 %v520, %v600
    %v602 = vpop.f32.mrb[0].mxu0
    %603 = vmatprep.mubr.f32.mxu0 0.0
    %v604 = vand.u32 %v80, 4294901760
    %605 = vmatmul.mubr.f32.gmra.mrb[0].mxu0 %v604
    %v606 = vpop.f32.mrb[0].mxu0
    %v607 = vadd.f32 %v526, %v606
    %v608 = vpop.f32.mrb[0].mxu0
    %609 = vdwg.mxu0
    %vm610 = vcmp.gt.f32.partialorder %v601, 0.0
    %vm611 = vcmp.gt.f32.partialorder %v607, 0.0
    %v612 = vmul.f32 %v601, 0.01
    %v613 = vmul.f32 %v607, 0.01
    %v614 = vsel %vm610, %v601, %v612
    %v615 = vsel %vm611, %v607, %v613
    %s616 = scalar_lea.vmem [#allocation2], 32
    %v617 = vld [vmem:[%s616] sm:$0xff]
    %v618 = vld [vmem:[%s616 + $0x8] sm:$0xff]
    %v619 = vld [vmem:[%s616 + $0x10] sm:$0xff]
    %v620 = vld [vmem:[%s616 + $0x18] sm:$0xff]
    %s621 = scalar_lea.vmem %s2, 1
    %v622 = vld [vmem:[%s621] sm:$0x1]
    %v624 = vlaneseq
    %v625 = vshrl.u32 %v624, 7
    %v626 = vsub.s32 0, %v625
    %v627 = vrot.slane %v622, %v626
    %v630 = vsel %vm75, %v614, 0
    %v633 = vsel %vm75, %v615, 0
    %635 = vmatprep.subr.mxu0 0.0
    %v636 = vand.u32 %v617, 4294901760
    %637 = vmatpush1.msra.mxu0 %v636
    %638 = vmatprep.subr.mxu0 0.0
    %v639 = vand.u32 %v618, 4294901760
    %640 = vmatpush1.msra.mxu0 %v639
    %641 = vmatprep.subr.mxu0 0.0
    %v642 = vand.u32 %v619, 4294901760
    %643 = vmatpush1.msra.mxu0 %v642
    %644 = vmatprep.subr.mxu0 0.0
    %v645 = vand.u32 %v620, 4294901760
    %646 = vmatpush1.msra.mxu0 %v645
    %647 = vmatprep.subr.mxu0 0.0
    %648 = vmatpush1.msra.mxu0 0.0
    %649 = vmatprep.subr.mxu0 0.0
    %650 = vmatpush1.msra.mxu0 0.0
    %651 = vmatprep.subr.mxu0 0.0
    %652 = vmatpush1.msra.mxu0 0.0
    %653 = vmatprep.subr.mxu0 0.0
    %654 = vmatpush1.msra.mxu0 0.0
    %655 = vmatprep.subr.mxu0 0.0
    %656 = vmatpush1.msra.mxu0 0.0
    %657 = vmatprep.subr.mxu0 0.0
    %658 = vmatpush1.msra.mxu0 0.0
    %659 = vmatprep.subr.mxu0 0.0
    %660 = vmatpush1.msra.mxu0 0.0
    %661 = vmatprep.subr.mxu0 0.0
    %662 = vmatpush1.msra.mxu0 0.0
    %663 = vmatprep.subr.mxu0 0.0
    %664 = vmatpush1.msra.mxu0 0.0
    %665 = vmatprep.subr.mxu0 0.0
    %666 = vmatpush1.msra.mxu0 0.0
    %667 = vmatprep.subr.mxu0 0.0
    %668 = vmatpush1.msra.mxu0 0.0
    %669 = vmatprep.subr.mxu0 0.0
    %670 = vmatpush1.msra.mxu0 0.0
    %671 = vmatprep.subr.mxu0 0.0
    %672 = vmatpush1.msra.mxu0 0.0
    %673 = vmatprep.subr.mxu0 0.0
    %674 = vmatpush1.msra.mxu0 0.0
    %675 = vmatprep.subr.mxu0 0.0
    %676 = vmatpush1.msra.mxu0 0.0
    %677 = vmatprep.subr.mxu0 0.0
    %678 = vmatpush1.msra.mxu0 0.0
    %679 = vmatprep.subr.mxu0 0.0
    %680 = vmatpush1.msra.mxu0 0.0
    %681 = vmatprep.subr.mxu0 0.0
    %682 = vmatpush1.msra.mxu0 0.0
    %683 = vmatprep.subr.mxu0 0.0
    %684 = vmatpush1.msra.mxu0 0.0
    %685 = vmatprep.subr.mxu0 0.0
    %686 = vmatpush1.msra.mxu0 0.0
    %687 = vmatprep.subr.mxu0 0.0
    %688 = vmatpush1.msra.mxu0 0.0
    %689 = vmatprep.subr.mxu0 0.0
    %690 = vmatpush1.msra.mxu0 0.0
    %691 = vmatprep.subr.mxu0 0.0
    %692 = vmatpush1.msra.mxu0 0.0
    %693 = vmatprep.subr.mxu0 0.0
    %694 = vmatpush1.msra.mxu0 0.0
    %695 = vmatprep.subr.mxu0 0.0
    %696 = vmatpush1.msra.mxu0 0.0
    %697 = vmatprep.subr.mxu0 0.0
    %698 = vmatpush1.msra.mxu0 0.0
    %699 = vmatprep.subr.mxu0 0.0
    %700 = vmatpush1.msra.mxu0 0.0
    %701 = vmatprep.subr.mxu0 0.0
    %702 = vmatpush1.msra.mxu0 0.0
    %703 = vmatprep.mubr.f32.mxu0 0.0
    %v704 = vand.u32 %v630, 4294901760
    %v705 = vsub.f32 %v630, %v704
    %v706 = vand.u32 %v705, 4294901760
    %v707 = vsub.f32 %v705, %v706
    %v708 = vand.u32 %v707, 4294901760
    %709 = vmatmul.mubr.f32.gmra.mrb[0].mxu0 %v708
    %v710 = vpop.f32.mrb[0].mxu0
    %v711 = vadd.f32 %v627, %v710
    %v712 = vpop.f32.mrb[0].mxu0
    %713 = vmatprep.mubr.f32.mxu0 0.0
    %v714 = vand.u32 %v633, 4294901760
    %v715 = vsub.f32 %v633, %v714
    %v716 = vand.u32 %v715, 4294901760
    %v717 = vsub.f32 %v715, %v716
    %v718 = vand.u32 %v717, 4294901760
    %719 = vmatmul.mubr.f32.gmra.mrb[0].mxu0 %v718
    %v720 = vpop.f32.mrb[0].mxu0
    %v721 = vadd.f32 %v627, %v720
    %v722 = vpop.f32.mrb[0].mxu0
    %723 = vdwg.mxu0
    %724 = vmatprep.subr.mxu0 0.0
    %v725 = vand.u32 %v617, 4294901760
    %v726 = vsub.f32 %v617, %v725
    %v727 = vand.u32 %v726, 4294901760
    %v728 = vsub.f32 %v726, %v727
    %v729 = vand.u32 %v728, 4294901760
    %730 = vmatpush1.msra.mxu0 %v729
    %731 = vmatprep.subr.mxu0 0.0
    %v732 = vand.u32 %v618, 4294901760
    %v733 = vsub.f32 %v618, %v732
    %v734 = vand.u32 %v733, 4294901760
    %v735 = vsub.f32 %v733, %v734
    %v736 = vand.u32 %v735, 4294901760
    %737 = vmatpush1.msra.mxu0 %v736
    %738 = vmatprep.subr.mxu0 0.0
    %v739 = vand.u32 %v619, 4294901760
    %v740 = vsub.f32 %v619, %v739
    %v741 = vand.u32 %v740, 4294901760
    %v742 = vsub.f32 %v740, %v741
    %v743 = vand.u32 %v742, 4294901760
    %744 = vmatpush1.msra.mxu0 %v743
    %745 = vmatprep.subr.mxu0 0.0
    %v746 = vand.u32 %v620, 4294901760
    %v747 = vsub.f32 %v620, %v746
    %v748 = vand.u32 %v747, 4294901760
    %v749 = vsub.f32 %v747, %v748
    %v750 = vand.u32 %v749, 4294901760
    %751 = vmatpush1.msra.mxu0 %v750
    %752 = vmatprep.subr.mxu0 0.0
    %753 = vmatpush1.msra.mxu0 0.0
    %754 = vmatprep.subr.mxu0 0.0
    %755 = vmatpush1.msra.mxu0 0.0
    %756 = vmatprep.subr.mxu0 0.0
    %757 = vmatpush1.msra.mxu0 0.0
    %758 = vmatprep.subr.mxu0 0.0
    %759 = vmatpush1.msra.mxu0 0.0
    %760 = vmatprep.subr.mxu0 0.0
    %761 = vmatpush1.msra.mxu0 0.0
    %762 = vmatprep.subr.mxu0 0.0
    %763 = vmatpush1.msra.mxu0 0.0
    %764 = vmatprep.subr.mxu0 0.0
    %765 = vmatpush1.msra.mxu0 0.0
    %766 = vmatprep.subr.mxu0 0.0
    %767 = vmatpush1.msra.mxu0 0.0
    %768 = vmatprep.subr.mxu0 0.0
    %769 = vmatpush1.msra.mxu0 0.0
    %770 = vmatprep.subr.mxu0 0.0
    %771 = vmatpush1.msra.mxu0 0.0
    %772 = vmatprep.subr.mxu0 0.0
    %773 = vmatpush1.msra.mxu0 0.0
    %774 = vmatprep.subr.mxu0 0.0
    %775 = vmatpush1.msra.mxu0 0.0
    %776 = vmatprep.subr.mxu0 0.0
    %777 = vmatpush1.msra.mxu0 0.0
    %778 = vmatprep.subr.mxu0 0.0
    %779 = vmatpush1.msra.mxu0 0.0
    %780 = vmatprep.subr.mxu0 0.0
    %781 = vmatpush1.msra.mxu0 0.0
    %782 = vmatprep.subr.mxu0 0.0
    %783 = vmatpush1.msra.mxu0 0.0
    %784 = vmatprep.subr.mxu0 0.0
    %785 = vmatpush1.msra.mxu0 0.0
    %786 = vmatprep.subr.mxu0 0.0
    %787 = vmatpush1.msra.mxu0 0.0
    %788 = vmatprep.subr.mxu0 0.0
    %789 = vmatpush1.msra.mxu0 0.0
    %790 = vmatprep.subr.mxu0 0.0
    %791 = vmatpush1.msra.mxu0 0.0
    %792 = vmatprep.subr.mxu0 0.0
    %793 = vmatpush1.msra.mxu0 0.0
    %794 = vmatprep.subr.mxu0 0.0
    %795 = vmatpush1.msra.mxu0 0.0
    %796 = vmatprep.subr.mxu0 0.0
    %797 = vmatpush1.msra.mxu0 0.0
    %798 = vmatprep.subr.mxu0 0.0
    %799 = vmatpush1.msra.mxu0 0.0
    %800 = vmatprep.subr.mxu0 0.0
    %801 = vmatpush1.msra.mxu0 0.0
    %802 = vmatprep.subr.mxu0 0.0
    %803 = vmatpush1.msra.mxu0 0.0
    %804 = vmatprep.subr.mxu0 0.0
    %805 = vmatpush1.msra.mxu0 0.0
    %806 = vmatprep.subr.mxu0 0.0
    %807 = vmatpush1.msra.mxu0 0.0
    %808 = vmatprep.mubr.f32.mxu0 0.0
    %v809 = vand.u32 %v630, 4294901760
    %810 = vmatmul.mubr.f32.gmra.mrb[0].mxu0 %v809
    %v811 = vpop.f32.mrb[0].mxu0
    %v812 = vadd.f32 %v711, %v811
    %v813 = vpop.f32.mrb[0].mxu0
    %814 = vmatprep.mubr.f32.mxu0 0.0
    %v815 = vand.u32 %v633, 4294901760
    %816 = vmatmul.mubr.f32.gmra.mrb[0].mxu0 %v815
    %v817 = vpop.f32.mrb[0].mxu0
    %v818 = vadd.f32 %v721, %v817
    %v819 = vpop.f32.mrb[0].mxu0
    %820 = vdwg.mxu0
    %821 = vmatprep.subr.mxu0 0.0
    %v822 = vand.u32 %v617, 4294901760
    %v823 = vsub.f32 %v617, %v822
    %824 = vmatpush1.msra.mxu0 %v823
    %825 = vmatprep.subr.mxu0 0.0
    %v826 = vand.u32 %v618, 4294901760
    %v827 = vsub.f32 %v618, %v826
    %828 = vmatpush1.msra.mxu0 %v827
    %829 = vmatprep.subr.mxu0 0.0
    %v830 = vand.u32 %v619, 4294901760
    %v831 = vsub.f32 %v619, %v830
    %832 = vmatpush1.msra.mxu0 %v831
    %833 = vmatprep.subr.mxu0 0.0
    %v834 = vand.u32 %v620, 4294901760
    %v835 = vsub.f32 %v620, %v834
    %836 = vmatpush1.msra.mxu0 %v835
    %837 = vmatprep.subr.mxu0 0.0
    %838 = vmatpush1.msra.mxu0 0.0
    %839 = vmatprep.subr.mxu0 0.0
    %840 = vmatpush1.msra.mxu0 0.0
    %841 = vmatprep.subr.mxu0 0.0
    %842 = vmatpush1.msra.mxu0 0.0
    %843 = vmatprep.subr.mxu0 0.0
    %844 = vmatpush1.msra.mxu0 0.0
    %845 = vmatprep.subr.mxu0 0.0
    %846 = vmatpush1.msra.mxu0 0.0
    %847 = vmatprep.subr.mxu0 0.0
    %848 = vmatpush1.msra.mxu0 0.0
    %849 = vmatprep.subr.mxu0 0.0
    %850 = vmatpush1.msra.mxu0 0.0
    %851 = vmatprep.subr.mxu0 0.0
    %852 = vmatpush1.msra.mxu0 0.0
    %853 = vmatprep.subr.mxu0 0.0
    %854 = vmatpush1.msra.mxu0 0.0
    %855 = vmatprep.subr.mxu0 0.0
    %856 = vmatpush1.msra.mxu0 0.0
    %857 = vmatprep.subr.mxu0 0.0
    %858 = vmatpush1.msra.mxu0 0.0
    %859 = vmatprep.subr.mxu0 0.0
    %860 = vmatpush1.msra.mxu0 0.0
    %861 = vmatprep.subr.mxu0 0.0
    %862 = vmatpush1.msra.mxu0 0.0
    %863 = vmatprep.subr.mxu0 0.0
    %864 = vmatpush1.msra.mxu0 0.0
    %865 = vmatprep.subr.mxu0 0.0
    %866 = vmatpush1.msra.mxu0 0.0
    %867 = vmatprep.subr.mxu0 0.0
    %868 = vmatpush1.msra.mxu0 0.0
    %869 = vmatprep.subr.mxu0 0.0
    %870 = vmatpush1.msra.mxu0 0.0
    %871 = vmatprep.subr.mxu0 0.0
    %872 = vmatpush1.msra.mxu0 0.0
    %873 = vmatprep.subr.mxu0 0.0
    %874 = vmatpush1.msra.mxu0 0.0
    %875 = vmatprep.subr.mxu0 0.0
    %876 = vmatpush1.msra.mxu0 0.0
    %877 = vmatprep.subr.mxu0 0.0
    %878 = vmatpush1.msra.mxu0 0.0
    %879 = vmatprep.subr.mxu0 0.0
    %880 = vmatpush1.msra.mxu0 0.0
    %881 = vmatprep.subr.mxu0 0.0
    %882 = vmatpush1.msra.mxu0 0.0
    %883 = vmatprep.subr.mxu0 0.0
    %884 = vmatpush1.msra.mxu0 0.0
    %885 = vmatprep.subr.mxu0 0.0
    %886 = vmatpush1.msra.mxu0 0.0
    %887 = vmatprep.subr.mxu0 0.0
    %888 = vmatpush1.msra.mxu0 0.0
    %889 = vmatprep.subr.mxu0 0.0
    %890 = vmatpush1.msra.mxu0 0.0
    %891 = vmatprep.subr.mxu0 0.0
    %892 = vmatpush1.msra.mxu0 0.0
    %893 = vmatprep.mubr.f32.mxu0 0.0
    %v894 = vand.u32 %v630, 4294901760
    %v895 = vsub.f32 %v630, %v894
    %896 = vmatmul.mubr.f32.gmra.mrb[0].mxu0 %v895
    %v897 = vpop.f32.mrb[0].mxu0
    %v898 = vadd.f32 %v812, %v897
    %v899 = vpop.f32.mrb[0].mxu0
    %900 = vmatprep.mubr.f32.mxu0 0.0
    %v901 = vand.u32 %v633, 4294901760
    %v902 = vsub.f32 %v633, %v901
    %903 = vmatmul.mubr.f32.gmra.mrb[0].mxu0 %v902
    %v904 = vpop.f32.mrb[0].mxu0
    %v905 = vadd.f32 %v818, %v904
    %v906 = vpop.f32.mrb[0].mxu0
    %907 = vdwg.mxu0
    %908 = vmatprep.subr.mxu0 0.0
    %v909 = vand.u32 %v617, 4294901760
    %910 = vmatpush1.msra.mxu0 %v909
    %911 = vmatprep.subr.mxu0 0.0
    %v912 = vand.u32 %v618, 4294901760
    %913 = vmatpush1.msra.mxu0 %v912
    %914 = vmatprep.subr.mxu0 0.0
    %v915 = vand.u32 %v619, 4294901760
    %916 = vmatpush1.msra.mxu0 %v915
    %917 = vmatprep.subr.mxu0 0.0
    %v918 = vand.u32 %v620, 4294901760
    %919 = vmatpush1.msra.mxu0 %v918
    %920 = vmatprep.subr.mxu0 0.0
    %921 = vmatpush1.msra.mxu0 0.0
    %922 = vmatprep.subr.mxu0 0.0
    %923 = vmatpush1.msra.mxu0 0.0
    %924 = vmatprep.subr.mxu0 0.0
    %925 = vmatpush1.msra.mxu0 0.0
    %926 = vmatprep.subr.mxu0 0.0
    %927 = vmatpush1.msra.mxu0 0.0
    %928 = vmatprep.subr.mxu0 0.0
    %929 = vmatpush1.msra.mxu0 0.0
    %930 = vmatprep.subr.mxu0 0.0
    %931 = vmatpush1.msra.mxu0 0.0
    %932 = vmatprep.subr.mxu0 0.0
    %933 = vmatpush1.msra.mxu0 0.0
    %934 = vmatprep.subr.mxu0 0.0
    %935 = vmatpush1.msra.mxu0 0.0
    %936 = vmatprep.subr.mxu0 0.0
    %937 = vmatpush1.msra.mxu0 0.0
    %938 = vmatprep.subr.mxu0 0.0
    %939 = vmatpush1.msra.mxu0 0.0
    %940 = vmatprep.subr.mxu0 0.0
    %941 = vmatpush1.msra.mxu0 0.0
    %942 = vmatprep.subr.mxu0 0.0
    %943 = vmatpush1.msra.mxu0 0.0
    %944 = vmatprep.subr.mxu0 0.0
    %945 = vmatpush1.msra.mxu0 0.0
    %946 = vmatprep.subr.mxu0 0.0
    %947 = vmatpush1.msra.mxu0 0.0
    %948 = vmatprep.subr.mxu0 0.0
    %949 = vmatpush1.msra.mxu0 0.0
    %950 = vmatprep.subr.mxu0 0.0
    %951 = vmatpush1.msra.mxu0 0.0
    %952 = vmatprep.subr.mxu0 0.0
    %953 = vmatpush1.msra.mxu0 0.0
    %954 = vmatprep.subr.mxu0 0.0
    %955 = vmatpush1.msra.mxu0 0.0
    %956 = vmatprep.subr.mxu0 0.0
    %957 = vmatpush1.msra.mxu0 0.0
    %958 = vmatprep.subr.mxu0 0.0
    %959 = vmatpush1.msra.mxu0 0.0
    %960 = vmatprep.subr.mxu0 0.0
    %961 = vmatpush1.msra.mxu0 0.0
    %962 = vmatprep.subr.mxu0 0.0
    %963 = vmatpush1.msra.mxu0 0.0
    %964 = vmatprep.subr.mxu0 0.0
    %965 = vmatpush1.msra.mxu0 0.0
    %966 = vmatprep.subr.mxu0 0.0
    %967 = vmatpush1.msra.mxu0 0.0
    %968 = vmatprep.subr.mxu0 0.0
    %969 = vmatpush1.msra.mxu0 0.0
    %970 = vmatprep.subr.mxu0 0.0
    %971 = vmatpush1.msra.mxu0 0.0
    %972 = vmatprep.subr.mxu0 0.0
    %973 = vmatpush1.msra.mxu0 0.0
    %974 = vmatprep.subr.mxu0 0.0
    %975 = vmatpush1.msra.mxu0 0.0
    %976 = vmatprep.mubr.f32.mxu0 0.0
    %v977 = vand.u32 %v630, 4294901760
    %v978 = vsub.f32 %v630, %v977
    %v979 = vand.u32 %v978, 4294901760
    %980 = vmatmul.mubr.f32.gmra.mrb[0].mxu0 %v979
    %v981 = vpop.f32.mrb[0].mxu0
    %v982 = vadd.f32 %v898, %v981
    %v983 = vpop.f32.mrb[0].mxu0
    %984 = vmatprep.mubr.f32.mxu0 0.0
    %v985 = vand.u32 %v633, 4294901760
    %v986 = vsub.f32 %v633, %v985
    %v987 = vand.u32 %v986, 4294901760
    %988 = vmatmul.mubr.f32.gmra.mrb[0].mxu0 %v987
    %v989 = vpop.f32.mrb[0].mxu0
    %v990 = vadd.f32 %v905, %v989
    %v991 = vpop.f32.mrb[0].mxu0
    %992 = vdwg.mxu0
    %993 = vmatprep.subr.mxu0 0.0
    %v994 = vand.u32 %v617, 4294901760
    %v995 = vsub.f32 %v617, %v994
    %v996 = vand.u32 %v995, 4294901760
    %997 = vmatpush1.msra.mxu0 %v996
    %998 = vmatprep.subr.mxu0 0.0
    %v999 = vand.u32 %v618, 4294901760
    %v1000 = vsub.f32 %v618, %v999
    %v1001 = vand.u32 %v1000, 4294901760
    %1002 = vmatpush1.msra.mxu0 %v1001
    %1003 = vmatprep.subr.mxu0 0.0
    %v1004 = vand.u32 %v619, 4294901760
    %v1005 = vsub.f32 %v619, %v1004
    %v1006 = vand.u32 %v1005, 4294901760
    %1007 = vmatpush1.msra.mxu0 %v1006
    %1008 = vmatprep.subr.mxu0 0.0
    %v1009 = vand.u32 %v620, 4294901760
    %v1010 = vsub.f32 %v620, %v1009
    %v1011 = vand.u32 %v1010, 4294901760
    %1012 = vmatpush1.msra.mxu0 %v1011
    %1013 = vmatprep.subr.mxu0 0.0
    %1014 = vmatpush1.msra.mxu0 0.0
    %1015 = vmatprep.subr.mxu0 0.0
    %1016 = vmatpush1.msra.mxu0 0.0
    %1017 = vmatprep.subr.mxu0 0.0
    %1018 = vmatpush1.msra.mxu0 0.0
    %1019 = vmatprep.subr.mxu0 0.0
    %1020 = vmatpush1.msra.mxu0 0.0
    %1021 = vmatprep.subr.mxu0 0.0
    %1022 = vmatpush1.msra.mxu0 0.0
    %1023 = vmatprep.subr.mxu0 0.0
    %1024 = vmatpush1.msra.mxu0 0.0
    %1025 = vmatprep.subr.mxu0 0.0
    %1026 = vmatpush1.msra.mxu0 0.0
    %1027 = vmatprep.subr.mxu0 0.0
    %1028 = vmatpush1.msra.mxu0 0.0
    %1029 = vmatprep.subr.mxu0 0.0
    %1030 = vmatpush1.msra.mxu0 0.0
    %1031 = vmatprep.subr.mxu0 0.0
    %1032 = vmatpush1.msra.mxu0 0.0
    %1033 = vmatprep.subr.mxu0 0.0
    %1034 = vmatpush1.msra.mxu0 0.0
    %1035 = vmatprep.subr.mxu0 0.0
    %1036 = vmatpush1.msra.mxu0 0.0
    %1037 = vmatprep.subr.mxu0 0.0
    %1038 = vmatpush1.msra.mxu0 0.0
    %1039 = vmatprep.subr.mxu0 0.0
    %1040 = vmatpush1.msra.mxu0 0.0
    %1041 = vmatprep.subr.mxu0 0.0
    %1042 = vmatpush1.msra.mxu0 0.0
    %1043 = vmatprep.subr.mxu0 0.0
    %1044 = vmatpush1.msra.mxu0 0.0
    %1045 = vmatprep.subr.mxu0 0.0
    %1046 = vmatpush1.msra.mxu0 0.0
    %1047 = vmatprep.subr.mxu0 0.0
    %1048 = vmatpush1.msra.mxu0 0.0
    %1049 = vmatprep.subr.mxu0 0.0
    %1050 = vmatpush1.msra.mxu0 0.0
    %1051 = vmatprep.subr.mxu0 0.0
    %1052 = vmatpush1.msra.mxu0 0.0
    %1053 = vmatprep.subr.mxu0 0.0
    %1054 = vmatpush1.msra.mxu0 0.0
    %1055 = vmatprep.subr.mxu0 0.0
    %1056 = vmatpush1.msra.mxu0 0.0
    %1057 = vmatprep.subr.mxu0 0.0
    %1058 = vmatpush1.msra.mxu0 0.0
    %1059 = vmatprep.subr.mxu0 0.0
    %1060 = vmatpush1.msra.mxu0 0.0
    %1061 = vmatprep.subr.mxu0 0.0
    %1062 = vmatpush1.msra.mxu0 0.0
    %1063 = vmatprep.subr.mxu0 0.0
    %1064 = vmatpush1.msra.mxu0 0.0
    %1065 = vmatprep.subr.mxu0 0.0
    %1066 = vmatpush1.msra.mxu0 0.0
    %1067 = vmatprep.subr.mxu0 0.0
    %1068 = vmatpush1.msra.mxu0 0.0
    %1069 = vmatprep.mubr.f32.mxu0 0.0
    %v1070 = vand.u32 %v630, 4294901760
    %1071 = vmatmul.mubr.f32.gmra.mrb[0].mxu0 %v1070
    %v1072 = vpop.f32.mrb[0].mxu0
    %v1073 = vadd.f32 %v982, %v1072
    %v1074 = vpop.f32.mrb[0].mxu0
    %1075 = vmatprep.mubr.f32.mxu0 0.0
    %v1076 = vand.u32 %v633, 4294901760
    %1077 = vmatmul.mubr.f32.gmra.mrb[0].mxu0 %v1076
    %v1078 = vpop.f32.mrb[0].mxu0
    %v1079 = vadd.f32 %v990, %v1078
    %v1080 = vpop.f32.mrb[0].mxu0
    %1081 = vdwg.mxu0
    %1082 = vmatprep.subr.mxu0 0.0
    %v1083 = vand.u32 %v617, 4294901760
    %1084 = vmatpush1.msra.mxu0 %v1083
    %1085 = vmatprep.subr.mxu0 0.0
    %v1086 = vand.u32 %v618, 4294901760
    %1087 = vmatpush1.msra.mxu0 %v1086
    %1088 = vmatprep.subr.mxu0 0.0
    %v1089 = vand.u32 %v619, 4294901760
    %1090 = vmatpush1.msra.mxu0 %v1089
    %1091 = vmatprep.subr.mxu0 0.0
    %v1092 = vand.u32 %v620, 4294901760
    %1093 = vmatpush1.msra.mxu0 %v1092
    %1094 = vmatprep.subr.mxu0 0.0
    %1095 = vmatpush1.msra.mxu0 0.0
    %1096 = vmatprep.subr.mxu0 0.0
    %1097 = vmatpush1.msra.mxu0 0.0
    %1098 = vmatprep.subr.mxu0 0.0
    %1099 = vmatpush1.msra.mxu0 0.0
    %1100 = vmatprep.subr.mxu0 0.0
    %1101 = vmatpush1.msra.mxu0 0.0
    %1102 = vmatprep.subr.mxu0 0.0
    %1103 = vmatpush1.msra.mxu0 0.0
    %1104 = vmatprep.subr.mxu0 0.0
    %1105 = vmatpush1.msra.mxu0 0.0
    %1106 = vmatprep.subr.mxu0 0.0
    %1107 = vmatpush1.msra.mxu0 0.0
    %1108 = vmatprep.subr.mxu0 0.0
    %1109 = vmatpush1.msra.mxu0 0.0
    %1110 = vmatprep.subr.mxu0 0.0
    %1111 = vmatpush1.msra.mxu0 0.0
    %1112 = vmatprep.subr.mxu0 0.0
    %1113 = vmatpush1.msra.mxu0 0.0
    %1114 = vmatprep.subr.mxu0 0.0
    %1115 = vmatpush1.msra.mxu0 0.0
    %1116 = vmatprep.subr.mxu0 0.0
    %1117 = vmatpush1.msra.mxu0 0.0
    %1118 = vmatprep.subr.mxu0 0.0
    %1119 = vmatpush1.msra.mxu0 0.0
    %1120 = vmatprep.subr.mxu0 0.0
    %1121 = vmatpush1.msra.mxu0 0.0
    %1122 = vmatprep.subr.mxu0 0.0
    %1123 = vmatpush1.msra.mxu0 0.0
    %1124 = vmatprep.subr.mxu0 0.0
    %1125 = vmatpush1.msra.mxu0 0.0
    %1126 = vmatprep.subr.mxu0 0.0
    %1127 = vmatpush1.msra.mxu0 0.0
    %1128 = vmatprep.subr.mxu0 0.0
    %1129 = vmatpush1.msra.mxu0 0.0
    %1130 = vmatprep.subr.mxu0 0.0
    %1131 = vmatpush1.msra.mxu0 0.0
    %1132 = vmatprep.subr.mxu0 0.0
    %1133 = vmatpush1.msra.mxu0 0.0
    %1134 = vmatprep.subr.mxu0 0.0
    %1135 = vmatpush1.msra.mxu0 0.0
    %1136 = vmatprep.subr.mxu0 0.0
    %1137 = vmatpush1.msra.mxu0 0.0
    %1138 = vmatprep.subr.mxu0 0.0
    %1139 = vmatpush1.msra.mxu0 0.0
    %1140 = vmatprep.subr.mxu0 0.0
    %1141 = vmatpush1.msra.mxu0 0.0
    %1142 = vmatprep.subr.mxu0 0.0
    %1143 = vmatpush1.msra.mxu0 0.0
    %1144 = vmatprep.subr.mxu0 0.0
    %1145 = vmatpush1.msra.mxu0 0.0
    %1146 = vmatprep.subr.mxu0 0.0
    %1147 = vmatpush1.msra.mxu0 0.0
    %1148 = vmatprep.subr.mxu0 0.0
    %1149 = vmatpush1.msra.mxu0 0.0
    %1150 = vmatprep.mubr.f32.mxu0 0.0
    %v1151 = vand.u32 %v630, 4294901760
    %1152 = vmatmul.mubr.f32.gmra.mrb[0].mxu0 %v1151
    %v1153 = vpop.f32.mrb[0].mxu0
    %v1154 = vadd.f32 %v1073, %v1153
    %v1155 = vpop.f32.mrb[0].mxu0
    %1156 = vmatprep.mubr.f32.mxu0 0.0
    %v1157 = vand.u32 %v633, 4294901760
    %1158 = vmatmul.mubr.f32.gmra.mrb[0].mxu0 %v1157
    %v1159 = vpop.f32.mrb[0].mxu0
    %v1160 = vadd.f32 %v1079, %v1159
    %v1161 = vpop.f32.mrb[0].mxu0
    %1162 = vdwg.mxu0
    %vm1163 = vcmp.gt.f32.partialorder %v1154, 0.0
    %vm1164 = vcmp.gt.f32.partialorder %v1160, 0.0
    %v1165 = vmul.f32 %v1154, 0.01
    %v1166 = vmul.f32 %v1160, 0.01
    %v1167 = vsel %vm1163, %v1154, %v1165
    %v1168 = vsel %vm1164, %v1160, %v1166
    %s1169 = scalar_lea.vmem [#allocation2], 64
    %v1170 = vld [vmem:[%s1169] sm:$0xff]
    %v1171 = vld [vmem:[%s1169 + $0x8] sm:$0xff]
    %v1172 = vld [vmem:[%s1169 + $0x10] sm:$0xff]
    %v1173 = vld [vmem:[%s1169 + $0x18] sm:$0xff]
    %1174 = vmatprep.subr.mxu0 0.0
    %v1175 = vand.u32 %v1170, 4294901760
    %1176 = vmatpush1.msra.mxu0 %v1175
    %1177 = vmatprep.subr.mxu0 0.0
    %v1178 = vand.u32 %v1171, 4294901760
    %1179 = vmatpush1.msra.mxu0 %v1178
    %1180 = vmatprep.subr.mxu0 0.0
    %v1181 = vand.u32 %v1172, 4294901760
    %1182 = vmatpush1.msra.mxu0 %v1181
    %1183 = vmatprep.subr.mxu0 0.0
    %v1184 = vand.u32 %v1173, 4294901760
    %1185 = vmatpush1.msra.mxu0 %v1184
    %1186 = vmatprep.subr.mxu0 0.0
    %1187 = vmatpush1.msra.mxu0 0.0
    %1188 = vmatprep.subr.mxu0 0.0
    %1189 = vmatpush1.msra.mxu0 0.0
    %1190 = vmatprep.subr.mxu0 0.0
    %1191 = vmatpush1.msra.mxu0 0.0
    %1192 = vmatprep.subr.mxu0 0.0
    %1193 = vmatpush1.msra.mxu0 0.0
    %1194 = vmatprep.subr.mxu0 0.0
    %1195 = vmatpush1.msra.mxu0 0.0
    %1196 = vmatprep.subr.mxu0 0.0
    %1197 = vmatpush1.msra.mxu0 0.0
    %1198 = vmatprep.subr.mxu0 0.0
    %1199 = vmatpush1.msra.mxu0 0.0
    %1200 = vmatprep.subr.mxu0 0.0
    %1201 = vmatpush1.msra.mxu0 0.0
    %1202 = vmatprep.subr.mxu0 0.0
    %1203 = vmatpush1.msra.mxu0 0.0
    %1204 = vmatprep.subr.mxu0 0.0
    %1205 = vmatpush1.msra.mxu0 0.0
    %1206 = vmatprep.subr.mxu0 0.0
    %1207 = vmatpush1.msra.mxu0 0.0
    %1208 = vmatprep.subr.mxu0 0.0
    %1209 = vmatpush1.msra.mxu0 0.0
    %1210 = vmatprep.subr.mxu0 0.0
    %1211 = vmatpush1.msra.mxu0 0.0
    %1212 = vmatprep.subr.mxu0 0.0
    %1213 = vmatpush1.msra.mxu0 0.0
    %1214 = vmatprep.subr.mxu0 0.0
    %1215 = vmatpush1.msra.mxu0 0.0
    %1216 = vmatprep.subr.mxu0 0.0
    %1217 = vmatpush1.msra.mxu0 0.0
    %1218 = vmatprep.subr.mxu0 0.0
    %1219 = vmatpush1.msra.mxu0 0.0
    %1220 = vmatprep.subr.mxu0 0.0
    %1221 = vmatpush1.msra.mxu0 0.0
    %1222 = vmatprep.subr.mxu0 0.0
    %1223 = vmatpush1.msra.mxu0 0.0
    %1224 = vmatprep.subr.mxu0 0.0
    %1225 = vmatpush1.msra.mxu0 0.0
    %1226 = vmatprep.subr.mxu0 0.0
    %1227 = vmatpush1.msra.mxu0 0.0
    %1228 = vmatprep.subr.mxu0 0.0
    %1229 = vmatpush1.msra.mxu0 0.0
    %1230 = vmatprep.subr.mxu0 0.0
    %1231 = vmatpush1.msra.mxu0 0.0
    %1232 = vmatprep.subr.mxu0 0.0
    %1233 = vmatpush1.msra.mxu0 0.0
    %1234 = vmatprep.subr.mxu0 0.0
    %1235 = vmatpush1.msra.mxu0 0.0
    %1236 = vmatprep.subr.mxu0 0.0
    %1237 = vmatpush1.msra.mxu0 0.0
    %1238 = vmatprep.subr.mxu0 0.0
    %1239 = vmatpush1.msra.mxu0 0.0
    %1240 = vmatprep.subr.mxu0 0.0
    %1241 = vmatpush1.msra.mxu0 0.0
    %1242 = vmatprep.mubr.f32.mxu0 0.0
    %v1243 = vand.u32 %v77, 4294901760
    %v1244 = vsub.f32 %v77, %v1243
    %v1245 = vand.u32 %v1244, 4294901760
    %v1246 = vsub.f32 %v1244, %v1245
    %v1247 = vand.u32 %v1246, 4294901760
    %1248 = vmatmul.mubr.f32.gmra.mrb[0].mxu0 %v1247
    %v1249 = vpop.f32.mrb[0].mxu0
    %v1250 = vadd.f32 0.0, %v1249
    %v1251 = vpop.f32.mrb[0].mxu0
    %1252 = vmatprep.mubr.f32.mxu0 0.0
    %v1253 = vand.u32 %v80, 4294901760
    %v1254 = vsub.f32 %v80, %v1253
    %v1255 = vand.u32 %v1254, 4294901760
    %v1256 = vsub.f32 %v1254, %v1255
    %v1257 = vand.u32 %v1256, 4294901760
    %1258 = vmatmul.mubr.f32.gmra.mrb[0].mxu0 %v1257
    %v1259 = vpop.f32.mrb[0].mxu0
    %v1260 = vadd.f32 0.0, %v1259
    %v1261 = vpop.f32.mrb[0].mxu0
    %1262 = vdwg.mxu0
    %1263 = vmatprep.subr.mxu0 0.0
    %v1264 = vand.u32 %v1170, 4294901760
    %v1265 = vsub.f32 %v1170, %v1264
    %v1266 = vand.u32 %v1265, 4294901760
    %v1267 = vsub.f32 %v1265, %v1266
    %v1268 = vand.u32 %v1267, 4294901760
    %1269 = vmatpush1.msra.mxu0 %v1268
    %1270 = vmatprep.subr.mxu0 0.0
    %v1271 = vand.u32 %v1171, 4294901760
    %v1272 = vsub.f32 %v1171, %v1271
    %v1273 = vand.u32 %v1272, 4294901760
    %v1274 = vsub.f32 %v1272, %v1273
    %v1275 = vand.u32 %v1274, 4294901760
    %1276 = vmatpush1.msra.mxu0 %v1275
    %1277 = vmatprep.subr.mxu0 0.0
    %v1278 = vand.u32 %v1172, 4294901760
    %v1279 = vsub.f32 %v1172, %v1278
    %v1280 = vand.u32 %v1279, 4294901760
    %v1281 = vsub.f32 %v1279, %v1280
    %v1282 = vand.u32 %v1281, 4294901760
    %1283 = vmatpush1.msra.mxu0 %v1282
    %1284 = vmatprep.subr.mxu0 0.0
    %v1285 = vand.u32 %v1173, 4294901760
    %v1286 = vsub.f32 %v1173, %v1285
    %v1287 = vand.u32 %v1286, 4294901760
    %v1288 = vsub.f32 %v1286, %v1287
    %v1289 = vand.u32 %v1288, 4294901760
    %1290 = vmatpush1.msra.mxu0 %v1289
    %1291 = vmatprep.subr.mxu0 0.0
    %1292 = vmatpush1.msra.mxu0 0.0
    %1293 = vmatprep.subr.mxu0 0.0
    %1294 = vmatpush1.msra.mxu0 0.0
    %1295 = vmatprep.subr.mxu0 0.0
    %1296 = vmatpush1.msra.mxu0 0.0
    %1297 = vmatprep.subr.mxu0 0.0
    %1298 = vmatpush1.msra.mxu0 0.0
    %1299 = vmatprep.subr.mxu0 0.0
    %1300 = vmatpush1.msra.mxu0 0.0
    %1301 = vmatprep.subr.mxu0 0.0
    %1302 = vmatpush1.msra.mxu0 0.0
    %1303 = vmatprep.subr.mxu0 0.0
    %1304 = vmatpush1.msra.mxu0 0.0
    %1305 = vmatprep.subr.mxu0 0.0
    %1306 = vmatpush1.msra.mxu0 0.0
    %1307 = vmatprep.subr.mxu0 0.0
    %1308 = vmatpush1.msra.mxu0 0.0
    %1309 = vmatprep.subr.mxu0 0.0
    %1310 = vmatpush1.msra.mxu0 0.0
    %1311 = vmatprep.subr.mxu0 0.0
    %1312 = vmatpush1.msra.mxu0 0.0
    %1313 = vmatprep.subr.mxu0 0.0
    %1314 = vmatpush1.msra.mxu0 0.0
    %1315 = vmatprep.subr.mxu0 0.0
    %1316 = vmatpush1.msra.mxu0 0.0
    %1317 = vmatprep.subr.mxu0 0.0
    %1318 = vmatpush1.msra.mxu0 0.0
    %1319 = vmatprep.subr.mxu0 0.0
    %1320 = vmatpush1.msra.mxu0 0.0
    %1321 = vmatprep.subr.mxu0 0.0
    %1322 = vmatpush1.msra.mxu0 0.0
    %1323 = vmatprep.subr.mxu0 0.0
    %1324 = vmatpush1.msra.mxu0 0.0
    %1325 = vmatprep.subr.mxu0 0.0
    %1326 = vmatpush1.msra.mxu0 0.0
    %1327 = vmatprep.subr.mxu0 0.0
    %1328 = vmatpush1.msra.mxu0 0.0
    %1329 = vmatprep.subr.mxu0 0.0
    %1330 = vmatpush1.msra.mxu0 0.0
    %1331 = vmatprep.subr.mxu0 0.0
    %1332 = vmatpush1.msra.mxu0 0.0
    %1333 = vmatprep.subr.mxu0 0.0
    %1334 = vmatpush1.msra.mxu0 0.0
    %1335 = vmatprep.subr.mxu0 0.0
    %1336 = vmatpush1.msra.mxu0 0.0
    %1337 = vmatprep.subr.mxu0 0.0
    %1338 = vmatpush1.msra.mxu0 0.0
    %1339 = vmatprep.subr.mxu0 0.0
    %1340 = vmatpush1.msra.mxu0 0.0
    %1341 = vmatprep.subr.mxu0 0.0
    %1342 = vmatpush1.msra.mxu0 0.0
    %1343 = vmatprep.subr.mxu0 0.0
    %1344 = vmatpush1.msra.mxu0 0.0
    %1345 = vmatprep.subr.mxu0 0.0
    %1346 = vmatpush1.msra.mxu0 0.0
    %1347 = vmatprep.mubr.f32.mxu0 0.0
    %v1348 = vand.u32 %v77, 4294901760
    %1349 = vmatmul.mubr.f32.gmra.mrb[0].mxu0 %v1348
    %v1350 = vpop.f32.mrb[0].mxu0
    %v1351 = vadd.f32 %v1250, %v1350
    %v1352 = vpop.f32.mrb[0].mxu0
    %1353 = vmatprep.mubr.f32.mxu0 0.0
    %v1354 = vand.u32 %v80, 4294901760
    %1355 = vmatmul.mubr.f32.gmra.mrb[0].mxu0 %v1354
    %v1356 = vpop.f32.mrb[0].mxu0
    %v1357 = vadd.f32 %v1260, %v1356
    %v1358 = vpop.f32.mrb[0].mxu0
    %1359 = vdwg.mxu0
    %1360 = vmatprep.subr.mxu0 0.0
    %v1361 = vand.u32 %v1170, 4294901760
    %v1362 = vsub.f32 %v1170, %v1361
    %1363 = vmatpush1.msra.mxu0 %v1362
    %1364 = vmatprep.subr.mxu0 0.0
    %v1365 = vand.u32 %v1171, 4294901760
    %v1366 = vsub.f32 %v1171, %v1365
    %1367 = vmatpush1.msra.mxu0 %v1366
    %1368 = vmatprep.subr.mxu0 0.0
    %v1369 = vand.u32 %v1172, 4294901760
    %v1370 = vsub.f32 %v1172, %v1369
    %1371 = vmatpush1.msra.mxu0 %v1370
    %1372 = vmatprep.subr.mxu0 0.0
    %v1373 = vand.u32 %v1173, 4294901760
    %v1374 = vsub.f32 %v1173, %v1373
    %1375 = vmatpush1.msra.mxu0 %v1374
    %1376 = vmatprep.subr.mxu0 0.0
    %1377 = vmatpush1.msra.mxu0 0.0
    %1378 = vmatprep.subr.mxu0 0.0
    %1379 = vmatpush1.msra.mxu0 0.0
    %1380 = vmatprep.subr.mxu0 0.0
    %1381 = vmatpush1.msra.mxu0 0.0
    %1382 = vmatprep.subr.mxu0 0.0
    %1383 = vmatpush1.msra.mxu0 0.0
    %1384 = vmatprep.subr.mxu0 0.0
    %1385 = vmatpush1.msra.mxu0 0.0
    %1386 = vmatprep.subr.mxu0 0.0
    %1387 = vmatpush1.msra.mxu0 0.0
    %1388 = vmatprep.subr.mxu0 0.0
    %1389 = vmatpush1.msra.mxu0 0.0
    %1390 = vmatprep.subr.mxu0 0.0
    %1391 = vmatpush1.msra.mxu0 0.0
    %1392 = vmatprep.subr.mxu0 0.0
    %1393 = vmatpush1.msra.mxu0 0.0
    %1394 = vmatprep.subr.mxu0 0.0
    %1395 = vmatpush1.msra.mxu0 0.0
    %1396 = vmatprep.subr.mxu0 0.0
    %1397 = vmatpush1.msra.mxu0 0.0
    %1398 = vmatprep.subr.mxu0 0.0
    %1399 = vmatpush1.msra.mxu0 0.0
    %1400 = vmatprep.subr.mxu0 0.0
    %1401 = vmatpush1.msra.mxu0 0.0
    %1402 = vmatprep.subr.mxu0 0.0
    %1403 = vmatpush1.msra.mxu0 0.0
    %1404 = vmatprep.subr.mxu0 0.0
    %1405 = vmatpush1.msra.mxu0 0.0
    %1406 = vmatprep.subr.mxu0 0.0
    %1407 = vmatpush1.msra.mxu0 0.0
    %1408 = vmatprep.subr.mxu0 0.0
    %1409 = vmatpush1.msra.mxu0 0.0
    %1410 = vmatprep.subr.mxu0 0.0
    %1411 = vmatpush1.msra.mxu0 0.0
    %1412 = vmatprep.subr.mxu0 0.0
    %1413 = vmatpush1.msra.mxu0 0.0
    %1414 = vmatprep.subr.mxu0 0.0
    %1415 = vmatpush1.msra.mxu0 0.0
    %1416 = vmatprep.subr.mxu0 0.0
    %1417 = vmatpush1.msra.mxu0 0.0
    %1418 = vmatprep.subr.mxu0 0.0
    %1419 = vmatpush1.msra.mxu0 0.0
    %1420 = vmatprep.subr.mxu0 0.0
    %1421 = vmatpush1.msra.mxu0 0.0
    %1422 = vmatprep.subr.mxu0 0.0
    %1423 = vmatpush1.msra.mxu0 0.0
    %1424 = vmatprep.subr.mxu0 0.0
    %1425 = vmatpush1.msra.mxu0 0.0
    %1426 = vmatprep.subr.mxu0 0.0
    %1427 = vmatpush1.msra.mxu0 0.0
    %1428 = vmatprep.subr.mxu0 0.0
    %1429 = vmatpush1.msra.mxu0 0.0
    %1430 = vmatprep.subr.mxu0 0.0
    %1431 = vmatpush1.msra.mxu0 0.0
    %1432 = vmatprep.mubr.f32.mxu0 0.0
    %v1433 = vand.u32 %v77, 4294901760
    %v1434 = vsub.f32 %v77, %v1433
    %1435 = vmatmul.mubr.f32.gmra.mrb[0].mxu0 %v1434
    %v1436 = vpop.f32.mrb[0].mxu0
    %v1437 = vadd.f32 %v1351, %v1436
    %v1438 = vpop.f32.mrb[0].mxu0
    %1439 = vmatprep.mubr.f32.mxu0 0.0
    %v1440 = vand.u32 %v80, 4294901760
    %v1441 = vsub.f32 %v80, %v1440
    %1442 = vmatmul.mubr.f32.gmra.mrb[0].mxu0 %v1441
    %v1443 = vpop.f32.mrb[0].mxu0
    %v1444 = vadd.f32 %v1357, %v1443
    %v1445 = vpop.f32.mrb[0].mxu0
    %1446 = vdwg.mxu0
    %1447 = vmatprep.subr.mxu0 0.0
    %v1448 = vand.u32 %v1170, 4294901760
    %1449 = vmatpush1.msra.mxu0 %v1448
    %1450 = vmatprep.subr.mxu0 0.0
    %v1451 = vand.u32 %v1171, 4294901760
    %1452 = vmatpush1.msra.mxu0 %v1451
    %1453 = vmatprep.subr.mxu0 0.0
    %v1454 = vand.u32 %v1172, 4294901760
    %1455 = vmatpush1.msra.mxu0 %v1454
    %1456 = vmatprep.subr.mxu0 0.0
    %v1457 = vand.u32 %v1173, 4294901760
    %1458 = vmatpush1.msra.mxu0 %v1457
    %1459 = vmatprep.subr.mxu0 0.0
    %1460 = vmatpush1.msra.mxu0 0.0
    %1461 = vmatprep.subr.mxu0 0.0
    %1462 = vmatpush1.msra.mxu0 0.0
    %1463 = vmatprep.subr.mxu0 0.0
    %1464 = vmatpush1.msra.mxu0 0.0
    %1465 = vmatprep.subr.mxu0 0.0
    %1466 = vmatpush1.msra.mxu0 0.0
    %1467 = vmatprep.subr.mxu0 0.0
    %1468 = vmatpush1.msra.mxu0 0.0
    %1469 = vmatprep.subr.mxu0 0.0
    %1470 = vmatpush1.msra.mxu0 0.0
    %1471 = vmatprep.subr.mxu0 0.0
    %1472 = vmatpush1.msra.mxu0 0.0
    %1473 = vmatprep.subr.mxu0 0.0
    %1474 = vmatpush1.msra.mxu0 0.0
    %1475 = vmatprep.subr.mxu0 0.0
    %1476 = vmatpush1.msra.mxu0 0.0
    %1477 = vmatprep.subr.mxu0 0.0
    %1478 = vmatpush1.msra.mxu0 0.0
    %1479 = vmatprep.subr.mxu0 0.0
    %1480 = vmatpush1.msra.mxu0 0.0
    %1481 = vmatprep.subr.mxu0 0.0
    %1482 = vmatpush1.msra.mxu0 0.0
    %1483 = vmatprep.subr.mxu0 0.0
    %1484 = vmatpush1.msra.mxu0 0.0
    %1485 = vmatprep.subr.mxu0 0.0
    %1486 = vmatpush1.msra.mxu0 0.0
    %1487 = vmatprep.subr.mxu0 0.0
    %1488 = vmatpush1.msra.mxu0 0.0
    %1489 = vmatprep.subr.mxu0 0.0
    %1490 = vmatpush1.msra.mxu0 0.0
    %1491 = vmatprep.subr.mxu0 0.0
    %1492 = vmatpush1.msra.mxu0 0.0
    %1493 = vmatprep.subr.mxu0 0.0
    %1494 = vmatpush1.msra.mxu0 0.0
    %1495 = vmatprep.subr.mxu0 0.0
    %1496 = vmatpush1.msra.mxu0 0.0
    %1497 = vmatprep.subr.mxu0 0.0
    %1498 = vmatpush1.msra.mxu0 0.0
    %1499 = vmatprep.subr.mxu0 0.0
    %1500 = vmatpush1.msra.mxu0 0.0
    %1501 = vmatprep.subr.mxu0 0.0
    %1502 = vmatpush1.msra.mxu0 0.0
    %1503 = vmatprep.subr.mxu0 0.0
    %1504 = vmatpush1.msra.mxu0 0.0
    %1505 = vmatprep.subr.mxu0 0.0
    %1506 = vmatpush1.msra.mxu0 0.0
    %1507 = vmatprep.subr.mxu0 0.0
    %1508 = vmatpush1.msra.mxu0 0.0
    %1509 = vmatprep.subr.mxu0 0.0
    %1510 = vmatpush1.msra.mxu0 0.0
    %1511 = vmatprep.subr.mxu0 0.0
    %1512 = vmatpush1.msra.mxu0 0.0
    %1513 = vmatprep.subr.mxu0 0.0
    %1514 = vmatpush1.msra.mxu0 0.0
    %1515 = vmatprep.mubr.f32.mxu0 0.0
    %v1516 = vand.u32 %v77, 4294901760
    %v1517 = vsub.f32 %v77, %v1516
    %v1518 = vand.u32 %v1517, 4294901760
    %1519 = vmatmul.mubr.f32.gmra.mrb[0].mxu0 %v1518
    %v1520 = vpop.f32.mrb[0].mxu0
    %v1521 = vadd.f32 %v1437, %v1520
    %v1522 = vpop.f32.mrb[0].mxu0
    %1523 = vmatprep.mubr.f32.mxu0 0.0
    %v1524 = vand.u32 %v80, 4294901760
    %v1525 = vsub.f32 %v80, %v1524
    %v1526 = vand.u32 %v1525, 4294901760
    %1527 = vmatmul.mubr.f32.gmra.mrb[0].mxu0 %v1526
    %v1528 = vpop.f32.mrb[0].mxu0
    %v1529 = vadd.f32 %v1444, %v1528
    %v1530 = vpop.f32.mrb[0].mxu0
    %1531 = vdwg.mxu0
    %1532 = vmatprep.subr.mxu0 0.0
    %v1533 = vand.u32 %v1170, 4294901760
    %v1534 = vsub.f32 %v1170, %v1533
    %v1535 = vand.u32 %v1534, 4294901760
    %1536 = vmatpush1.msra.mxu0 %v1535
    %1537 = vmatprep.subr.mxu0 0.0
    %v1538 = vand.u32 %v1171, 4294901760
    %v1539 = vsub.f32 %v1171, %v1538
    %v1540 = vand.u32 %v1539, 4294901760
    %1541 = vmatpush1.msra.mxu0 %v1540
    %1542 = vmatprep.subr.mxu0 0.0
    %v1543 = vand.u32 %v1172, 4294901760
    %v1544 = vsub.f32 %v1172, %v1543
    %v1545 = vand.u32 %v1544, 4294901760
    %1546 = vmatpush1.msra.mxu0 %v1545
    %1547 = vmatprep.subr.mxu0 0.0
    %v1548 = vand.u32 %v1173, 4294901760
    %v1549 = vsub.f32 %v1173, %v1548
    %v1550 = vand.u32 %v1549, 4294901760
    %1551 = vmatpush1.msra.mxu0 %v1550
    %1552 = vmatprep.subr.mxu0 0.0
    %1553 = vmatpush1.msra.mxu0 0.0
    %1554 = vmatprep.subr.mxu0 0.0
    %1555 = vmatpush1.msra.mxu0 0.0
    %1556 = vmatprep.subr.mxu0 0.0
    %1557 = vmatpush1.msra.mxu0 0.0
    %1558 = vmatprep.subr.mxu0 0.0
    %1559 = vmatpush1.msra.mxu0 0.0
    %1560 = vmatprep.subr.mxu0 0.0
    %1561 = vmatpush1.msra.mxu0 0.0
    %1562 = vmatprep.subr.mxu0 0.0
    %1563 = vmatpush1.msra.mxu0 0.0
    %1564 = vmatprep.subr.mxu0 0.0
    %1565 = vmatpush1.msra.mxu0 0.0
    %1566 = vmatprep.subr.mxu0 0.0
    %1567 = vmatpush1.msra.mxu0 0.0
    %1568 = vmatprep.subr.mxu0 0.0
    %1569 = vmatpush1.msra.mxu0 0.0
    %1570 = vmatprep.subr.mxu0 0.0
    %1571 = vmatpush1.msra.mxu0 0.0
    %1572 = vmatprep.subr.mxu0 0.0
    %1573 = vmatpush1.msra.mxu0 0.0
    %1574 = vmatprep.subr.mxu0 0.0
    %1575 = vmatpush1.msra.mxu0 0.0
    %1576 = vmatprep.subr.mxu0 0.0
    %1577 = vmatpush1.msra.mxu0 0.0
    %1578 = vmatprep.subr.mxu0 0.0
    %1579 = vmatpush1.msra.mxu0 0.0
    %1580 = vmatprep.subr.mxu0 0.0
    %1581 = vmatpush1.msra.mxu0 0.0
    %1582 = vmatprep.subr.mxu0 0.0
    %1583 = vmatpush1.msra.mxu0 0.0
    %1584 = vmatprep.subr.mxu0 0.0
    %1585 = vmatpush1.msra.mxu0 0.0
    %1586 = vmatprep.subr.mxu0 0.0
    %1587 = vmatpush1.msra.mxu0 0.0
    %1588 = vmatprep.subr.mxu0 0.0
    %1589 = vmatpush1.msra.mxu0 0.0
    %1590 = vmatprep.subr.mxu0 0.0
    %1591 = vmatpush1.msra.mxu0 0.0
    %1592 = vmatprep.subr.mxu0 0.0
    %1593 = vmatpush1.msra.mxu0 0.0
    %1594 = vmatprep.subr.mxu0 0.0
    %1595 = vmatpush1.msra.mxu0 0.0
    %1596 = vmatprep.subr.mxu0 0.0
    %1597 = vmatpush1.msra.mxu0 0.0
    %1598 = vmatprep.subr.mxu0 0.0
    %1599 = vmatpush1.msra.mxu0 0.0
    %1600 = vmatprep.subr.mxu0 0.0
    %1601 = vmatpush1.msra.mxu0 0.0
    %1602 = vmatprep.subr.mxu0 0.0
    %1603 = vmatpush1.msra.mxu0 0.0
    %1604 = vmatprep.subr.mxu0 0.0
    %1605 = vmatpush1.msra.mxu0 0.0
    %1606 = vmatprep.subr.mxu0 0.0
    %1607 = vmatpush1.msra.mxu0 0.0
    %1608 = vmatprep.mubr.f32.mxu0 0.0
    %v1609 = vand.u32 %v77, 4294901760
    %1610 = vmatmul.mubr.f32.gmra.mrb[0].mxu0 %v1609
    %v1611 = vpop.f32.mrb[0].mxu0
    %v1612 = vadd.f32 %v1521, %v1611
    %v1613 = vpop.f32.mrb[0].mxu0
    %1614 = vmatprep.mubr.f32.mxu0 0.0
    %v1615 = vand.u32 %v80, 4294901760
    %1616 = vmatmul.mubr.f32.gmra.mrb[0].mxu0 %v1615
    %v1617 = vpop.f32.mrb[0].mxu0
    %v1618 = vadd.f32 %v1529, %v1617
    %v1619 = vpop.f32.mrb[0].mxu0
    %1620 = vdwg.mxu0
    %1621 = vmatprep.subr.mxu0 0.0
    %v1622 = vand.u32 %v1170, 4294901760
    %1623 = vmatpush1.msra.mxu0 %v1622
    %1624 = vmatprep.subr.mxu0 0.0
    %v1625 = vand.u32 %v1171, 4294901760
    %1626 = vmatpush1.msra.mxu0 %v1625
    %1627 = vmatprep.subr.mxu0 0.0
    %v1628 = vand.u32 %v1172, 4294901760
    %1629 = vmatpush1.msra.mxu0 %v1628
    %1630 = vmatprep.subr.mxu0 0.0
    %v1631 = vand.u32 %v1173, 4294901760
    %1632 = vmatpush1.msra.mxu0 %v1631
    %1633 = vmatprep.subr.mxu0 0.0
    %1634 = vmatpush1.msra.mxu0 0.0
    %1635 = vmatprep.subr.mxu0 0.0
    %1636 = vmatpush1.msra.mxu0 0.0
    %1637 = vmatprep.subr.mxu0 0.0
    %1638 = vmatpush1.msra.mxu0 0.0
    %1639 = vmatprep.subr.mxu0 0.0
    %1640 = vmatpush1.msra.mxu0 0.0
    %1641 = vmatprep.subr.mxu0 0.0
    %1642 = vmatpush1.msra.mxu0 0.0
    %1643 = vmatprep.subr.mxu0 0.0
    %1644 = vmatpush1.msra.mxu0 0.0
    %1645 = vmatprep.subr.mxu0 0.0
    %1646 = vmatpush1.msra.mxu0 0.0
    %1647 = vmatprep.subr.mxu0 0.0
    %1648 = vmatpush1.msra.mxu0 0.0
    %1649 = vmatprep.subr.mxu0 0.0
    %1650 = vmatpush1.msra.mxu0 0.0
    %1651 = vmatprep.subr.mxu0 0.0
    %1652 = vmatpush1.msra.mxu0 0.0
    %1653 = vmatprep.subr.mxu0 0.0
    %1654 = vmatpush1.msra.mxu0 0.0
    %1655 = vmatprep.subr.mxu0 0.0
    %1656 = vmatpush1.msra.mxu0 0.0
    %1657 = vmatprep.subr.mxu0 0.0
    %1658 = vmatpush1.msra.mxu0 0.0
    %1659 = vmatprep.subr.mxu0 0.0
    %1660 = vmatpush1.msra.mxu0 0.0
    %1661 = vmatprep.subr.mxu0 0.0
    %1662 = vmatpush1.msra.mxu0 0.0
    %1663 = vmatprep.subr.mxu0 0.0
    %1664 = vmatpush1.msra.mxu0 0.0
    %1665 = vmatprep.subr.mxu0 0.0
    %1666 = vmatpush1.msra.mxu0 0.0
    %1667 = vmatprep.subr.mxu0 0.0
    %1668 = vmatpush1.msra.mxu0 0.0
    %1669 = vmatprep.subr.mxu0 0.0
    %1670 = vmatpush1.msra.mxu0 0.0
    %1671 = vmatprep.subr.mxu0 0.0
    %1672 = vmatpush1.msra.mxu0 0.0
    %1673 = vmatprep.subr.mxu0 0.0
    %1674 = vmatpush1.msra.mxu0 0.0
    %1675 = vmatprep.subr.mxu0 0.0
    %1676 = vmatpush1.msra.mxu0 0.0
    %1677 = vmatprep.subr.mxu0 0.0
    %1678 = vmatpush1.msra.mxu0 0.0
    %1679 = vmatprep.subr.mxu0 0.0
    %1680 = vmatpush1.msra.mxu0 0.0
    %1681 = vmatprep.subr.mxu0 0.0
    %1682 = vmatpush1.msra.mxu0 0.0
    %1683 = vmatprep.subr.mxu0 0.0
    %1684 = vmatpush1.msra.mxu0 0.0
    %1685 = vmatprep.subr.mxu0 0.0
    %1686 = vmatpush1.msra.mxu0 0.0
    %1687 = vmatprep.subr.mxu0 0.0
    %1688 = vmatpush1.msra.mxu0 0.0
    %1689 = vmatprep.mubr.f32.mxu0 0.0
    %v1690 = vand.u32 %v77, 4294901760
    %1691 = vmatmul.mubr.f32.gmra.mrb[0].mxu0 %v1690
    %v1692 = vpop.f32.mrb[0].mxu0
    %v1693 = vadd.f32 %v1612, %v1692
    %v1694 = vpop.f32.mrb[0].mxu0
    %1695 = vmatprep.mubr.f32.mxu0 0.0
    %v1696 = vand.u32 %v80, 4294901760
    %1697 = vmatmul.mubr.f32.gmra.mrb[0].mxu0 %v1696
    %v1698 = vpop.f32.mrb[0].mxu0
    %v1699 = vadd.f32 %v1618, %v1698
    %v1700 = vpop.f32.mrb[0].mxu0
    %1701 = vdwg.mxu0
    %v1703 = vsel %vm75, %v1167, 0
    %v1706 = vsel %vm75, %v1168, 0
    %1708 = vmatprep.subr.mxu0 0.0
    %v1709 = vand.u32 %v1170, 4294901760
    %1710 = vmatpush1.msra.mxu0 %v1709
    %1711 = vmatprep.subr.mxu0 0.0
    %v1712 = vand.u32 %v1171, 4294901760
    %1713 = vmatpush1.msra.mxu0 %v1712
    %1714 = vmatprep.subr.mxu0 0.0
    %v1715 = vand.u32 %v1172, 4294901760
    %1716 = vmatpush1.msra.mxu0 %v1715
    %1717 = vmatprep.subr.mxu0 0.0
    %v1718 = vand.u32 %v1173, 4294901760
    %1719 = vmatpush1.msra.mxu0 %v1718
    %1720 = vmatprep.subr.mxu0 0.0
    %1721 = vmatpush1.msra.mxu0 0.0
    %1722 = vmatprep.subr.mxu0 0.0
    %1723 = vmatpush1.msra.mxu0 0.0
    %1724 = vmatprep.subr.mxu0 0.0
    %1725 = vmatpush1.msra.mxu0 0.0
    %1726 = vmatprep.subr.mxu0 0.0
    %1727 = vmatpush1.msra.mxu0 0.0
    %1728 = vmatprep.subr.mxu0 0.0
    %1729 = vmatpush1.msra.mxu0 0.0
    %1730 = vmatprep.subr.mxu0 0.0
    %1731 = vmatpush1.msra.mxu0 0.0
    %1732 = vmatprep.subr.mxu0 0.0
    %1733 = vmatpush1.msra.mxu0 0.0
    %1734 = vmatprep.subr.mxu0 0.0
    %1735 = vmatpush1.msra.mxu0 0.0
    %1736 = vmatprep.subr.mxu0 0.0
    %1737 = vmatpush1.msra.mxu0 0.0
    %1738 = vmatprep.subr.mxu0 0.0
    %1739 = vmatpush1.msra.mxu0 0.0
    %1740 = vmatprep.subr.mxu0 0.0
    %1741 = vmatpush1.msra.mxu0 0.0
    %1742 = vmatprep.subr.mxu0 0.0
    %1743 = vmatpush1.msra.mxu0 0.0
    %1744 = vmatprep.subr.mxu0 0.0
    %1745 = vmatpush1.msra.mxu0 0.0
    %1746 = vmatprep.subr.mxu0 0.0
    %1747 = vmatpush1.msra.mxu0 0.0
    %1748 = vmatprep.subr.mxu0 0.0
    %1749 = vmatpush1.msra.mxu0 0.0
    %1750 = vmatprep.subr.mxu0 0.0
    %1751 = vmatpush1.msra.mxu0 0.0
    %1752 = vmatprep.subr.mxu0 0.0
    %1753 = vmatpush1.msra.mxu0 0.0
    %1754 = vmatprep.subr.mxu0 0.0
    %1755 = vmatpush1.msra.mxu0 0.0
    %1756 = vmatprep.subr.mxu0 0.0
    %1757 = vmatpush1.msra.mxu0 0.0
    %1758 = vmatprep.subr.mxu0 0.0
    %1759 = vmatpush1.msra.mxu0 0.0
    %1760 = vmatprep.subr.mxu0 0.0
    %1761 = vmatpush1.msra.mxu0 0.0
    %1762 = vmatprep.subr.mxu0 0.0
    %1763 = vmatpush1.msra.mxu0 0.0
    %1764 = vmatprep.subr.mxu0 0.0
    %1765 = vmatpush1.msra.mxu0 0.0
    %1766 = vmatprep.subr.mxu0 0.0
    %1767 = vmatpush1.msra.mxu0 0.0
    %1768 = vmatprep.subr.mxu0 0.0
    %1769 = vmatpush1.msra.mxu0 0.0
    %1770 = vmatprep.subr.mxu0 0.0
    %1771 = vmatpush1.msra.mxu0 0.0
    %1772 = vmatprep.subr.mxu0 0.0
    %1773 = vmatpush1.msra.mxu0 0.0
    %1774 = vmatprep.subr.mxu0 0.0
    %1775 = vmatpush1.msra.mxu0 0.0
    %1776 = vmatprep.mubr.f32.mxu0 0.0
    %v1777 = vand.u32 %v1703, 4294901760
    %v1778 = vsub.f32 %v1703, %v1777
    %v1779 = vand.u32 %v1778, 4294901760
    %v1780 = vsub.f32 %v1778, %v1779
    %v1781 = vand.u32 %v1780, 4294901760
    %1782 = vmatmul.mubr.f32.gmra.mrb[0].mxu0 %v1781
    %v1783 = vpop.f32.mrb[0].mxu0
    %v1784 = vadd.f32 %v1693, %v1783
    %v1785 = vpop.f32.mrb[0].mxu0
    %1786 = vmatprep.mubr.f32.mxu0 0.0
    %v1787 = vand.u32 %v1706, 4294901760
    %v1788 = vsub.f32 %v1706, %v1787
    %v1789 = vand.u32 %v1788, 4294901760
    %v1790 = vsub.f32 %v1788, %v1789
    %v1791 = vand.u32 %v1790, 4294901760
    %1792 = vmatmul.mubr.f32.gmra.mrb[0].mxu0 %v1791
    %v1793 = vpop.f32.mrb[0].mxu0
    %v1794 = vadd.f32 %v1699, %v1793
    %v1795 = vpop.f32.mrb[0].mxu0
    %1796 = vdwg.mxu0
    %1797 = vmatprep.subr.mxu0 0.0
    %v1798 = vand.u32 %v1170, 4294901760
    %v1799 = vsub.f32 %v1170, %v1798
    %v1800 = vand.u32 %v1799, 4294901760
    %v1801 = vsub.f32 %v1799, %v1800
    %v1802 = vand.u32 %v1801, 4294901760
    %1803 = vmatpush1.msra.mxu0 %v1802
    %1804 = vmatprep.subr.mxu0 0.0
    %v1805 = vand.u32 %v1171, 4294901760
    %v1806 = vsub.f32 %v1171, %v1805
    %v1807 = vand.u32 %v1806, 4294901760
    %v1808 = vsub.f32 %v1806, %v1807
    %v1809 = vand.u32 %v1808, 4294901760
    %1810 = vmatpush1.msra.mxu0 %v1809
    %1811 = vmatprep.subr.mxu0 0.0
    %v1812 = vand.u32 %v1172, 4294901760
    %v1813 = vsub.f32 %v1172, %v1812
    %v1814 = vand.u32 %v1813, 4294901760
    %v1815 = vsub.f32 %v1813, %v1814
    %v1816 = vand.u32 %v1815, 4294901760
    %1817 = vmatpush1.msra.mxu0 %v1816
    %1818 = vmatprep.subr.mxu0 0.0
    %v1819 = vand.u32 %v1173, 4294901760
    %v1820 = vsub.f32 %v1173, %v1819
    %v1821 = vand.u32 %v1820, 4294901760
    %v1822 = vsub.f32 %v1820, %v1821
    %v1823 = vand.u32 %v1822, 4294901760
    %1824 = vmatpush1.msra.mxu0 %v1823
    %1825 = vmatprep.subr.mxu0 0.0
    %1826 = vmatpush1.msra.mxu0 0.0
    %1827 = vmatprep.subr.mxu0 0.0
    %1828 = vmatpush1.msra.mxu0 0.0
    %1829 = vmatprep.subr.mxu0 0.0
    %1830 = vmatpush1.msra.mxu0 0.0
    %1831 = vmatprep.subr.mxu0 0.0
    %1832 = vmatpush1.msra.mxu0 0.0
    %1833 = vmatprep.subr.mxu0 0.0
    %1834 = vmatpush1.msra.mxu0 0.0
    %1835 = vmatprep.subr.mxu0 0.0
    %1836 = vmatpush1.msra.mxu0 0.0
    %1837 = vmatprep.subr.mxu0 0.0
    %1838 = vmatpush1.msra.mxu0 0.0
    %1839 = vmatprep.subr.mxu0 0.0
    %1840 = vmatpush1.msra.mxu0 0.0
    %1841 = vmatprep.subr.mxu0 0.0
    %1842 = vmatpush1.msra.mxu0 0.0
    %1843 = vmatprep.subr.mxu0 0.0
    %1844 = vmatpush1.msra.mxu0 0.0
    %1845 = vmatprep.subr.mxu0 0.0
    %1846 = vmatpush1.msra.mxu0 0.0
    %1847 = vmatprep.subr.mxu0 0.0
    %1848 = vmatpush1.msra.mxu0 0.0
    %1849 = vmatprep.subr.mxu0 0.0
    %1850 = vmatpush1.msra.mxu0 0.0
    %1851 = vmatprep.subr.mxu0 0.0
    %1852 = vmatpush1.msra.mxu0 0.0
    %1853 = vmatprep.subr.mxu0 0.0
    %1854 = vmatpush1.msra.mxu0 0.0
    %1855 = vmatprep.subr.mxu0 0.0
    %1856 = vmatpush1.msra.mxu0 0.0
    %1857 = vmatprep.subr.mxu0 0.0
    %1858 = vmatpush1.msra.mxu0 0.0
    %1859 = vmatprep.subr.mxu0 0.0
    %1860 = vmatpush1.msra.mxu0 0.0
    %1861 = vmatprep.subr.mxu0 0.0
    %1862 = vmatpush1.msra.mxu0 0.0
    %1863 = vmatprep.subr.mxu0 0.0
    %1864 = vmatpush1.msra.mxu0 0.0
    %1865 = vmatprep.subr.mxu0 0.0
    %1866 = vmatpush1.msra.mxu0 0.0
    %1867 = vmatprep.subr.mxu0 0.0
    %1868 = vmatpush1.msra.mxu0 0.0
    %1869 = vmatprep.subr.mxu0 0.0
    %1870 = vmatpush1.msra.mxu0 0.0
    %1871 = vmatprep.subr.mxu0 0.0
    %1872 = vmatpush1.msra.mxu0 0.0
    %1873 = vmatprep.subr.mxu0 0.0
    %1874 = vmatpush1.msra.mxu0 0.0
    %1875 = vmatprep.subr.mxu0 0.0
    %1876 = vmatpush1.msra.mxu0 0.0
    %1877 = vmatprep.subr.mxu0 0.0
    %1878 = vmatpush1.msra.mxu0 0.0
    %1879 = vmatprep.subr.mxu0 0.0
    %1880 = vmatpush1.msra.mxu0 0.0
    %1881 = vmatprep.mubr.f32.mxu0 0.0
    %v1882 = vand.u32 %v1703, 4294901760
    %1883 = vmatmul.mubr.f32.gmra.mrb[0].mxu0 %v1882
    %v1884 = vpop.f32.mrb[0].mxu0
    %v1885 = vadd.f32 %v1784, %v1884
    %v1886 = vpop.f32.mrb[0].mxu0
    %1887 = vmatprep.mubr.f32.mxu0 0.0
    %v1888 = vand.u32 %v1706, 4294901760
    %1889 = vmatmul.mubr.f32.gmra.mrb[0].mxu0 %v1888
    %v1890 = vpop.f32.mrb[0].mxu0
    %v1891 = vadd.f32 %v1794, %v1890
    %v1892 = vpop.f32.mrb[0].mxu0
    %1893 = vdwg.mxu0
    %1894 = vmatprep.subr.mxu0 0.0
    %v1895 = vand.u32 %v1170, 4294901760
    %v1896 = vsub.f32 %v1170, %v1895
    %1897 = vmatpush1.msra.mxu0 %v1896
    %1898 = vmatprep.subr.mxu0 0.0
    %v1899 = vand.u32 %v1171, 4294901760
    %v1900 = vsub.f32 %v1171, %v1899
    %1901 = vmatpush1.msra.mxu0 %v1900
    %1902 = vmatprep.subr.mxu0 0.0
    %v1903 = vand.u32 %v1172, 4294901760
    %v1904 = vsub.f32 %v1172, %v1903
    %1905 = vmatpush1.msra.mxu0 %v1904
    %1906 = vmatprep.subr.mxu0 0.0
    %v1907 = vand.u32 %v1173, 4294901760
    %v1908 = vsub.f32 %v1173, %v1907
    %1909 = vmatpush1.msra.mxu0 %v1908
    %1910 = vmatprep.subr.mxu0 0.0
    %1911 = vmatpush1.msra.mxu0 0.0
    %1912 = vmatprep.subr.mxu0 0.0
    %1913 = vmatpush1.msra.mxu0 0.0
    %1914 = vmatprep.subr.mxu0 0.0
    %1915 = vmatpush1.msra.mxu0 0.0
    %1916 = vmatprep.subr.mxu0 0.0
    %1917 = vmatpush1.msra.mxu0 0.0
    %1918 = vmatprep.subr.mxu0 0.0
    %1919 = vmatpush1.msra.mxu0 0.0
    %1920 = vmatprep.subr.mxu0 0.0
    %1921 = vmatpush1.msra.mxu0 0.0
    %1922 = vmatprep.subr.mxu0 0.0
    %1923 = vmatpush1.msra.mxu0 0.0
    %1924 = vmatprep.subr.mxu0 0.0
    %1925 = vmatpush1.msra.mxu0 0.0
    %1926 = vmatprep.subr.mxu0 0.0
    %1927 = vmatpush1.msra.mxu0 0.0
    %1928 = vmatprep.subr.mxu0 0.0
    %1929 = vmatpush1.msra.mxu0 0.0
    %1930 = vmatprep.subr.mxu0 0.0
    %1931 = vmatpush1.msra.mxu0 0.0
    %1932 = vmatprep.subr.mxu0 0.0
    %1933 = vmatpush1.msra.mxu0 0.0
    %1934 = vmatprep.subr.mxu0 0.0
    %1935 = vmatpush1.msra.mxu0 0.0
    %1936 = vmatprep.subr.mxu0 0.0
    %1937 = vmatpush1.msra.mxu0 0.0
    %1938 = vmatprep.subr.mxu0 0.0
    %1939 = vmatpush1.msra.mxu0 0.0
    %1940 = vmatprep.subr.mxu0 0.0
    %1941 = vmatpush1.msra.mxu0 0.0
    %1942 = vmatprep.subr.mxu0 0.0
    %1943 = vmatpush1.msra.mxu0 0.0
    %1944 = vmatprep.subr.mxu0 0.0
    %1945 = vmatpush1.msra.mxu0 0.0
    %1946 = vmatprep.subr.mxu0 0.0
    %1947 = vmatpush1.msra.mxu0 0.0
    %1948 = vmatprep.subr.mxu0 0.0
    %1949 = vmatpush1.msra.mxu0 0.0
    %1950 = vmatprep.subr.mxu0 0.0
    %1951 = vmatpush1.msra.mxu0 0.0
    %1952 = vmatprep.subr.mxu0 0.0
    %1953 = vmatpush1.msra.mxu0 0.0
    %1954 = vmatprep.subr.mxu0 0.0
    %1955 = vmatpush1.msra.mxu0 0.0
    %1956 = vmatprep.subr.mxu0 0.0
    %1957 = vmatpush1.msra.mxu0 0.0
    %1958 = vmatprep.subr.mxu0 0.0
    %1959 = vmatpush1.msra.mxu0 0.0
    %1960 = vmatprep.subr.mxu0 0.0
    %1961 = vmatpush1.msra.mxu0 0.0
    %1962 = vmatprep.subr.mxu0 0.0
    %1963 = vmatpush1.msra.mxu0 0.0
    %1964 = vmatprep.subr.mxu0 0.0
    %1965 = vmatpush1.msra.mxu0 0.0
    %1966 = vmatprep.mubr.f32.mxu0 0.0
    %v1967 = vand.u32 %v1703, 4294901760
    %v1968 = vsub.f32 %v1703, %v1967
    %1969 = vmatmul.mubr.f32.gmra.mrb[0].mxu0 %v1968
    %v1970 = vpop.f32.mrb[0].mxu0
    %v1971 = vadd.f32 %v1885, %v1970
    %v1972 = vpop.f32.mrb[0].mxu0
    %1973 = vmatprep.mubr.f32.mxu0 0.0
    %v1974 = vand.u32 %v1706, 4294901760
    %v1975 = vsub.f32 %v1706, %v1974
    %1976 = vmatmul.mubr.f32.gmra.mrb[0].mxu0 %v1975
    %v1977 = vpop.f32.mrb[0].mxu0
    %v1978 = vadd.f32 %v1891, %v1977
    %v1979 = vpop.f32.mrb[0].mxu0
    %1980 = vdwg.mxu0
    %1981 = vmatprep.subr.mxu0 0.0
    %v1982 = vand.u32 %v1170, 4294901760
    %1983 = vmatpush1.msra.mxu0 %v1982
    %1984 = vmatprep.subr.mxu0 0.0
    %v1985 = vand.u32 %v1171, 4294901760
    %1986 = vmatpush1.msra.mxu0 %v1985
    %1987 = vmatprep.subr.mxu0 0.0
    %v1988 = vand.u32 %v1172, 4294901760
    %1989 = vmatpush1.msra.mxu0 %v1988
    %1990 = vmatprep.subr.mxu0 0.0
    %v1991 = vand.u32 %v1173, 4294901760
    %1992 = vmatpush1.msra.mxu0 %v1991
    %1993 = vmatprep.subr.mxu0 0.0
    %1994 = vmatpush1.msra.mxu0 0.0
    %1995 = vmatprep.subr.mxu0 0.0
    %1996 = vmatpush1.msra.mxu0 0.0
    %1997 = vmatprep.subr.mxu0 0.0
    %1998 = vmatpush1.msra.mxu0 0.0
    %1999 = vmatprep.subr.mxu0 0.0
    %2000 = vmatpush1.msra.mxu0 0.0
    %2001 = vmatprep.subr.mxu0 0.0
    %2002 = vmatpush1.msra.mxu0 0.0
    %2003 = vmatprep.subr.mxu0 0.0
    %2004 = vmatpush1.msra.mxu0 0.0
    %2005 = vmatprep.subr.mxu0 0.0
    %2006 = vmatpush1.msra.mxu0 0.0
    %2007 = vmatprep.subr.mxu0 0.0
    %2008 = vmatpush1.msra.mxu0 0.0
    %2009 = vmatprep.subr.mxu0 0.0
    %2010 = vmatpush1.msra.mxu0 0.0
    %2011 = vmatprep.subr.mxu0 0.0
    %2012 = vmatpush1.msra.mxu0 0.0
    %2013 = vmatprep.subr.mxu0 0.0
    %2014 = vmatpush1.msra.mxu0 0.0
    %2015 = vmatprep.subr.mxu0 0.0
    %2016 = vmatpush1.msra.mxu0 0.0
    %2017 = vmatprep.subr.mxu0 0.0
    %2018 = vmatpush1.msra.mxu0 0.0
    %2019 = vmatprep.subr.mxu0 0.0
    %2020 = vmatpush1.msra.mxu0 0.0
    %2021 = vmatprep.subr.mxu0 0.0
    %2022 = vmatpush1.msra.mxu0 0.0
    %2023 = vmatprep.subr.mxu0 0.0
    %2024 = vmatpush1.msra.mxu0 0.0
    %2025 = vmatprep.subr.mxu0 0.0
    %2026 = vmatpush1.msra.mxu0 0.0
    %2027 = vmatprep.subr.mxu0 0.0
    %2028 = vmatpush1.msra.mxu0 0.0
    %2029 = vmatprep.subr.mxu0 0.0
    %2030 = vmatpush1.msra.mxu0 0.0
    %2031 = vmatprep.subr.mxu0 0.0
    %2032 = vmatpush1.msra.mxu0 0.0
    %2033 = vmatprep.subr.mxu0 0.0
    %2034 = vmatpush1.msra.mxu0 0.0
    %2035 = vmatprep.subr.mxu0 0.0
    %2036 = vmatpush1.msra.mxu0 0.0
    %2037 = vmatprep.subr.mxu0 0.0
    %2038 = vmatpush1.msra.mxu0 0.0
    %2039 = vmatprep.subr.mxu0 0.0
    %2040 = vmatpush1.msra.mxu0 0.0
    %2041 = vmatprep.subr.mxu0 0.0
    %2042 = vmatpush1.msra.mxu0 0.0
    %2043 = vmatprep.subr.mxu0 0.0
    %2044 = vmatpush1.msra.mxu0 0.0
    %2045 = vmatprep.subr.mxu0 0.0
    %2046 = vmatpush1.msra.mxu0 0.0
    %2047 = vmatprep.subr.mxu0 0.0
    %2048 = vmatpush1.msra.mxu0 0.0
    %2049 = vmatprep.mubr.f32.mxu0 0.0
    %v2050 = vand.u32 %v1703, 4294901760
    %v2051 = vsub.f32 %v1703, %v2050
    %v2052 = vand.u32 %v2051, 4294901760
    %2053 = vmatmul.mubr.f32.gmra.mrb[0].mxu0 %v2052
    %v2054 = vpop.f32.mrb[0].mxu0
    %v2055 = vadd.f32 %v1971, %v2054
    %v2056 = vpop.f32.mrb[0].mxu0
    %2057 = vmatprep.mubr.f32.mxu0 0.0
    %v2058 = vand.u32 %v1706, 4294901760
    %v2059 = vsub.f32 %v1706, %v2058
    %v2060 = vand.u32 %v2059, 4294901760
    %2061 = vmatmul.mubr.f32.gmra.mrb[0].mxu0 %v2060
    %v2062 = vpop.f32.mrb[0].mxu0
    %v2063 = vadd.f32 %v1978, %v2062
    %v2064 = vpop.f32.mrb[0].mxu0
    %2065 = vdwg.mxu0
    %2066 = vmatprep.subr.mxu0 0.0
    %v2067 = vand.u32 %v1170, 4294901760
    %v2068 = vsub.f32 %v1170, %v2067
    %v2069 = vand.u32 %v2068, 4294901760
    %2070 = vmatpush1.msra.mxu0 %v2069
    %2071 = vmatprep.subr.mxu0 0.0
    %v2072 = vand.u32 %v1171, 4294901760
    %v2073 = vsub.f32 %v1171, %v2072
    %v2074 = vand.u32 %v2073, 4294901760
    %2075 = vmatpush1.msra.mxu0 %v2074
    %2076 = vmatprep.subr.mxu0 0.0
    %v2077 = vand.u32 %v1172, 4294901760
    %v2078 = vsub.f32 %v1172, %v2077
    %v2079 = vand.u32 %v2078, 4294901760
    %2080 = vmatpush1.msra.mxu0 %v2079
    %2081 = vmatprep.subr.mxu0 0.0
    %v2082 = vand.u32 %v1173, 4294901760
    %v2083 = vsub.f32 %v1173, %v2082
    %v2084 = vand.u32 %v2083, 4294901760
    %2085 = vmatpush1.msra.mxu0 %v2084
    %2086 = vmatprep.subr.mxu0 0.0
    %2087 = vmatpush1.msra.mxu0 0.0
    %2088 = vmatprep.subr.mxu0 0.0
    %2089 = vmatpush1.msra.mxu0 0.0
    %2090 = vmatprep.subr.mxu0 0.0
    %2091 = vmatpush1.msra.mxu0 0.0
    %2092 = vmatprep.subr.mxu0 0.0
    %2093 = vmatpush1.msra.mxu0 0.0
    %2094 = vmatprep.subr.mxu0 0.0
    %2095 = vmatpush1.msra.mxu0 0.0
    %2096 = vmatprep.subr.mxu0 0.0
    %2097 = vmatpush1.msra.mxu0 0.0
    %2098 = vmatprep.subr.mxu0 0.0
    %2099 = vmatpush1.msra.mxu0 0.0
    %2100 = vmatprep.subr.mxu0 0.0
    %2101 = vmatpush1.msra.mxu0 0.0
    %2102 = vmatprep.subr.mxu0 0.0
    %2103 = vmatpush1.msra.mxu0 0.0
    %2104 = vmatprep.subr.mxu0 0.0
    %2105 = vmatpush1.msra.mxu0 0.0
    %2106 = vmatprep.subr.mxu0 0.0
    %2107 = vmatpush1.msra.mxu0 0.0
    %2108 = vmatprep.subr.mxu0 0.0
    %2109 = vmatpush1.msra.mxu0 0.0
    %2110 = vmatprep.subr.mxu0 0.0
    %2111 = vmatpush1.msra.mxu0 0.0
    %2112 = vmatprep.subr.mxu0 0.0
    %2113 = vmatpush1.msra.mxu0 0.0
    %2114 = vmatprep.subr.mxu0 0.0
    %2115 = vmatpush1.msra.mxu0 0.0
    %2116 = vmatprep.subr.mxu0 0.0
    %2117 = vmatpush1.msra.mxu0 0.0
    %2118 = vmatprep.subr.mxu0 0.0
    %2119 = vmatpush1.msra.mxu0 0.0
    %2120 = vmatprep.subr.mxu0 0.0
    %2121 = vmatpush1.msra.mxu0 0.0
    %2122 = vmatprep.subr.mxu0 0.0
    %2123 = vmatpush1.msra.mxu0 0.0
    %2124 = vmatprep.subr.mxu0 0.0
    %2125 = vmatpush1.msra.mxu0 0.0
    %2126 = vmatprep.subr.mxu0 0.0
    %2127 = vmatpush1.msra.mxu0 0.0
    %2128 = vmatprep.subr.mxu0 0.0
    %2129 = vmatpush1.msra.mxu0 0.0
    %2130 = vmatprep.subr.mxu0 0.0
    %2131 = vmatpush1.msra.mxu0 0.0
    %2132 = vmatprep.subr.mxu0 0.0
    %2133 = vmatpush1.msra.mxu0 0.0
    %2134 = vmatprep.subr.mxu0 0.0
    %2135 = vmatpush1.msra.mxu0 0.0
    %2136 = vmatprep.subr.mxu0 0.0
    %2137 = vmatpush1.msra.mxu0 0.0
    %2138 = vmatprep.subr.mxu0 0.0
    %2139 = vmatpush1.msra.mxu0 0.0
    %2140 = vmatprep.subr.mxu0 0.0
    %2141 = vmatpush1.msra.mxu0 0.0
    %2142 = vmatprep.mubr.f32.mxu0 0.0
    %v2143 = vand.u32 %v1703, 4294901760
    %2144 = vmatmul.mubr.f32.gmra.mrb[0].mxu0 %v2143
    %v2145 = vpop.f32.mrb[0].mxu0
    %v2146 = vadd.f32 %v2055, %v2145
    %v2147 = vpop.f32.mrb[0].mxu0
    %2148 = vmatprep.mubr.f32.mxu0 0.0
    %v2149 = vand.u32 %v1706, 4294901760
    %2150 = vmatmul.mubr.f32.gmra.mrb[0].mxu0 %v2149
    %v2151 = vpop.f32.mrb[0].mxu0
    %v2152 = vadd.f32 %v2063, %v2151
    %v2153 = vpop.f32.mrb[0].mxu0
    %2154 = vdwg.mxu0
    %2155 = vmatprep.subr.mxu0 0.0
    %v2156 = vand.u32 %v1170, 4294901760
    %2157 = vmatpush1.msra.mxu0 %v2156
    %2158 = vmatprep.subr.mxu0 0.0
    %v2159 = vand.u32 %v1171, 4294901760
    %2160 = vmatpush1.msra.mxu0 %v2159
    %2161 = vmatprep.subr.mxu0 0.0
    %v2162 = vand.u32 %v1172, 4294901760
    %2163 = vmatpush1.msra.mxu0 %v2162
    %2164 = vmatprep.subr.mxu0 0.0
    %v2165 = vand.u32 %v1173, 4294901760
    %2166 = vmatpush1.msra.mxu0 %v2165
    %2167 = vmatprep.subr.mxu0 0.0
    %2168 = vmatpush1.msra.mxu0 0.0
    %2169 = vmatprep.subr.mxu0 0.0
    %2170 = vmatpush1.msra.mxu0 0.0
    %2171 = vmatprep.subr.mxu0 0.0
    %2172 = vmatpush1.msra.mxu0 0.0
    %2173 = vmatprep.subr.mxu0 0.0
    %2174 = vmatpush1.msra.mxu0 0.0
    %2175 = vmatprep.subr.mxu0 0.0
    %2176 = vmatpush1.msra.mxu0 0.0
    %2177 = vmatprep.subr.mxu0 0.0
    %2178 = vmatpush1.msra.mxu0 0.0
    %2179 = vmatprep.subr.mxu0 0.0
    %2180 = vmatpush1.msra.mxu0 0.0
    %2181 = vmatprep.subr.mxu0 0.0
    %2182 = vmatpush1.msra.mxu0 0.0
    %2183 = vmatprep.subr.mxu0 0.0
    %2184 = vmatpush1.msra.mxu0 0.0
    %2185 = vmatprep.subr.mxu0 0.0
    %2186 = vmatpush1.msra.mxu0 0.0
    %2187 = vmatprep.subr.mxu0 0.0
    %2188 = vmatpush1.msra.mxu0 0.0
    %2189 = vmatprep.subr.mxu0 0.0
    %2190 = vmatpush1.msra.mxu0 0.0
    %2191 = vmatprep.subr.mxu0 0.0
    %2192 = vmatpush1.msra.mxu0 0.0
    %2193 = vmatprep.subr.mxu0 0.0
    %2194 = vmatpush1.msra.mxu0 0.0
    %2195 = vmatprep.subr.mxu0 0.0
    %2196 = vmatpush1.msra.mxu0 0.0
    %2197 = vmatprep.subr.mxu0 0.0
    %2198 = vmatpush1.msra.mxu0 0.0
    %2199 = vmatprep.subr.mxu0 0.0
    %2200 = vmatpush1.msra.mxu0 0.0
    %2201 = vmatprep.subr.mxu0 0.0
    %2202 = vmatpush1.msra.mxu0 0.0
    %2203 = vmatprep.subr.mxu0 0.0
    %2204 = vmatpush1.msra.mxu0 0.0
    %2205 = vmatprep.subr.mxu0 0.0
    %2206 = vmatpush1.msra.mxu0 0.0
    %2207 = vmatprep.subr.mxu0 0.0
    %2208 = vmatpush1.msra.mxu0 0.0
    %2209 = vmatprep.subr.mxu0 0.0
    %2210 = vmatpush1.msra.mxu0 0.0
    %2211 = vmatprep.subr.mxu0 0.0
    %2212 = vmatpush1.msra.mxu0 0.0
    %2213 = vmatprep.subr.mxu0 0.0
    %2214 = vmatpush1.msra.mxu0 0.0
    %2215 = vmatprep.subr.mxu0 0.0
    %2216 = vmatpush1.msra.mxu0 0.0
    %2217 = vmatprep.subr.mxu0 0.0
    %2218 = vmatpush1.msra.mxu0 0.0
    %2219 = vmatprep.subr.mxu0 0.0
    %2220 = vmatpush1.msra.mxu0 0.0
    %2221 = vmatprep.subr.mxu0 0.0
    %2222 = vmatpush1.msra.mxu0 0.0
    %2223 = vmatprep.mubr.f32.mxu0 0.0
    %v2224 = vand.u32 %v1703, 4294901760
    %2225 = vmatmul.mubr.f32.gmra.mrb[0].mxu0 %v2224
    %v2226 = vpop.f32.mrb[0].mxu0
    %v2227 = vadd.f32 %v2146, %v2226
    %v2228 = vpop.f32.mrb[0].mxu0
    %2229 = vmatprep.mubr.f32.mxu0 0.0
    %v2230 = vand.u32 %v1706, 4294901760
    %2231 = vmatmul.mubr.f32.gmra.mrb[0].mxu0 %v2230
    %v2232 = vpop.f32.mrb[0].mxu0
    %v2233 = vadd.f32 %v2152, %v2232
    %v2234 = vpop.f32.mrb[0].mxu0
    %2235 = vdwg.mxu0
    %s2236 = scalar_lea.vmem %s2, 2
    %v2237 = vld [vmem:[%s2236] sm:$0x1]
    %v2239 = vlaneseq
    %v2240 = vshrl.u32 %v2239, 7
    %v2241 = vsub.s32 0, %v2240
    %v2242 = vrot.slane %v2237, %v2241
    %v2244 = vadd.f32 %v2227, %v2242
    %v2245 = vadd.f32 %v2233, %v2242
    %vm2246 = vcmask 15360
    %2247 = vst.msk [vmem:[%s3] sm:$0xff] %vm2246, %v2244
    %vm2248 = vcmask 10240
    %2249 = vst.msk [vmem:[%s3 + $0x8] sm:$0x7] %vm2248, %v2245
    %s2250 = scalar_lea.vmem %s0, 32
    %v2251 = vld [vmem:[%s2250] sm:$0xff]
    %v2252 = vld [vmem:[%s2250 + $0x8] sm:$0xff]
    %v2253 = vld [vmem:[%s2250 + $0x10] sm:$0xff]
    %v2254 = vld [vmem:[%s2250 + $0x18] sm:$0xff]
    %v2255 = vld [vmem:[#allocation2] sm:$0xff]
    %v2256 = vld [vmem:[#allocation2 + $0x8] sm:$0xff]
    %v2257 = vld [vmem:[#allocation2 + $0x10] sm:$0xff]
    %v2258 = vld [vmem:[#allocation2 + $0x18] sm:$0xff]
    %v2259 = vld [vmem:[%s2] sm:$0x1]
    %v2261 = vlaneseq
    %v2262 = vshrl.u32 %v2261, 7
    %v2263 = vsub.s32 0, %v2262
    %v2264 = vrot.slane %v2259, %v2263
    %2266 = vxpose.xlu0.b32.start [1/16] %v2251, 128
    %2267 = vxpose.xlu0.b32.cont [2/16] %v2252, 128
    %2268 = vxpose.xlu0.b32.cont [3/16] %v2253, 128
    %2269 = vxpose.xlu0.b32.cont [4/16] %v2254, 128
    %2270 = vxpose.xlu0.b32.cont [5/16] 0.0, 128
    %2271 = vxpose.xlu0.b32.cont [6/16] 0.0, 128
    %2272 = vxpose.xlu0.b32.cont [7/16] 0.0, 128
    %2273 = vxpose.xlu0.b32.cont [8/16] 0.0, 128
    %2274 = vxpose.xlu0.b32.cont [9/16] 0.0, 128
    %2275 = vxpose.xlu0.b32.cont [10/16] 0.0, 128
    %2276 = vxpose.xlu0.b32.cont [11/16] 0.0, 128
    %2277 = vxpose.xlu0.b32.cont [12/16] 0.0, 128
    %2278 = vxpose.xlu0.b32.cont [13/16] 0.0, 128
    %2279 = vxpose.xlu0.b32.cont [14/16] 0.0, 128
    %2280 = vxpose.xlu0.b32.cont [15/16] 0.0, 128
    %2281 = vxpose.xlu0.b32.end [16/16] 0.0, 128
    %v2282 = vpop.trf.xlu0
    %v2283 = vpop.trf.xlu0
    %v2284 = vpop.trf.xlu0
    %v2285 = vpop.trf.xlu0
    %v2286 = vpop.trf.xlu0
    %v2287 = vpop.trf.xlu0
    %v2288 = vpop.trf.xlu0
    %v2289 = vpop.trf.xlu0
    %v2290 = vpop.trf.xlu0
    %v2291 = vpop.trf.xlu0
    %v2292 = vpop.trf.xlu0
    %v2293 = vpop.trf.xlu0
    %v2294 = vpop.trf.xlu0
    %v2295 = vpop.trf.xlu0
    %v2296 = vpop.trf.xlu0
    %v2297 = vpop.trf.xlu0
    %v2299 = vsel %vm75, %v2282, 0
    %v2302 = vsel %vm75, %v2283, 0
    %2304 = vmatprep.subr.mxu0 0.0
    %v2305 = vand.u32 %v2255, 4294901760
    %2306 = vmatpush1.msra.mxu0 %v2305
    %2307 = vmatprep.subr.mxu0 0.0
    %v2308 = vand.u32 %v2256, 4294901760
    %2309 = vmatpush1.msra.mxu0 %v2308
    %2310 = vmatprep.subr.mxu0 0.0
    %v2311 = vand.u32 %v2257, 4294901760
    %2312 = vmatpush1.msra.mxu0 %v2311
    %2313 = vmatprep.subr.mxu0 0.0
    %v2314 = vand.u32 %v2258, 4294901760
    %2315 = vmatpush1.msra.mxu0 %v2314
    %2316 = vmatprep.subr.mxu0 0.0
    %2317 = vmatpush1.msra.mxu0 0.0
    %2318 = vmatprep.subr.mxu0 0.0
    %2319 = vmatpush1.msra.mxu0 0.0
    %2320 = vmatprep.subr.mxu0 0.0
    %2321 = vmatpush1.msra.mxu0 0.0
    %2322 = vmatprep.subr.mxu0 0.0
    %2323 = vmatpush1.msra.mxu0 0.0
    %2324 = vmatprep.subr.mxu0 0.0
    %2325 = vmatpush1.msra.mxu0 0.0
    %2326 = vmatprep.subr.mxu0 0.0
    %2327 = vmatpush1.msra.mxu0 0.0
    %2328 = vmatprep.subr.mxu0 0.0
    %2329 = vmatpush1.msra.mxu0 0.0
    %2330 = vmatprep.subr.mxu0 0.0
    %2331 = vmatpush1.msra.mxu0 0.0
    %2332 = vmatprep.subr.mxu0 0.0
    %2333 = vmatpush1.msra.mxu0 0.0
    %2334 = vmatprep.subr.mxu0 0.0
    %2335 = vmatpush1.msra.mxu0 0.0
    %2336 = vmatprep.subr.mxu0 0.0
    %2337 = vmatpush1.msra.mxu0 0.0
    %2338 = vmatprep.subr.mxu0 0.0
    %2339 = vmatpush1.msra.mxu0 0.0
    %2340 = vmatprep.subr.mxu0 0.0
    %2341 = vmatpush1.msra.mxu0 0.0
    %2342 = vmatprep.subr.mxu0 0.0
    %2343 = vmatpush1.msra.mxu0 0.0
    %2344 = vmatprep.subr.mxu0 0.0
    %2345 = vmatpush1.msra.mxu0 0.0
    %2346 = vmatprep.subr.mxu0 0.0
    %2347 = vmatpush1.msra.mxu0 0.0
    %2348 = vmatprep.subr.mxu0 0.0
    %2349 = vmatpush1.msra.mxu0 0.0
    %2350 = vmatprep.subr.mxu0 0.0
    %2351 = vmatpush1.msra.mxu0 0.0
    %2352 = vmatprep.subr.mxu0 0.0
    %2353 = vmatpush1.msra.mxu0 0.0
    %2354 = vmatprep.subr.mxu0 0.0
    %2355 = vmatpush1.msra.mxu0 0.0
    %2356 = vmatprep.subr.mxu0 0.0
    %2357 = vmatpush1.msra.mxu0 0.0
    %2358 = vmatprep.subr.mxu0 0.0
    %2359 = vmatpush1.msra.mxu0 0.0
    %2360 = vmatprep.subr.mxu0 0.0
    %2361 = vmatpush1.msra.mxu0 0.0
    %2362 = vmatprep.subr.mxu0 0.0
    %2363 = vmatpush1.msra.mxu0 0.0
    %2364 = vmatprep.subr.mxu0 0.0
    %2365 = vmatpush1.msra.mxu0 0.0
    %2366 = vmatprep.subr.mxu0 0.0
    %2367 = vmatpush1.msra.mxu0 0.0
    %2368 = vmatprep.subr.mxu0 0.0
    %2369 = vmatpush1.msra.mxu0 0.0
    %2370 = vmatprep.subr.mxu0 0.0
    %2371 = vmatpush1.msra.mxu0 0.0
    %2372 = vmatprep.mubr.f32.mxu0 0.0
    %v2373 = vand.u32 %v2299, 4294901760
    %v2374 = vsub.f32 %v2299, %v2373
    %v2375 = vand.u32 %v2374, 4294901760
    %v2376 = vsub.f32 %v2374, %v2375
    %v2377 = vand.u32 %v2376, 4294901760
    %2378 = vmatmul.mubr.f32.gmra.mrb[0].mxu0 %v2377
    %v2379 = vpop.f32.mrb[0].mxu0
    %v2380 = vadd.f32 %v2264, %v2379
    %v2381 = vpop.f32.mrb[0].mxu0
    %2382 = vmatprep.mubr.f32.mxu0 0.0
    %v2383 = vand.u32 %v2302, 4294901760
    %v2384 = vsub.f32 %v2302, %v2383
    %v2385 = vand.u32 %v2384, 4294901760
    %v2386 = vsub.f32 %v2384, %v2385
    %v2387 = vand.u32 %v2386, 4294901760
    %2388 = vmatmul.mubr.f32.gmra.mrb[0].mxu0 %v2387
    %v2389 = vpop.f32.mrb[0].mxu0
    %v2390 = vadd.f32 %v2264, %v2389
    %v2391 = vpop.f32.mrb[0].mxu0
    %2392 = vdwg.mxu0
    %2393 = vmatprep.subr.mxu0 0.0
    %v2394 = vand.u32 %v2255, 4294901760
    %v2395 = vsub.f32 %v2255, %v2394
    %v2396 = vand.u32 %v2395, 4294901760
    %v2397 = vsub.f32 %v2395, %v2396
    %v2398 = vand.u32 %v2397, 4294901760
    %2399 = vmatpush1.msra.mxu0 %v2398
    %2400 = vmatprep.subr.mxu0 0.0
    %v2401 = vand.u32 %v2256, 4294901760
    %v2402 = vsub.f32 %v2256, %v2401
    %v2403 = vand.u32 %v2402, 4294901760
    %v2404 = vsub.f32 %v2402, %v2403
    %v2405 = vand.u32 %v2404, 4294901760
    %2406 = vmatpush1.msra.mxu0 %v2405
    %2407 = vmatprep.subr.mxu0 0.0
    %v2408 = vand.u32 %v2257, 4294901760
    %v2409 = vsub.f32 %v2257, %v2408
    %v2410 = vand.u32 %v2409, 4294901760
    %v2411 = vsub.f32 %v2409, %v2410
    %v2412 = vand.u32 %v2411, 4294901760
    %2413 = vmatpush1.msra.mxu0 %v2412
    %2414 = vmatprep.subr.mxu0 0.0
    %v2415 = vand.u32 %v2258, 4294901760
    %v2416 = vsub.f32 %v2258, %v2415
    %v2417 = vand.u32 %v2416, 4294901760
    %v2418 = vsub.f32 %v2416, %v2417
    %v2419 = vand.u32 %v2418, 4294901760
    %2420 = vmatpush1.msra.mxu0 %v2419
    %2421 = vmatprep.subr.mxu0 0.0
    %2422 = vmatpush1.msra.mxu0 0.0
    %2423 = vmatprep.subr.mxu0 0.0
    %2424 = vmatpush1.msra.mxu0 0.0
    %2425 = vmatprep.subr.mxu0 0.0
    %2426 = vmatpush1.msra.mxu0 0.0
    %2427 = vmatprep.subr.mxu0 0.0
    %2428 = vmatpush1.msra.mxu0 0.0
    %2429 = vmatprep.subr.mxu0 0.0
    %2430 = vmatpush1.msra.mxu0 0.0
    %2431 = vmatprep.subr.mxu0 0.0
    %2432 = vmatpush1.msra.mxu0 0.0
    %2433 = vmatprep.subr.mxu0 0.0
    %2434 = vmatpush1.msra.mxu0 0.0
    %2435 = vmatprep.subr.mxu0 0.0
    %2436 = vmatpush1.msra.mxu0 0.0
    %2437 = vmatprep.subr.mxu0 0.0
    %2438 = vmatpush1.msra.mxu0 0.0
    %2439 = vmatprep.subr.mxu0 0.0
    %2440 = vmatpush1.msra.mxu0 0.0
    %2441 = vmatprep.subr.mxu0 0.0
    %2442 = vmatpush1.msra.mxu0 0.0
    %2443 = vmatprep.subr.mxu0 0.0
    %2444 = vmatpush1.msra.mxu0 0.0
    %2445 = vmatprep.subr.mxu0 0.0
    %2446 = vmatpush1.msra.mxu0 0.0
    %2447 = vmatprep.subr.mxu0 0.0
    %2448 = vmatpush1.msra.mxu0 0.0
    %2449 = vmatprep.subr.mxu0 0.0
    %2450 = vmatpush1.msra.mxu0 0.0
    %2451 = vmatprep.subr.mxu0 0.0
    %2452 = vmatpush1.msra.mxu0 0.0
    %2453 = vmatprep.subr.mxu0 0.0
    %2454 = vmatpush1.msra.mxu0 0.0
    %2455 = vmatprep.subr.mxu0 0.0
    %2456 = vmatpush1.msra.mxu0 0.0
    %2457 = vmatprep.subr.mxu0 0.0
    %2458 = vmatpush1.msra.mxu0 0.0
    %2459 = vmatprep.subr.mxu0 0.0
    %2460 = vmatpush1.msra.mxu0 0.0
    %2461 = vmatprep.subr.mxu0 0.0
    %2462 = vmatpush1.msra.mxu0 0.0
    %2463 = vmatprep.subr.mxu0 0.0
    %2464 = vmatpush1.msra.mxu0 0.0
    %2465 = vmatprep.subr.mxu0 0.0
    %2466 = vmatpush1.msra.mxu0 0.0
    %2467 = vmatprep.subr.mxu0 0.0
    %2468 = vmatpush1.msra.mxu0 0.0
    %2469 = vmatprep.subr.mxu0 0.0
    %2470 = vmatpush1.msra.mxu0 0.0
    %2471 = vmatprep.subr.mxu0 0.0
    %2472 = vmatpush1.msra.mxu0 0.0
    %2473 = vmatprep.subr.mxu0 0.0
    %2474 = vmatpush1.msra.mxu0 0.0
    %2475 = vmatprep.subr.mxu0 0.0
    %2476 = vmatpush1.msra.mxu0 0.0
    %2477 = vmatprep.mubr.f32.mxu0 0.0
    %v2478 = vand.u32 %v2299, 4294901760
    %2479 = vmatmul.mubr.f32.gmra.mrb[0].mxu0 %v2478
    %v2480 = vpop.f32.mrb[0].mxu0
    %v2481 = vadd.f32 %v2380, %v2480
    %v2482 = vpop.f32.mrb[0].mxu0
    %2483 = vmatprep.mubr.f32.mxu0 0.0
    %v2484 = vand.u32 %v2302, 4294901760
    %2485 = vmatmul.mubr.f32.gmra.mrb[0].mxu0 %v2484
    %v2486 = vpop.f32.mrb[0].mxu0
    %v2487 = vadd.f32 %v2390, %v2486
    %v2488 = vpop.f32.mrb[0].mxu0
    %2489 = vdwg.mxu0
    %2490 = vmatprep.subr.mxu0 0.0
    %v2491 = vand.u32 %v2255, 4294901760
    %v2492 = vsub.f32 %v2255, %v2491
    %2493 = vmatpush1.msra.mxu0 %v2492
    %2494 = vmatprep.subr.mxu0 0.0
    %v2495 = vand.u32 %v2256, 4294901760
    %v2496 = vsub.f32 %v2256, %v2495
    %2497 = vmatpush1.msra.mxu0 %v2496
    %2498 = vmatprep.subr.mxu0 0.0
    %v2499 = vand.u32 %v2257, 4294901760
    %v2500 = vsub.f32 %v2257, %v2499
    %2501 = vmatpush1.msra.mxu0 %v2500
    %2502 = vmatprep.subr.mxu0 0.0
    %v2503 = vand.u32 %v2258, 4294901760
    %v2504 = vsub.f32 %v2258, %v2503
    %2505 = vmatpush1.msra.mxu0 %v2504
    %2506 = vmatprep.subr.mxu0 0.0
    %2507 = vmatpush1.msra.mxu0 0.0
    %2508 = vmatprep.subr.mxu0 0.0
    %2509 = vmatpush1.msra.mxu0 0.0
    %2510 = vmatprep.subr.mxu0 0.0
    %2511 = vmatpush1.msra.mxu0 0.0
    %2512 = vmatprep.subr.mxu0 0.0
    %2513 = vmatpush1.msra.mxu0 0.0
    %2514 = vmatprep.subr.mxu0 0.0
    %2515 = vmatpush1.msra.mxu0 0.0
    %2516 = vmatprep.subr.mxu0 0.0
    %2517 = vmatpush1.msra.mxu0 0.0
    %2518 = vmatprep.subr.mxu0 0.0
    %2519 = vmatpush1.msra.mxu0 0.0
    %2520 = vmatprep.subr.mxu0 0.0
    %2521 = vmatpush1.msra.mxu0 0.0
    %2522 = vmatprep.subr.mxu0 0.0
    %2523 = vmatpush1.msra.mxu0 0.0
    %2524 = vmatprep.subr.mxu0 0.0
    %2525 = vmatpush1.msra.mxu0 0.0
    %2526 = vmatprep.subr.mxu0 0.0
    %2527 = vmatpush1.msra.mxu0 0.0
    %2528 = vmatprep.subr.mxu0 0.0
    %2529 = vmatpush1.msra.mxu0 0.0
    %2530 = vmatprep.subr.mxu0 0.0
    %2531 = vmatpush1.msra.mxu0 0.0
    %2532 = vmatprep.subr.mxu0 0.0
    %2533 = vmatpush1.msra.mxu0 0.0
    %2534 = vmatprep.subr.mxu0 0.0
    %2535 = vmatpush1.msra.mxu0 0.0
    %2536 = vmatprep.subr.mxu0 0.0
    %2537 = vmatpush1.msra.mxu0 0.0
    %2538 = vmatprep.subr.mxu0 0.0
    %2539 = vmatpush1.msra.mxu0 0.0
    %2540 = vmatprep.subr.mxu0 0.0
    %2541 = vmatpush1.msra.mxu0 0.0
    %2542 = vmatprep.subr.mxu0 0.0
    %2543 = vmatpush1.msra.mxu0 0.0
    %2544 = vmatprep.subr.mxu0 0.0
    %2545 = vmatpush1.msra.mxu0 0.0
    %2546 = vmatprep.subr.mxu0 0.0
    %2547 = vmatpush1.msra.mxu0 0.0
    %2548 = vmatprep.subr.mxu0 0.0
    %2549 = vmatpush1.msra.mxu0 0.0
    %2550 = vmatprep.subr.mxu0 0.0
    %2551 = vmatpush1.msra.mxu0 0.0
    %2552 = vmatprep.subr.mxu0 0.0
    %2553 = vmatpush1.msra.mxu0 0.0
    %2554 = vmatprep.subr.mxu0 0.0
    %2555 = vmatpush1.msra.mxu0 0.0
    %2556 = vmatprep.subr.mxu0 0.0
    %2557 = vmatpush1.msra.mxu0 0.0
    %2558 = vmatprep.subr.mxu0 0.0
    %2559 = vmatpush1.msra.mxu0 0.0
    %2560 = vmatprep.subr.mxu0 0.0
    %2561 = vmatpush1.msra.mxu0 0.0
    %2562 = vmatprep.mubr.f32.mxu0 0.0
    %v2563 = vand.u32 %v2299, 4294901760
    %v2564 = vsub.f32 %v2299, %v2563
    %2565 = vmatmul.mubr.f32.gmra.mrb[0].mxu0 %v2564
    %v2566 = vpop.f32.mrb[0].mxu0
    %v2567 = vadd.f32 %v2481, %v2566
    %v2568 = vpop.f32.mrb[0].mxu0
    %2569 = vmatprep.mubr.f32.mxu0 0.0
    %v2570 = vand.u32 %v2302, 4294901760
    %v2571 = vsub.f32 %v2302, %v2570
    %2572 = vmatmul.mubr.f32.gmra.mrb[0].mxu0 %v2571
    %v2573 = vpop.f32.mrb[0].mxu0
    %v2574 = vadd.f32 %v2487, %v2573
    %v2575 = vpop.f32.mrb[0].mxu0
    %2576 = vdwg.mxu0
    %2577 = vmatprep.subr.mxu0 0.0
    %v2578 = vand.u32 %v2255, 4294901760
    %2579 = vmatpush1.msra.mxu0 %v2578
    %2580 = vmatprep.subr.mxu0 0.0
    %v2581 = vand.u32 %v2256, 4294901760
    %2582 = vmatpush1.msra.mxu0 %v2581
    %2583 = vmatprep.subr.mxu0 0.0
    %v2584 = vand.u32 %v2257, 4294901760
    %2585 = vmatpush1.msra.mxu0 %v2584
    %2586 = vmatprep.subr.mxu0 0.0
    %v2587 = vand.u32 %v2258, 4294901760
    %2588 = vmatpush1.msra.mxu0 %v2587
    %2589 = vmatprep.subr.mxu0 0.0
    %2590 = vmatpush1.msra.mxu0 0.0
    %2591 = vmatprep.subr.mxu0 0.0
    %2592 = vmatpush1.msra.mxu0 0.0
    %2593 = vmatprep.subr.mxu0 0.0
    %2594 = vmatpush1.msra.mxu0 0.0
    %2595 = vmatprep.subr.mxu0 0.0
    %2596 = vmatpush1.msra.mxu0 0.0
    %2597 = vmatprep.subr.mxu0 0.0
    %2598 = vmatpush1.msra.mxu0 0.0
    %2599 = vmatprep.subr.mxu0 0.0
    %2600 = vmatpush1.msra.mxu0 0.0
    %2601 = vmatprep.subr.mxu0 0.0
    %2602 = vmatpush1.msra.mxu0 0.0
    %2603 = vmatprep.subr.mxu0 0.0
    %2604 = vmatpush1.msra.mxu0 0.0
    %2605 = vmatprep.subr.mxu0 0.0
    %2606 = vmatpush1.msra.mxu0 0.0
    %2607 = vmatprep.subr.mxu0 0.0
    %2608 = vmatpush1.msra.mxu0 0.0
    %2609 = vmatprep.subr.mxu0 0.0
    %2610 = vmatpush1.msra.mxu0 0.0
    %2611 = vmatprep.subr.mxu0 0.0
    %2612 = vmatpush1.msra.mxu0 0.0
    %2613 = vmatprep.subr.mxu0 0.0
    %2614 = vmatpush1.msra.mxu0 0.0
    %2615 = vmatprep.subr.mxu0 0.0
    %2616 = vmatpush1.msra.mxu0 0.0
    %2617 = vmatprep.subr.mxu0 0.0
    %2618 = vmatpush1.msra.mxu0 0.0
    %2619 = vmatprep.subr.mxu0 0.0
    %2620 = vmatpush1.msra.mxu0 0.0
    %2621 = vmatprep.subr.mxu0 0.0
    %2622 = vmatpush1.msra.mxu0 0.0
    %2623 = vmatprep.subr.mxu0 0.0
    %2624 = vmatpush1.msra.mxu0 0.0
    %2625 = vmatprep.subr.mxu0 0.0
    %2626 = vmatpush1.msra.mxu0 0.0
    %2627 = vmatprep.subr.mxu0 0.0
    %2628 = vmatpush1.msra.mxu0 0.0
    %2629 = vmatprep.subr.mxu0 0.0
    %2630 = vmatpush1.msra.mxu0 0.0
    %2631 = vmatprep.subr.mxu0 0.0
    %2632 = vmatpush1.msra.mxu0 0.0
    %2633 = vmatprep.subr.mxu0 0.0
    %2634 = vmatpush1.msra.mxu0 0.0
    %2635 = vmatprep.subr.mxu0 0.0
    %2636 = vmatpush1.msra.mxu0 0.0
    %2637 = vmatprep.subr.mxu0 0.0
    %2638 = vmatpush1.msra.mxu0 0.0
    %2639 = vmatprep.subr.mxu0 0.0
    %2640 = vmatpush1.msra.mxu0 0.0
    %2641 = vmatprep.subr.mxu0 0.0
    %2642 = vmatpush1.msra.mxu0 0.0
    %2643 = vmatprep.subr.mxu0 0.0
    %2644 = vmatpush1.msra.mxu0 0.0
    %2645 = vmatprep.mubr.f32.mxu0 0.0
    %v2646 = vand.u32 %v2299, 4294901760
    %v2647 = vsub.f32 %v2299, %v2646
    %v2648 = vand.u32 %v2647, 4294901760
    %2649 = vmatmul.mubr.f32.gmra.mrb[0].mxu0 %v2648
    %v2650 = vpop.f32.mrb[0].mxu0
    %v2651 = vadd.f32 %v2567, %v2650
    %v2652 = vpop.f32.mrb[0].mxu0
    %2653 = vmatprep.mubr.f32.mxu0 0.0
    %v2654 = vand.u32 %v2302, 4294901760
    %v2655 = vsub.f32 %v2302, %v2654
    %v2656 = vand.u32 %v2655, 4294901760
    %2657 = vmatmul.mubr.f32.gmra.mrb[0].mxu0 %v2656
    %v2658 = vpop.f32.mrb[0].mxu0
    %v2659 = vadd.f32 %v2574, %v2658
    %v2660 = vpop.f32.mrb[0].mxu0
    %2661 = vdwg.mxu0
    %2662 = vmatprep.subr.mxu0 0.0
    %v2663 = vand.u32 %v2255, 4294901760
    %v2664 = vsub.f32 %v2255, %v2663
    %v2665 = vand.u32 %v2664, 4294901760
    %2666 = vmatpush1.msra.mxu0 %v2665
    %2667 = vmatprep.subr.mxu0 0.0
    %v2668 = vand.u32 %v2256, 4294901760
    %v2669 = vsub.f32 %v2256, %v2668
    %v2670 = vand.u32 %v2669, 4294901760
    %2671 = vmatpush1.msra.mxu0 %v2670
    %2672 = vmatprep.subr.mxu0 0.0
    %v2673 = vand.u32 %v2257, 4294901760
    %v2674 = vsub.f32 %v2257, %v2673
    %v2675 = vand.u32 %v2674, 4294901760
    %2676 = vmatpush1.msra.mxu0 %v2675
    %2677 = vmatprep.subr.mxu0 0.0
    %v2678 = vand.u32 %v2258, 4294901760
    %v2679 = vsub.f32 %v2258, %v2678
    %v2680 = vand.u32 %v2679, 4294901760
    %2681 = vmatpush1.msra.mxu0 %v2680
    %2682 = vmatprep.subr.mxu0 0.0
    %2683 = vmatpush1.msra.mxu0 0.0
    %2684 = vmatprep.subr.mxu0 0.0
    %2685 = vmatpush1.msra.mxu0 0.0
    %2686 = vmatprep.subr.mxu0 0.0
    %2687 = vmatpush1.msra.mxu0 0.0
    %2688 = vmatprep.subr.mxu0 0.0
    %2689 = vmatpush1.msra.mxu0 0.0
    %2690 = vmatprep.subr.mxu0 0.0
    %2691 = vmatpush1.msra.mxu0 0.0
    %2692 = vmatprep.subr.mxu0 0.0
    %2693 = vmatpush1.msra.mxu0 0.0
    %2694 = vmatprep.subr.mxu0 0.0
    %2695 = vmatpush1.msra.mxu0 0.0
    %2696 = vmatprep.subr.mxu0 0.0
    %2697 = vmatpush1.msra.mxu0 0.0
    %2698 = vmatprep.subr.mxu0 0.0
    %2699 = vmatpush1.msra.mxu0 0.0
    %2700 = vmatprep.subr.mxu0 0.0
    %2701 = vmatpush1.msra.mxu0 0.0
    %2702 = vmatprep.subr.mxu0 0.0
    %2703 = vmatpush1.msra.mxu0 0.0
    %2704 = vmatprep.subr.mxu0 0.0
    %2705 = vmatpush1.msra.mxu0 0.0
    %2706 = vmatprep.subr.mxu0 0.0
    %2707 = vmatpush1.msra.mxu0 0.0
    %2708 = vmatprep.subr.mxu0 0.0
    %2709 = vmatpush1.msra.mxu0 0.0
    %2710 = vmatprep.subr.mxu0 0.0
    %2711 = vmatpush1.msra.mxu0 0.0
    %2712 = vmatprep.subr.mxu0 0.0
    %2713 = vmatpush1.msra.mxu0 0.0
    %2714 = vmatprep.subr.mxu0 0.0
    %2715 = vmatpush1.msra.mxu0 0.0
    %2716 = vmatprep.subr.mxu0 0.0
    %2717 = vmatpush1.msra.mxu0 0.0
    %2718 = vmatprep.subr.mxu0 0.0
    %2719 = vmatpush1.msra.mxu0 0.0
    %2720 = vmatprep.subr.mxu0 0.0
    %2721 = vmatpush1.msra.mxu0 0.0
    %2722 = vmatprep.subr.mxu0 0.0
    %2723 = vmatpush1.msra.mxu0 0.0
    %2724 = vmatprep.subr.mxu0 0.0
    %2725 = vmatpush1.msra.mxu0 0.0
    %2726 = vmatprep.subr.mxu0 0.0
    %2727 = vmatpush1.msra.mxu0 0.0
    %2728 = vmatprep.subr.mxu0 0.0
    %2729 = vmatpush1.msra.mxu0 0.0
    %2730 = vmatprep.subr.mxu0 0.0
    %2731 = vmatpush1.msra.mxu0 0.0
    %2732 = vmatprep.subr.mxu0 0.0
    %2733 = vmatpush1.msra.mxu0 0.0
    %2734 = vmatprep.subr.mxu0 0.0
    %2735 = vmatpush1.msra.mxu0 0.0
    %2736 = vmatprep.subr.mxu0 0.0
    %2737 = vmatpush1.msra.mxu0 0.0
    %2738 = vmatprep.mubr.f32.mxu0 0.0
    %v2739 = vand.u32 %v2299, 4294901760
    %2740 = vmatmul.mubr.f32.gmra.mrb[0].mxu0 %v2739
    %v2741 = vpop.f32.mrb[0].mxu0
    %v2742 = vadd.f32 %v2651, %v2741
    %v2743 = vpop.f32.mrb[0].mxu0
    %2744 = vmatprep.mubr.f32.mxu0 0.0
    %v2745 = vand.u32 %v2302, 4294901760
    %2746 = vmatmul.mubr.f32.gmra.mrb[0].mxu0 %v2745
    %v2747 = vpop.f32.mrb[0].mxu0
    %v2748 = vadd.f32 %v2659, %v2747
    %v2749 = vpop.f32.mrb[0].mxu0
    %2750 = vdwg.mxu0
    %2751 = vmatprep.subr.mxu0 0.0
    %v2752 = vand.u32 %v2255, 4294901760
    %2753 = vmatpush1.msra.mxu0 %v2752
    %2754 = vmatprep.subr.mxu0 0.0
    %v2755 = vand.u32 %v2256, 4294901760
    %2756 = vmatpush1.msra.mxu0 %v2755
    %2757 = vmatprep.subr.mxu0 0.0
    %v2758 = vand.u32 %v2257, 4294901760
    %2759 = vmatpush1.msra.mxu0 %v2758
    %2760 = vmatprep.subr.mxu0 0.0
    %v2761 = vand.u32 %v2258, 4294901760
    %2762 = vmatpush1.msra.mxu0 %v2761
    %2763 = vmatprep.subr.mxu0 0.0
    %2764 = vmatpush1.msra.mxu0 0.0
    %2765 = vmatprep.subr.mxu0 0.0
    %2766 = vmatpush1.msra.mxu0 0.0
    %2767 = vmatprep.subr.mxu0 0.0
    %2768 = vmatpush1.msra.mxu0 0.0
    %2769 = vmatprep.subr.mxu0 0.0
    %2770 = vmatpush1.msra.mxu0 0.0
    %2771 = vmatprep.subr.mxu0 0.0
    %2772 = vmatpush1.msra.mxu0 0.0
    %2773 = vmatprep.subr.mxu0 0.0
    %2774 = vmatpush1.msra.mxu0 0.0
    %2775 = vmatprep.subr.mxu0 0.0
    %2776 = vmatpush1.msra.mxu0 0.0
    %2777 = vmatprep.subr.mxu0 0.0
    %2778 = vmatpush1.msra.mxu0 0.0
    %2779 = vmatprep.subr.mxu0 0.0
    %2780 = vmatpush1.msra.mxu0 0.0
    %2781 = vmatprep.subr.mxu0 0.0
    %2782 = vmatpush1.msra.mxu0 0.0
    %2783 = vmatprep.subr.mxu0 0.0
    %2784 = vmatpush1.msra.mxu0 0.0
    %2785 = vmatprep.subr.mxu0 0.0
    %2786 = vmatpush1.msra.mxu0 0.0
    %2787 = vmatprep.subr.mxu0 0.0
    %2788 = vmatpush1.msra.mxu0 0.0
    %2789 = vmatprep.subr.mxu0 0.0
    %2790 = vmatpush1.msra.mxu0 0.0
    %2791 = vmatprep.subr.mxu0 0.0
    %2792 = vmatpush1.msra.mxu0 0.0
    %2793 = vmatprep.subr.mxu0 0.0
    %2794 = vmatpush1.msra.mxu0 0.0
    %2795 = vmatprep.subr.mxu0 0.0
    %2796 = vmatpush1.msra.mxu0 0.0
    %2797 = vmatprep.subr.mxu0 0.0
    %2798 = vmatpush1.msra.mxu0 0.0
    %2799 = vmatprep.subr.mxu0 0.0
    %2800 = vmatpush1.msra.mxu0 0.0
    %2801 = vmatprep.subr.mxu0 0.0
    %2802 = vmatpush1.msra.mxu0 0.0
    %2803 = vmatprep.subr.mxu0 0.0
    %2804 = vmatpush1.msra.mxu0 0.0
    %2805 = vmatprep.subr.mxu0 0.0
    %2806 = vmatpush1.msra.mxu0 0.0
    %2807 = vmatprep.subr.mxu0 0.0
    %2808 = vmatpush1.msra.mxu0 0.0
    %2809 = vmatprep.subr.mxu0 0.0
    %2810 = vmatpush1.msra.mxu0 0.0
    %2811 = vmatprep.subr.mxu0 0.0
    %2812 = vmatpush1.msra.mxu0 0.0
    %2813 = vmatprep.subr.mxu0 0.0
    %2814 = vmatpush1.msra.mxu0 0.0
    %2815 = vmatprep.subr.mxu0 0.0
    %2816 = vmatpush1.msra.mxu0 0.0
    %2817 = vmatprep.subr.mxu0 0.0
    %2818 = vmatpush1.msra.mxu0 0.0
    %2819 = vmatprep.mubr.f32.mxu0 0.0
    %v2820 = vand.u32 %v2299, 4294901760
    %2821 = vmatmul.mubr.f32.gmra.mrb[0].mxu0 %v2820
    %v2822 = vpop.f32.mrb[0].mxu0
    %v2823 = vadd.f32 %v2742, %v2822
    %v2824 = vpop.f32.mrb[0].mxu0
    %2825 = vmatprep.mubr.f32.mxu0 0.0
    %v2826 = vand.u32 %v2302, 4294901760
    %2827 = vmatmul.mubr.f32.gmra.mrb[0].mxu0 %v2826
    %v2828 = vpop.f32.mrb[0].mxu0
    %v2829 = vadd.f32 %v2748, %v2828
    %v2830 = vpop.f32.mrb[0].mxu0
    %2831 = vdwg.mxu0
    %vm2832 = vcmp.gt.f32.partialorder %v2823, 0.0
    %vm2833 = vcmp.gt.f32.partialorder %v2829, 0.0
    %v2834 = vmul.f32 %v2823, 0.01
    %v2835 = vmul.f32 %v2829, 0.01
    %v2836 = vsel %vm2832, %v2823, %v2834
    %v2837 = vsel %vm2833, %v2829, %v2835
    %v2838 = vld [vmem:[%s616] sm:$0xff]
    %v2839 = vld [vmem:[%s616 + $0x8] sm:$0xff]
    %v2840 = vld [vmem:[%s616 + $0x10] sm:$0xff]
    %v2841 = vld [vmem:[%s616 + $0x18] sm:$0xff]
    %v2842 = vld [vmem:[%s621] sm:$0x1]
    %v2844 = vlaneseq
    %v2845 = vshrl.u32 %v2844, 7
    %v2846 = vsub.s32 0, %v2845
    %v2847 = vrot.slane %v2842, %v2846
    %v2850 = vsel %vm75, %v2836, 0
    %v2853 = vsel %vm75, %v2837, 0
    %2855 = vmatprep.subr.mxu0 0.0
    %v2856 = vand.u32 %v2838, 4294901760
    %2857 = vmatpush1.msra.mxu0 %v2856
    %2858 = vmatprep.subr.mxu0 0.0
    %v2859 = vand.u32 %v2839, 4294901760
    %2860 = vmatpush1.msra.mxu0 %v2859
    %2861 = vmatprep.subr.mxu0 0.0
    %v2862 = vand.u32 %v2840, 4294901760
    %2863 = vmatpush1.msra.mxu0 %v2862
    %2864 = vmatprep.subr.mxu0 0.0
    %v2865 = vand.u32 %v2841, 4294901760
    %2866 = vmatpush1.msra.mxu0 %v2865
    %2867 = vmatprep.subr.mxu0 0.0
    %2868 = vmatpush1.msra.mxu0 0.0
    %2869 = vmatprep.subr.mxu0 0.0
    %2870 = vmatpush1.msra.mxu0 0.0
    %2871 = vmatprep.subr.mxu0 0.0
    %2872 = vmatpush1.msra.mxu0 0.0
    %2873 = vmatprep.subr.mxu0 0.0
    %2874 = vmatpush1.msra.mxu0 0.0
    %2875 = vmatprep.subr.mxu0 0.0
    %2876 = vmatpush1.msra.mxu0 0.0
    %2877 = vmatprep.subr.mxu0 0.0
    %2878 = vmatpush1.msra.mxu0 0.0
    %2879 = vmatprep.subr.mxu0 0.0
    %2880 = vmatpush1.msra.mxu0 0.0
    %2881 = vmatprep.subr.mxu0 0.0
    %2882 = vmatpush1.msra.mxu0 0.0
    %2883 = vmatprep.subr.mxu0 0.0
    %2884 = vmatpush1.msra.mxu0 0.0
    %2885 = vmatprep.subr.mxu0 0.0
    %2886 = vmatpush1.msra.mxu0 0.0
    %2887 = vmatprep.subr.mxu0 0.0
    %2888 = vmatpush1.msra.mxu0 0.0
    %2889 = vmatprep.subr.mxu0 0.0
    %2890 = vmatpush1.msra.mxu0 0.0
    %2891 = vmatprep.subr.mxu0 0.0
    %2892 = vmatpush1.msra.mxu0 0.0
    %2893 = vmatprep.subr.mxu0 0.0
    %2894 = vmatpush1.msra.mxu0 0.0
    %2895 = vmatprep.subr.mxu0 0.0
    %2896 = vmatpush1.msra.mxu0 0.0
    %2897 = vmatprep.subr.mxu0 0.0
    %2898 = vmatpush1.msra.mxu0 0.0
    %2899 = vmatprep.subr.mxu0 0.0
    %2900 = vmatpush1.msra.mxu0 0.0
    %2901 = vmatprep.subr.mxu0 0.0
    %2902 = vmatpush1.msra.mxu0 0.0
    %2903 = vmatprep.subr.mxu0 0.0
    %2904 = vmatpush1.msra.mxu0 0.0
    %2905 = vmatprep.subr.mxu0 0.0
    %2906 = vmatpush1.msra.mxu0 0.0
    %2907 = vmatprep.subr.mxu0 0.0
    %2908 = vmatpush1.msra.mxu0 0.0
    %2909 = vmatprep.subr.mxu0 0.0
    %2910 = vmatpush1.msra.mxu0 0.0
    %2911 = vmatprep.subr.mxu0 0.0
    %2912 = vmatpush1.msra.mxu0 0.0
    %2913 = vmatprep.subr.mxu0 0.0
    %2914 = vmatpush1.msra.mxu0 0.0
    %2915 = vmatprep.subr.mxu0 0.0
    %2916 = vmatpush1.msra.mxu0 0.0
    %2917 = vmatprep.subr.mxu0 0.0
    %2918 = vmatpush1.msra.mxu0 0.0
    %2919 = vmatprep.subr.mxu0 0.0
    %2920 = vmatpush1.msra.mxu0 0.0
    %2921 = vmatprep.subr.mxu0 0.0
    %2922 = vmatpush1.msra.mxu0 0.0
    %2923 = vmatprep.mubr.f32.mxu0 0.0
    %v2924 = vand.u32 %v2850, 4294901760
    %v2925 = vsub.f32 %v2850, %v2924
    %v2926 = vand.u32 %v2925, 4294901760
    %v2927 = vsub.f32 %v2925, %v2926
    %v2928 = vand.u32 %v2927, 4294901760
    %2929 = vmatmul.mubr.f32.gmra.mrb[0].mxu0 %v2928
    %v2930 = vpop.f32.mrb[0].mxu0
    %v2931 = vadd.f32 %v2847, %v2930
    %v2932 = vpop.f32.mrb[0].mxu0
    %2933 = vmatprep.mubr.f32.mxu0 0.0
    %v2934 = vand.u32 %v2853, 4294901760
    %v2935 = vsub.f32 %v2853, %v2934
    %v2936 = vand.u32 %v2935, 4294901760
    %v2937 = vsub.f32 %v2935, %v2936
    %v2938 = vand.u32 %v2937, 4294901760
    %2939 = vmatmul.mubr.f32.gmra.mrb[0].mxu0 %v2938
    %v2940 = vpop.f32.mrb[0].mxu0
    %v2941 = vadd.f32 %v2847, %v2940
    %v2942 = vpop.f32.mrb[0].mxu0
    %2943 = vdwg.mxu0
    %2944 = vmatprep.subr.mxu0 0.0
    %v2945 = vand.u32 %v2838, 4294901760
    %v2946 = vsub.f32 %v2838, %v2945
    %v2947 = vand.u32 %v2946, 4294901760
    %v2948 = vsub.f32 %v2946, %v2947
    %v2949 = vand.u32 %v2948, 4294901760
    %2950 = vmatpush1.msra.mxu0 %v2949
    %2951 = vmatprep.subr.mxu0 0.0
    %v2952 = vand.u32 %v2839, 4294901760
    %v2953 = vsub.f32 %v2839, %v2952
    %v2954 = vand.u32 %v2953, 4294901760
    %v2955 = vsub.f32 %v2953, %v2954
    %v2956 = vand.u32 %v2955, 4294901760
    %2957 = vmatpush1.msra.mxu0 %v2956
    %2958 = vmatprep.subr.mxu0 0.0
    %v2959 = vand.u32 %v2840, 4294901760
    %v2960 = vsub.f32 %v2840, %v2959
    %v2961 = vand.u32 %v2960, 4294901760
    %v2962 = vsub.f32 %v2960, %v2961
    %v2963 = vand.u32 %v2962, 4294901760
    %2964 = vmatpush1.msra.mxu0 %v2963
    %2965 = vmatprep.subr.mxu0 0.0
    %v2966 = vand.u32 %v2841, 4294901760
    %v2967 = vsub.f32 %v2841, %v2966
    %v2968 = vand.u32 %v2967, 4294901760
    %v2969 = vsub.f32 %v2967, %v2968
    %v2970 = vand.u32 %v2969, 4294901760
    %2971 = vmatpush1.msra.mxu0 %v2970
    %2972 = vmatprep.subr.mxu0 0.0
    %2973 = vmatpush1.msra.mxu0 0.0
    %2974 = vmatprep.subr.mxu0 0.0
    %2975 = vmatpush1.msra.mxu0 0.0
    %2976 = vmatprep.subr.mxu0 0.0
    %2977 = vmatpush1.msra.mxu0 0.0
    %2978 = vmatprep.subr.mxu0 0.0
    %2979 = vmatpush1.msra.mxu0 0.0
    %2980 = vmatprep.subr.mxu0 0.0
    %2981 = vmatpush1.msra.mxu0 0.0
    %2982 = vmatprep.subr.mxu0 0.0
    %2983 = vmatpush1.msra.mxu0 0.0
    %2984 = vmatprep.subr.mxu0 0.0
    %2985 = vmatpush1.msra.mxu0 0.0
    %2986 = vmatprep.subr.mxu0 0.0
    %2987 = vmatpush1.msra.mxu0 0.0
    %2988 = vmatprep.subr.mxu0 0.0
    %2989 = vmatpush1.msra.mxu0 0.0
    %2990 = vmatprep.subr.mxu0 0.0
    %2991 = vmatpush1.msra.mxu0 0.0
    %2992 = vmatprep.subr.mxu0 0.0
    %2993 = vmatpush1.msra.mxu0 0.0
    %2994 = vmatprep.subr.mxu0 0.0
    %2995 = vmatpush1.msra.mxu0 0.0
    %2996 = vmatprep.subr.mxu0 0.0
    %2997 = vmatpush1.msra.mxu0 0.0
    %2998 = vmatprep.subr.mxu0 0.0
    %2999 = vmatpush1.msra.mxu0 0.0
    %3000 = vmatprep.subr.mxu0 0.0
    %3001 = vmatpush1.msra.mxu0 0.0
    %3002 = vmatprep.subr.mxu0 0.0
    %3003 = vmatpush1.msra.mxu0 0.0
    %3004 = vmatprep.subr.mxu0 0.0
    %3005 = vmatpush1.msra.mxu0 0.0
    %3006 = vmatprep.subr.mxu0 0.0
    %3007 = vmatpush1.msra.mxu0 0.0
    %3008 = vmatprep.subr.mxu0 0.0
    %3009 = vmatpush1.msra.mxu0 0.0
    %3010 = vmatprep.subr.mxu0 0.0
    %3011 = vmatpush1.msra.mxu0 0.0
    %3012 = vmatprep.subr.mxu0 0.0
    %3013 = vmatpush1.msra.mxu0 0.0
    %3014 = vmatprep.subr.mxu0 0.0
    %3015 = vmatpush1.msra.mxu0 0.0
    %3016 = vmatprep.subr.mxu0 0.0
    %3017 = vmatpush1.msra.mxu0 0.0
    %3018 = vmatprep.subr.mxu0 0.0
    %3019 = vmatpush1.msra.mxu0 0.0
    %3020 = vmatprep.subr.mxu0 0.0
    %3021 = vmatpush1.msra.mxu0 0.0
    %3022 = vmatprep.subr.mxu0 0.0
    %3023 = vmatpush1.msra.mxu0 0.0
    %3024 = vmatprep.subr.mxu0 0.0
    %3025 = vmatpush1.msra.mxu0 0.0
    %3026 = vmatprep.subr.mxu0 0.0
    %3027 = vmatpush1.msra.mxu0 0.0
    %3028 = vmatprep.mubr.f32.mxu0 0.0
    %v3029 = vand.u32 %v2850, 4294901760
    %3030 = vmatmul.mubr.f32.gmra.mrb[0].mxu0 %v3029
    %v3031 = vpop.f32.mrb[0].mxu0
    %v3032 = vadd.f32 %v2931, %v3031
    %v3033 = vpop.f32.mrb[0].mxu0
    %3034 = vmatprep.mubr.f32.mxu0 0.0
    %v3035 = vand.u32 %v2853, 4294901760
    %3036 = vmatmul.mubr.f32.gmra.mrb[0].mxu0 %v3035
    %v3037 = vpop.f32.mrb[0].mxu0
    %v3038 = vadd.f32 %v2941, %v3037
    %v3039 = vpop.f32.mrb[0].mxu0
    %3040 = vdwg.mxu0
    %3041 = vmatprep.subr.mxu0 0.0
    %v3042 = vand.u32 %v2838, 4294901760
    %v3043 = vsub.f32 %v2838, %v3042
    %3044 = vmatpush1.msra.mxu0 %v3043
    %3045 = vmatprep.subr.mxu0 0.0
    %v3046 = vand.u32 %v2839, 4294901760
    %v3047 = vsub.f32 %v2839, %v3046
    %3048 = vmatpush1.msra.mxu0 %v3047
    %3049 = vmatprep.subr.mxu0 0.0
    %v3050 = vand.u32 %v2840, 4294901760
    %v3051 = vsub.f32 %v2840, %v3050
    %3052 = vmatpush1.msra.mxu0 %v3051
    %3053 = vmatprep.subr.mxu0 0.0
    %v3054 = vand.u32 %v2841, 4294901760
    %v3055 = vsub.f32 %v2841, %v3054
    %3056 = vmatpush1.msra.mxu0 %v3055
    %3057 = vmatprep.subr.mxu0 0.0
    %3058 = vmatpush1.msra.mxu0 0.0
    %3059 = vmatprep.subr.mxu0 0.0
    %3060 = vmatpush1.msra.mxu0 0.0
    %3061 = vmatprep.subr.mxu0 0.0
    %3062 = vmatpush1.msra.mxu0 0.0
    %3063 = vmatprep.subr.mxu0 0.0
    %3064 = vmatpush1.msra.mxu0 0.0
    %3065 = vmatprep.subr.mxu0 0.0
    %3066 = vmatpush1.msra.mxu0 0.0
    %3067 = vmatprep.subr.mxu0 0.0
    %3068 = vmatpush1.msra.mxu0 0.0
    %3069 = vmatprep.subr.mxu0 0.0
    %3070 = vmatpush1.msra.mxu0 0.0
    %3071 = vmatprep.subr.mxu0 0.0
    %3072 = vmatpush1.msra.mxu0 0.0
    %3073 = vmatprep.subr.mxu0 0.0
    %3074 = vmatpush1.msra.mxu0 0.0
    %3075 = vmatprep.subr.mxu0 0.0
    %3076 = vmatpush1.msra.mxu0 0.0
    %3077 = vmatprep.subr.mxu0 0.0
    %3078 = vmatpush1.msra.mxu0 0.0
    %3079 = vmatprep.subr.mxu0 0.0
    %3080 = vmatpush1.msra.mxu0 0.0
    %3081 = vmatprep.subr.mxu0 0.0
    %3082 = vmatpush1.msra.mxu0 0.0
    %3083 = vmatprep.subr.mxu0 0.0
    %3084 = vmatpush1.msra.mxu0 0.0
    %3085 = vmatprep.subr.mxu0 0.0
    %3086 = vmatpush1.msra.mxu0 0.0
    %3087 = vmatprep.subr.mxu0 0.0
    %3088 = vmatpush1.msra.mxu0 0.0
    %3089 = vmatprep.subr.mxu0 0.0
    %3090 = vmatpush1.msra.mxu0 0.0
    %3091 = vmatprep.subr.mxu0 0.0
    %3092 = vmatpush1.msra.mxu0 0.0
    %3093 = vmatprep.subr.mxu0 0.0
    %3094 = vmatpush1.msra.mxu0 0.0
    %3095 = vmatprep.subr.mxu0 0.0
    %3096 = vmatpush1.msra.mxu0 0.0
    %3097 = vmatprep.subr.mxu0 0.0
    %3098 = vmatpush1.msra.mxu0 0.0
    %3099 = vmatprep.subr.mxu0 0.0
    %3100 = vmatpush1.msra.mxu0 0.0
    %3101 = vmatprep.subr.mxu0 0.0
    %3102 = vmatpush1.msra.mxu0 0.0
    %3103 = vmatprep.subr.mxu0 0.0
    %3104 = vmatpush1.msra.mxu0 0.0
    %3105 = vmatprep.subr.mxu0 0.0
    %3106 = vmatpush1.msra.mxu0 0.0
    %3107 = vmatprep.subr.mxu0 0.0
    %3108 = vmatpush1.msra.mxu0 0.0
    %3109 = vmatprep.subr.mxu0 0.0
    %3110 = vmatpush1.msra.mxu0 0.0
    %3111 = vmatprep.subr.mxu0 0.0
    %3112 = vmatpush1.msra.mxu0 0.0
    %3113 = vmatprep.mubr.f32.mxu0 0.0
    %v3114 = vand.u32 %v2850, 4294901760
    %v3115 = vsub.f32 %v2850, %v3114
    %3116 = vmatmul.mubr.f32.gmra.mrb[0].mxu0 %v3115
    %v3117 = vpop.f32.mrb[0].mxu0
    %v3118 = vadd.f32 %v3032, %v3117
    %v3119 = vpop.f32.mrb[0].mxu0
    %3120 = vmatprep.mubr.f32.mxu0 0.0
    %v3121 = vand.u32 %v2853, 4294901760
    %v3122 = vsub.f32 %v2853, %v3121
    %3123 = vmatmul.mubr.f32.gmra.mrb[0].mxu0 %v3122
    %v3124 = vpop.f32.mrb[0].mxu0
    %v3125 = vadd.f32 %v3038, %v3124
    %v3126 = vpop.f32.mrb[0].mxu0
    %3127 = vdwg.mxu0
    %3128 = vmatprep.subr.mxu0 0.0
    %v3129 = vand.u32 %v2838, 4294901760
    %3130 = vmatpush1.msra.mxu0 %v3129
    %3131 = vmatprep.subr.mxu0 0.0
    %v3132 = vand.u32 %v2839, 4294901760
    %3133 = vmatpush1.msra.mxu0 %v3132
    %3134 = vmatprep.subr.mxu0 0.0
    %v3135 = vand.u32 %v2840, 4294901760
    %3136 = vmatpush1.msra.mxu0 %v3135
    %3137 = vmatprep.subr.mxu0 0.0
    %v3138 = vand.u32 %v2841, 4294901760
    %3139 = vmatpush1.msra.mxu0 %v3138
    %3140 = vmatprep.subr.mxu0 0.0
    %3141 = vmatpush1.msra.mxu0 0.0
    %3142 = vmatprep.subr.mxu0 0.0
    %3143 = vmatpush1.msra.mxu0 0.0
    %3144 = vmatprep.subr.mxu0 0.0
    %3145 = vmatpush1.msra.mxu0 0.0
    %3146 = vmatprep.subr.mxu0 0.0
    %3147 = vmatpush1.msra.mxu0 0.0
    %3148 = vmatprep.subr.mxu0 0.0
    %3149 = vmatpush1.msra.mxu0 0.0
    %3150 = vmatprep.subr.mxu0 0.0
    %3151 = vmatpush1.msra.mxu0 0.0
    %3152 = vmatprep.subr.mxu0 0.0
    %3153 = vmatpush1.msra.mxu0 0.0
    %3154 = vmatprep.subr.mxu0 0.0
    %3155 = vmatpush1.msra.mxu0 0.0
    %3156 = vmatprep.subr.mxu0 0.0
    %3157 = vmatpush1.msra.mxu0 0.0
    %3158 = vmatprep.subr.mxu0 0.0
    %3159 = vmatpush1.msra.mxu0 0.0
    %3160 = vmatprep.subr.mxu0 0.0
    %3161 = vmatpush1.msra.mxu0 0.0
    %3162 = vmatprep.subr.mxu0 0.0
    %3163 = vmatpush1.msra.mxu0 0.0
    %3164 = vmatprep.subr.mxu0 0.0
    %3165 = vmatpush1.msra.mxu0 0.0
    %3166 = vmatprep.subr.mxu0 0.0
    %3167 = vmatpush1.msra.mxu0 0.0
    %3168 = vmatprep.subr.mxu0 0.0
    %3169 = vmatpush1.msra.mxu0 0.0
    %3170 = vmatprep.subr.mxu0 0.0
    %3171 = vmatpush1.msra.mxu0 0.0
    %3172 = vmatprep.subr.mxu0 0.0
    %3173 = vmatpush1.msra.mxu0 0.0
    %3174 = vmatprep.subr.mxu0 0.0
    %3175 = vmatpush1.msra.mxu0 0.0
    %3176 = vmatprep.subr.mxu0 0.0
    %3177 = vmatpush1.msra.mxu0 0.0
    %3178 = vmatprep.subr.mxu0 0.0
    %3179 = vmatpush1.msra.mxu0 0.0
    %3180 = vmatprep.subr.mxu0 0.0
    %3181 = vmatpush1.msra.mxu0 0.0
    %3182 = vmatprep.subr.mxu0 0.0
    %3183 = vmatpush1.msra.mxu0 0.0
    %3184 = vmatprep.subr.mxu0 0.0
    %3185 = vmatpush1.msra.mxu0 0.0
    %3186 = vmatprep.subr.mxu0 0.0
    %3187 = vmatpush1.msra.mxu0 0.0
    %3188 = vmatprep.subr.mxu0 0.0
    %3189 = vmatpush1.msra.mxu0 0.0
    %3190 = vmatprep.subr.mxu0 0.0
    %3191 = vmatpush1.msra.mxu0 0.0
    %3192 = vmatprep.subr.mxu0 0.0
    %3193 = vmatpush1.msra.mxu0 0.0
    %3194 = vmatprep.subr.mxu0 0.0
    %3195 = vmatpush1.msra.mxu0 0.0
    %3196 = vmatprep.mubr.f32.mxu0 0.0
    %v3197 = vand.u32 %v2850, 4294901760
    %v3198 = vsub.f32 %v2850, %v3197
    %v3199 = vand.u32 %v3198, 4294901760
    %3200 = vmatmul.mubr.f32.gmra.mrb[0].mxu0 %v3199
    %v3201 = vpop.f32.mrb[0].mxu0
    %v3202 = vadd.f32 %v3118, %v3201
    %v3203 = vpop.f32.mrb[0].mxu0
    %3204 = vmatprep.mubr.f32.mxu0 0.0
    %v3205 = vand.u32 %v2853, 4294901760
    %v3206 = vsub.f32 %v2853, %v3205
    %v3207 = vand.u32 %v3206, 4294901760
    %3208 = vmatmul.mubr.f32.gmra.mrb[0].mxu0 %v3207
    %v3209 = vpop.f32.mrb[0].mxu0
    %v3210 = vadd.f32 %v3125, %v3209
    %v3211 = vpop.f32.mrb[0].mxu0
    %3212 = vdwg.mxu0
    %3213 = vmatprep.subr.mxu0 0.0
    %v3214 = vand.u32 %v2838, 4294901760
    %v3215 = vsub.f32 %v2838, %v3214
    %v3216 = vand.u32 %v3215, 4294901760
    %3217 = vmatpush1.msra.mxu0 %v3216
    %3218 = vmatprep.subr.mxu0 0.0
    %v3219 = vand.u32 %v2839, 4294901760
    %v3220 = vsub.f32 %v2839, %v3219
    %v3221 = vand.u32 %v3220, 4294901760
    %3222 = vmatpush1.msra.mxu0 %v3221
    %3223 = vmatprep.subr.mxu0 0.0
    %v3224 = vand.u32 %v2840, 4294901760
    %v3225 = vsub.f32 %v2840, %v3224
    %v3226 = vand.u32 %v3225, 4294901760
    %3227 = vmatpush1.msra.mxu0 %v3226
    %3228 = vmatprep.subr.mxu0 0.0
    %v3229 = vand.u32 %v2841, 4294901760
    %v3230 = vsub.f32 %v2841, %v3229
    %v3231 = vand.u32 %v3230, 4294901760
    %3232 = vmatpush1.msra.mxu0 %v3231
    %3233 = vmatprep.subr.mxu0 0.0
    %3234 = vmatpush1.msra.mxu0 0.0
    %3235 = vmatprep.subr.mxu0 0.0
    %3236 = vmatpush1.msra.mxu0 0.0
    %3237 = vmatprep.subr.mxu0 0.0
    %3238 = vmatpush1.msra.mxu0 0.0
    %3239 = vmatprep.subr.mxu0 0.0
    %3240 = vmatpush1.msra.mxu0 0.0
    %3241 = vmatprep.subr.mxu0 0.0
    %3242 = vmatpush1.msra.mxu0 0.0
    %3243 = vmatprep.subr.mxu0 0.0
    %3244 = vmatpush1.msra.mxu0 0.0
    %3245 = vmatprep.subr.mxu0 0.0
    %3246 = vmatpush1.msra.mxu0 0.0
    %3247 = vmatprep.subr.mxu0 0.0
    %3248 = vmatpush1.msra.mxu0 0.0
    %3249 = vmatprep.subr.mxu0 0.0
    %3250 = vmatpush1.msra.mxu0 0.0
    %3251 = vmatprep.subr.mxu0 0.0
    %3252 = vmatpush1.msra.mxu0 0.0
    %3253 = vmatprep.subr.mxu0 0.0
    %3254 = vmatpush1.msra.mxu0 0.0
    %3255 = vmatprep.subr.mxu0 0.0
    %3256 = vmatpush1.msra.mxu0 0.0
    %3257 = vmatprep.subr.mxu0 0.0
    %3258 = vmatpush1.msra.mxu0 0.0
    %3259 = vmatprep.subr.mxu0 0.0
    %3260 = vmatpush1.msra.mxu0 0.0
    %3261 = vmatprep.subr.mxu0 0.0
    %3262 = vmatpush1.msra.mxu0 0.0
    %3263 = vmatprep.subr.mxu0 0.0
    %3264 = vmatpush1.msra.mxu0 0.0
    %3265 = vmatprep.subr.mxu0 0.0
    %3266 = vmatpush1.msra.mxu0 0.0
    %3267 = vmatprep.subr.mxu0 0.0
    %3268 = vmatpush1.msra.mxu0 0.0
    %3269 = vmatprep.subr.mxu0 0.0
    %3270 = vmatpush1.msra.mxu0 0.0
    %3271 = vmatprep.subr.mxu0 0.0
    %3272 = vmatpush1.msra.mxu0 0.0
    %3273 = vmatprep.subr.mxu0 0.0
    %3274 = vmatpush1.msra.mxu0 0.0
    %3275 = vmatprep.subr.mxu0 0.0
    %3276 = vmatpush1.msra.mxu0 0.0
    %3277 = vmatprep.subr.mxu0 0.0
    %3278 = vmatpush1.msra.mxu0 0.0
    %3279 = vmatprep.subr.mxu0 0.0
    %3280 = vmatpush1.msra.mxu0 0.0
    %3281 = vmatprep.subr.mxu0 0.0
    %3282 = vmatpush1.msra.mxu0 0.0
    %3283 = vmatprep.subr.mxu0 0.0
    %3284 = vmatpush1.msra.mxu0 0.0
    %3285 = vmatprep.subr.mxu0 0.0
    %3286 = vmatpush1.msra.mxu0 0.0
    %3287 = vmatprep.subr.mxu0 0.0
    %3288 = vmatpush1.msra.mxu0 0.0
    %3289 = vmatprep.mubr.f32.mxu0 0.0
    %v3290 = vand.u32 %v2850, 4294901760
    %3291 = vmatmul.mubr.f32.gmra.mrb[0].mxu0 %v3290
    %v3292 = vpop.f32.mrb[0].mxu0
    %v3293 = vadd.f32 %v3202, %v3292
    %v3294 = vpop.f32.mrb[0].mxu0
    %3295 = vmatprep.mubr.f32.mxu0 0.0
    %v3296 = vand.u32 %v2853, 4294901760
    %3297 = vmatmul.mubr.f32.gmra.mrb[0].mxu0 %v3296
    %v3298 = vpop.f32.mrb[0].mxu0
    %v3299 = vadd.f32 %v3210, %v3298
    %v3300 = vpop.f32.mrb[0].mxu0
    %3301 = vdwg.mxu0
    %3302 = vmatprep.subr.mxu0 0.0
    %v3303 = vand.u32 %v2838, 4294901760
    %3304 = vmatpush1.msra.mxu0 %v3303
    %3305 = vmatprep.subr.mxu0 0.0
    %v3306 = vand.u32 %v2839, 4294901760
    %3307 = vmatpush1.msra.mxu0 %v3306
    %3308 = vmatprep.subr.mxu0 0.0
    %v3309 = vand.u32 %v2840, 4294901760
    %3310 = vmatpush1.msra.mxu0 %v3309
    %3311 = vmatprep.subr.mxu0 0.0
    %v3312 = vand.u32 %v2841, 4294901760
    %3313 = vmatpush1.msra.mxu0 %v3312
    %3314 = vmatprep.subr.mxu0 0.0
    %3315 = vmatpush1.msra.mxu0 0.0
    %3316 = vmatprep.subr.mxu0 0.0
    %3317 = vmatpush1.msra.mxu0 0.0
    %3318 = vmatprep.subr.mxu0 0.0
    %3319 = vmatpush1.msra.mxu0 0.0
    %3320 = vmatprep.subr.mxu0 0.0
    %3321 = vmatpush1.msra.mxu0 0.0
    %3322 = vmatprep.subr.mxu0 0.0
    %3323 = vmatpush1.msra.mxu0 0.0
    %3324 = vmatprep.subr.mxu0 0.0
    %3325 = vmatpush1.msra.mxu0 0.0
    %3326 = vmatprep.subr.mxu0 0.0
    %3327 = vmatpush1.msra.mxu0 0.0
    %3328 = vmatprep.subr.mxu0 0.0
    %3329 = vmatpush1.msra.mxu0 0.0
    %3330 = vmatprep.subr.mxu0 0.0
    %3331 = vmatpush1.msra.mxu0 0.0
    %3332 = vmatprep.subr.mxu0 0.0
    %3333 = vmatpush1.msra.mxu0 0.0
    %3334 = vmatprep.subr.mxu0 0.0
    %3335 = vmatpush1.msra.mxu0 0.0
    %3336 = vmatprep.subr.mxu0 0.0
    %3337 = vmatpush1.msra.mxu0 0.0
    %3338 = vmatprep.subr.mxu0 0.0
    %3339 = vmatpush1.msra.mxu0 0.0
    %3340 = vmatprep.subr.mxu0 0.0
    %3341 = vmatpush1.msra.mxu0 0.0
    %3342 = vmatprep.subr.mxu0 0.0
    %3343 = vmatpush1.msra.mxu0 0.0
    %3344 = vmatprep.subr.mxu0 0.0
    %3345 = vmatpush1.msra.mxu0 0.0
    %3346 = vmatprep.subr.mxu0 0.0
    %3347 = vmatpush1.msra.mxu0 0.0
    %3348 = vmatprep.subr.mxu0 0.0
    %3349 = vmatpush1.msra.mxu0 0.0
    %3350 = vmatprep.subr.mxu0 0.0
    %3351 = vmatpush1.msra.mxu0 0.0
    %3352 = vmatprep.subr.mxu0 0.0
    %3353 = vmatpush1.msra.mxu0 0.0
    %3354 = vmatprep.subr.mxu0 0.0
    %3355 = vmatpush1.msra.mxu0 0.0
    %3356 = vmatprep.subr.mxu0 0.0
    %3357 = vmatpush1.msra.mxu0 0.0
    %3358 = vmatprep.subr.mxu0 0.0
    %3359 = vmatpush1.msra.mxu0 0.0
    %3360 = vmatprep.subr.mxu0 0.0
    %3361 = vmatpush1.msra.mxu0 0.0
    %3362 = vmatprep.subr.mxu0 0.0
    %3363 = vmatpush1.msra.mxu0 0.0
    %3364 = vmatprep.subr.mxu0 0.0
    %3365 = vmatpush1.msra.mxu0 0.0
    %3366 = vmatprep.subr.mxu0 0.0
    %3367 = vmatpush1.msra.mxu0 0.0
    %3368 = vmatprep.subr.mxu0 0.0
    %3369 = vmatpush1.msra.mxu0 0.0
    %3370 = vmatprep.mubr.f32.mxu0 0.0
    %v3371 = vand.u32 %v2850, 4294901760
    %3372 = vmatmul.mubr.f32.gmra.mrb[0].mxu0 %v3371
    %v3373 = vpop.f32.mrb[0].mxu0
    %v3374 = vadd.f32 %v3293, %v3373
    %v3375 = vpop.f32.mrb[0].mxu0
    %3376 = vmatprep.mubr.f32.mxu0 0.0
    %v3377 = vand.u32 %v2853, 4294901760
    %3378 = vmatmul.mubr.f32.gmra.mrb[0].mxu0 %v3377
    %v3379 = vpop.f32.mrb[0].mxu0
    %v3380 = vadd.f32 %v3299, %v3379
    %v3381 = vpop.f32.mrb[0].mxu0
    %3382 = vdwg.mxu0
    %vm3383 = vcmp.gt.f32.partialorder %v3374, 0.0
    %vm3384 = vcmp.gt.f32.partialorder %v3380, 0.0
    %v3385 = vmul.f32 %v3374, 0.01
    %v3386 = vmul.f32 %v3380, 0.01
    %v3387 = vsel %vm3383, %v3374, %v3385
    %v3388 = vsel %vm3384, %v3380, %v3386
    %v3389 = vld [vmem:[%s1169] sm:$0xff]
    %v3390 = vld [vmem:[%s1169 + $0x8] sm:$0xff]
    %v3391 = vld [vmem:[%s1169 + $0x10] sm:$0xff]
    %v3392 = vld [vmem:[%s1169 + $0x18] sm:$0xff]
    %3393 = vmatprep.subr.mxu0 0.0
    %v3394 = vand.u32 %v3389, 4294901760
    %3395 = vmatpush1.msra.mxu0 %v3394
    %3396 = vmatprep.subr.mxu0 0.0
    %v3397 = vand.u32 %v3390, 4294901760
    %3398 = vmatpush1.msra.mxu0 %v3397
    %3399 = vmatprep.subr.mxu0 0.0
    %v3400 = vand.u32 %v3391, 4294901760
    %3401 = vmatpush1.msra.mxu0 %v3400
    %3402 = vmatprep.subr.mxu0 0.0
    %v3403 = vand.u32 %v3392, 4294901760
    %3404 = vmatpush1.msra.mxu0 %v3403
    %3405 = vmatprep.subr.mxu0 0.0
    %3406 = vmatpush1.msra.mxu0 0.0
    %3407 = vmatprep.subr.mxu0 0.0
    %3408 = vmatpush1.msra.mxu0 0.0
    %3409 = vmatprep.subr.mxu0 0.0
    %3410 = vmatpush1.msra.mxu0 0.0
    %3411 = vmatprep.subr.mxu0 0.0
    %3412 = vmatpush1.msra.mxu0 0.0
    %3413 = vmatprep.subr.mxu0 0.0
    %3414 = vmatpush1.msra.mxu0 0.0
    %3415 = vmatprep.subr.mxu0 0.0
    %3416 = vmatpush1.msra.mxu0 0.0
    %3417 = vmatprep.subr.mxu0 0.0
    %3418 = vmatpush1.msra.mxu0 0.0
    %3419 = vmatprep.subr.mxu0 0.0
    %3420 = vmatpush1.msra.mxu0 0.0
    %3421 = vmatprep.subr.mxu0 0.0
    %3422 = vmatpush1.msra.mxu0 0.0
    %3423 = vmatprep.subr.mxu0 0.0
    %3424 = vmatpush1.msra.mxu0 0.0
    %3425 = vmatprep.subr.mxu0 0.0
    %3426 = vmatpush1.msra.mxu0 0.0
    %3427 = vmatprep.subr.mxu0 0.0
    %3428 = vmatpush1.msra.mxu0 0.0
    %3429 = vmatprep.subr.mxu0 0.0
    %3430 = vmatpush1.msra.mxu0 0.0
    %3431 = vmatprep.subr.mxu0 0.0
    %3432 = vmatpush1.msra.mxu0 0.0
    %3433 = vmatprep.subr.mxu0 0.0
    %3434 = vmatpush1.msra.mxu0 0.0
    %3435 = vmatprep.subr.mxu0 0.0
    %3436 = vmatpush1.msra.mxu0 0.0
    %3437 = vmatprep.subr.mxu0 0.0
    %3438 = vmatpush1.msra.mxu0 0.0
    %3439 = vmatprep.subr.mxu0 0.0
    %3440 = vmatpush1.msra.mxu0 0.0
    %3441 = vmatprep.subr.mxu0 0.0
    %3442 = vmatpush1.msra.mxu0 0.0
    %3443 = vmatprep.subr.mxu0 0.0
    %3444 = vmatpush1.msra.mxu0 0.0
    %3445 = vmatprep.subr.mxu0 0.0
    %3446 = vmatpush1.msra.mxu0 0.0
    %3447 = vmatprep.subr.mxu0 0.0
    %3448 = vmatpush1.msra.mxu0 0.0
    %3449 = vmatprep.subr.mxu0 0.0
    %3450 = vmatpush1.msra.mxu0 0.0
    %3451 = vmatprep.subr.mxu0 0.0
    %3452 = vmatpush1.msra.mxu0 0.0
    %3453 = vmatprep.subr.mxu0 0.0
    %3454 = vmatpush1.msra.mxu0 0.0
    %3455 = vmatprep.subr.mxu0 0.0
    %3456 = vmatpush1.msra.mxu0 0.0
    %3457 = vmatprep.subr.mxu0 0.0
    %3458 = vmatpush1.msra.mxu0 0.0
    %3459 = vmatprep.subr.mxu0 0.0
    %3460 = vmatpush1.msra.mxu0 0.0
    %3461 = vmatprep.mubr.f32.mxu0 0.0
    %v3462 = vand.u32 %v2299, 4294901760
    %v3463 = vsub.f32 %v2299, %v3462
    %v3464 = vand.u32 %v3463, 4294901760
    %v3465 = vsub.f32 %v3463, %v3464
    %v3466 = vand.u32 %v3465, 4294901760
    %3467 = vmatmul.mubr.f32.gmra.mrb[0].mxu0 %v3466
    %v3468 = vpop.f32.mrb[0].mxu0
    %v3469 = vadd.f32 0.0, %v3468
    %v3470 = vpop.f32.mrb[0].mxu0
    %3471 = vmatprep.mubr.f32.mxu0 0.0
    %v3472 = vand.u32 %v2302, 4294901760
    %v3473 = vsub.f32 %v2302, %v3472
    %v3474 = vand.u32 %v3473, 4294901760
    %v3475 = vsub.f32 %v3473, %v3474
    %v3476 = vand.u32 %v3475, 4294901760
    %3477 = vmatmul.mubr.f32.gmra.mrb[0].mxu0 %v3476
    %v3478 = vpop.f32.mrb[0].mxu0
    %v3479 = vadd.f32 0.0, %v3478
    %v3480 = vpop.f32.mrb[0].mxu0
    %3481 = vdwg.mxu0
    %3482 = vmatprep.subr.mxu0 0.0
    %v3483 = vand.u32 %v3389, 4294901760
    %v3484 = vsub.f32 %v3389, %v3483
    %v3485 = vand.u32 %v3484, 4294901760
    %v3486 = vsub.f32 %v3484, %v3485
    %v3487 = vand.u32 %v3486, 4294901760
    %3488 = vmatpush1.msra.mxu0 %v3487
    %3489 = vmatprep.subr.mxu0 0.0
    %v3490 = vand.u32 %v3390, 4294901760
    %v3491 = vsub.f32 %v3390, %v3490
    %v3492 = vand.u32 %v3491, 4294901760
    %v3493 = vsub.f32 %v3491, %v3492
    %v3494 = vand.u32 %v3493, 4294901760
    %3495 = vmatpush1.msra.mxu0 %v3494
    %3496 = vmatprep.subr.mxu0 0.0
    %v3497 = vand.u32 %v3391, 4294901760
    %v3498 = vsub.f32 %v3391, %v3497
    %v3499 = vand.u32 %v3498, 4294901760
    %v3500 = vsub.f32 %v3498, %v3499
    %v3501 = vand.u32 %v3500, 4294901760
    %3502 = vmatpush1.msra.mxu0 %v3501
    %3503 = vmatprep.subr.mxu0 0.0
    %v3504 = vand.u32 %v3392, 4294901760
    %v3505 = vsub.f32 %v3392, %v3504
    %v3506 = vand.u32 %v3505, 4294901760
    %v3507 = vsub.f32 %v3505, %v3506
    %v3508 = vand.u32 %v3507, 4294901760
    %3509 = vmatpush1.msra.mxu0 %v3508
    %3510 = vmatprep.subr.mxu0 0.0
    %3511 = vmatpush1.msra.mxu0 0.0
    %3512 = vmatprep.subr.mxu0 0.0
    %3513 = vmatpush1.msra.mxu0 0.0
    %3514 = vmatprep.subr.mxu0 0.0
    %3515 = vmatpush1.msra.mxu0 0.0
    %3516 = vmatprep.subr.mxu0 0.0
    %3517 = vmatpush1.msra.mxu0 0.0
    %3518 = vmatprep.subr.mxu0 0.0
    %3519 = vmatpush1.msra.mxu0 0.0
    %3520 = vmatprep.subr.mxu0 0.0
    %3521 = vmatpush1.msra.mxu0 0.0
    %3522 = vmatprep.subr.mxu0 0.0
    %3523 = vmatpush1.msra.mxu0 0.0
    %3524 = vmatprep.subr.mxu0 0.0
    %3525 = vmatpush1.msra.mxu0 0.0
    %3526 = vmatprep.subr.mxu0 0.0
    %3527 = vmatpush1.msra.mxu0 0.0
    %3528 = vmatprep.subr.mxu0 0.0
    %3529 = vmatpush1.msra.mxu0 0.0
    %3530 = vmatprep.subr.mxu0 0.0
    %3531 = vmatpush1.msra.mxu0 0.0
    %3532 = vmatprep.subr.mxu0 0.0
    %3533 = vmatpush1.msra.mxu0 0.0
    %3534 = vmatprep.subr.mxu0 0.0
    %3535 = vmatpush1.msra.mxu0 0.0
    %3536 = vmatprep.subr.mxu0 0.0
    %3537 = vmatpush1.msra.mxu0 0.0
    %3538 = vmatprep.subr.mxu0 0.0
    %3539 = vmatpush1.msra.mxu0 0.0
    %3540 = vmatprep.subr.mxu0 0.0
    %3541 = vmatpush1.msra.mxu0 0.0
    %3542 = vmatprep.subr.mxu0 0.0
    %3543 = vmatpush1.msra.mxu0 0.0
    %3544 = vmatprep.subr.mxu0 0.0
    %3545 = vmatpush1.msra.mxu0 0.0
    %3546 = vmatprep.subr.mxu0 0.0
    %3547 = vmatpush1.msra.mxu0 0.0
    %3548 = vmatprep.subr.mxu0 0.0
    %3549 = vmatpush1.msra.mxu0 0.0
    %3550 = vmatprep.subr.mxu0 0.0
    %3551 = vmatpush1.msra.mxu0 0.0
    %3552 = vmatprep.subr.mxu0 0.0
    %3553 = vmatpush1.msra.mxu0 0.0
    %3554 = vmatprep.subr.mxu0 0.0
    %3555 = vmatpush1.msra.mxu0 0.0
    %3556 = vmatprep.subr.mxu0 0.0
    %3557 = vmatpush1.msra.mxu0 0.0
    %3558 = vmatprep.subr.mxu0 0.0
    %3559 = vmatpush1.msra.mxu0 0.0
    %3560 = vmatprep.subr.mxu0 0.0
    %3561 = vmatpush1.msra.mxu0 0.0
    %3562 = vmatprep.subr.mxu0 0.0
    %3563 = vmatpush1.msra.mxu0 0.0
    %3564 = vmatprep.subr.mxu0 0.0
    %3565 = vmatpush1.msra.mxu0 0.0
    %3566 = vmatprep.mubr.f32.mxu0 0.0
    %v3567 = vand.u32 %v2299, 4294901760
    %3568 = vmatmul.mubr.f32.gmra.mrb[0].mxu0 %v3567
    %v3569 = vpop.f32.mrb[0].mxu0
    %v3570 = vadd.f32 %v3469, %v3569
    %v3571 = vpop.f32.mrb[0].mxu0
    %3572 = vmatprep.mubr.f32.mxu0 0.0
    %v3573 = vand.u32 %v2302, 4294901760
    %3574 = vmatmul.mubr.f32.gmra.mrb[0].mxu0 %v3573
    %v3575 = vpop.f32.mrb[0].mxu0
    %v3576 = vadd.f32 %v3479, %v3575
    %v3577 = vpop.f32.mrb[0].mxu0
    %3578 = vdwg.mxu0
    %3579 = vmatprep.subr.mxu0 0.0
    %v3580 = vand.u32 %v3389, 4294901760
    %v3581 = vsub.f32 %v3389, %v3580
    %3582 = vmatpush1.msra.mxu0 %v3581
    %3583 = vmatprep.subr.mxu0 0.0
    %v3584 = vand.u32 %v3390, 4294901760
    %v3585 = vsub.f32 %v3390, %v3584
    %3586 = vmatpush1.msra.mxu0 %v3585
    %3587 = vmatprep.subr.mxu0 0.0
    %v3588 = vand.u32 %v3391, 4294901760
    %v3589 = vsub.f32 %v3391, %v3588
    %3590 = vmatpush1.msra.mxu0 %v3589
    %3591 = vmatprep.subr.mxu0 0.0
    %v3592 = vand.u32 %v3392, 4294901760
    %v3593 = vsub.f32 %v3392, %v3592
    %3594 = vmatpush1.msra.mxu0 %v3593
    %3595 = vmatprep.subr.mxu0 0.0
    %3596 = vmatpush1.msra.mxu0 0.0
    %3597 = vmatprep.subr.mxu0 0.0
    %3598 = vmatpush1.msra.mxu0 0.0
    %3599 = vmatprep.subr.mxu0 0.0
    %3600 = vmatpush1.msra.mxu0 0.0
    %3601 = vmatprep.subr.mxu0 0.0
    %3602 = vmatpush1.msra.mxu0 0.0
    %3603 = vmatprep.subr.mxu0 0.0
    %3604 = vmatpush1.msra.mxu0 0.0
    %3605 = vmatprep.subr.mxu0 0.0
    %3606 = vmatpush1.msra.mxu0 0.0
    %3607 = vmatprep.subr.mxu0 0.0
    %3608 = vmatpush1.msra.mxu0 0.0
    %3609 = vmatprep.subr.mxu0 0.0
    %3610 = vmatpush1.msra.mxu0 0.0
    %3611 = vmatprep.subr.mxu0 0.0
    %3612 = vmatpush1.msra.mxu0 0.0
    %3613 = vmatprep.subr.mxu0 0.0
    %3614 = vmatpush1.msra.mxu0 0.0
    %3615 = vmatprep.subr.mxu0 0.0
    %3616 = vmatpush1.msra.mxu0 0.0
    %3617 = vmatprep.subr.mxu0 0.0
    %3618 = vmatpush1.msra.mxu0 0.0
    %3619 = vmatprep.subr.mxu0 0.0
    %3620 = vmatpush1.msra.mxu0 0.0
    %3621 = vmatprep.subr.mxu0 0.0
    %3622 = vmatpush1.msra.mxu0 0.0
    %3623 = vmatprep.subr.mxu0 0.0
    %3624 = vmatpush1.msra.mxu0 0.0
    %3625 = vmatprep.subr.mxu0 0.0
    %3626 = vmatpush1.msra.mxu0 0.0
    %3627 = vmatprep.subr.mxu0 0.0
    %3628 = vmatpush1.msra.mxu0 0.0
    %3629 = vmatprep.subr.mxu0 0.0
    %3630 = vmatpush1.msra.mxu0 0.0
    %3631 = vmatprep.subr.mxu0 0.0
    %3632 = vmatpush1.msra.mxu0 0.0
    %3633 = vmatprep.subr.mxu0 0.0
    %3634 = vmatpush1.msra.mxu0 0.0
    %3635 = vmatprep.subr.mxu0 0.0
    %3636 = vmatpush1.msra.mxu0 0.0
    %3637 = vmatprep.subr.mxu0 0.0
    %3638 = vmatpush1.msra.mxu0 0.0
    %3639 = vmatprep.subr.mxu0 0.0
    %3640 = vmatpush1.msra.mxu0 0.0
    %3641 = vmatprep.subr.mxu0 0.0
    %3642 = vmatpush1.msra.mxu0 0.0
    %3643 = vmatprep.subr.mxu0 0.0
    %3644 = vmatpush1.msra.mxu0 0.0
    %3645 = vmatprep.subr.mxu0 0.0
    %3646 = vmatpush1.msra.mxu0 0.0
    %3647 = vmatprep.subr.mxu0 0.0
    %3648 = vmatpush1.msra.mxu0 0.0
    %3649 = vmatprep.subr.mxu0 0.0
    %3650 = vmatpush1.msra.mxu0 0.0
    %3651 = vmatprep.mubr.f32.mxu0 0.0
    %v3652 = vand.u32 %v2299, 4294901760
    %v3653 = vsub.f32 %v2299, %v3652
    %3654 = vmatmul.mubr.f32.gmra.mrb[0].mxu0 %v3653
    %v3655 = vpop.f32.mrb[0].mxu0
    %v3656 = vadd.f32 %v3570, %v3655
    %v3657 = vpop.f32.mrb[0].mxu0
    %3658 = vmatprep.mubr.f32.mxu0 0.0
    %v3659 = vand.u32 %v2302, 4294901760
    %v3660 = vsub.f32 %v2302, %v3659
    %3661 = vmatmul.mubr.f32.gmra.mrb[0].mxu0 %v3660
    %v3662 = vpop.f32.mrb[0].mxu0
    %v3663 = vadd.f32 %v3576, %v3662
    %v3664 = vpop.f32.mrb[0].mxu0
    %3665 = vdwg.mxu0
    %3666 = vmatprep.subr.mxu0 0.0
    %v3667 = vand.u32 %v3389, 4294901760
    %3668 = vmatpush1.msra.mxu0 %v3667
    %3669 = vmatprep.subr.mxu0 0.0
    %v3670 = vand.u32 %v3390, 4294901760
    %3671 = vmatpush1.msra.mxu0 %v3670
    %3672 = vmatprep.subr.mxu0 0.0
    %v3673 = vand.u32 %v3391, 4294901760
    %3674 = vmatpush1.msra.mxu0 %v3673
    %3675 = vmatprep.subr.mxu0 0.0
    %v3676 = vand.u32 %v3392, 4294901760
    %3677 = vmatpush1.msra.mxu0 %v3676
    %3678 = vmatprep.subr.mxu0 0.0
    %3679 = vmatpush1.msra.mxu0 0.0
    %3680 = vmatprep.subr.mxu0 0.0
    %3681 = vmatpush1.msra.mxu0 0.0
    %3682 = vmatprep.subr.mxu0 0.0
    %3683 = vmatpush1.msra.mxu0 0.0
    %3684 = vmatprep.subr.mxu0 0.0
    %3685 = vmatpush1.msra.mxu0 0.0
    %3686 = vmatprep.subr.mxu0 0.0
    %3687 = vmatpush1.msra.mxu0 0.0
    %3688 = vmatprep.subr.mxu0 0.0
    %3689 = vmatpush1.msra.mxu0 0.0
    %3690 = vmatprep.subr.mxu0 0.0
    %3691 = vmatpush1.msra.mxu0 0.0
    %3692 = vmatprep.subr.mxu0 0.0
    %3693 = vmatpush1.msra.mxu0 0.0
    %3694 = vmatprep.subr.mxu0 0.0
    %3695 = vmatpush1.msra.mxu0 0.0
    %3696 = vmatprep.subr.mxu0 0.0
    %3697 = vmatpush1.msra.mxu0 0.0
    %3698 = vmatprep.subr.mxu0 0.0
    %3699 = vmatpush1.msra.mxu0 0.0
    %3700 = vmatprep.subr.mxu0 0.0
    %3701 = vmatpush1.msra.mxu0 0.0
    %3702 = vmatprep.subr.mxu0 0.0
    %3703 = vmatpush1.msra.mxu0 0.0
    %3704 = vmatprep.subr.mxu0 0.0
    %3705 = vmatpush1.msra.mxu0 0.0
    %3706 = vmatprep.subr.mxu0 0.0
    %3707 = vmatpush1.msra.mxu0 0.0
    %3708 = vmatprep.subr.mxu0 0.0
    %3709 = vmatpush1.msra.mxu0 0.0
    %3710 = vmatprep.subr.mxu0 0.0
    %3711 = vmatpush1.msra.mxu0 0.0
    %3712 = vmatprep.subr.mxu0 0.0
    %3713 = vmatpush1.msra.mxu0 0.0
    %3714 = vmatprep.subr.mxu0 0.0
    %3715 = vmatpush1.msra.mxu0 0.0
    %3716 = vmatprep.subr.mxu0 0.0
    %3717 = vmatpush1.msra.mxu0 0.0
    %3718 = vmatprep.subr.mxu0 0.0
    %3719 = vmatpush1.msra.mxu0 0.0
    %3720 = vmatprep.subr.mxu0 0.0
    %3721 = vmatpush1.msra.mxu0 0.0
    %3722 = vmatprep.subr.mxu0 0.0
    %3723 = vmatpush1.msra.mxu0 0.0
    %3724 = vmatprep.subr.mxu0 0.0
    %3725 = vmatpush1.msra.mxu0 0.0
    %3726 = vmatprep.subr.mxu0 0.0
    %3727 = vmatpush1.msra.mxu0 0.0
    %3728 = vmatprep.subr.mxu0 0.0
    %3729 = vmatpush1.msra.mxu0 0.0
    %3730 = vmatprep.subr.mxu0 0.0
    %3731 = vmatpush1.msra.mxu0 0.0
    %3732 = vmatprep.subr.mxu0 0.0
    %3733 = vmatpush1.msra.mxu0 0.0
    %3734 = vmatprep.mubr.f32.mxu0 0.0
    %v3735 = vand.u32 %v2299, 4294901760
    %v3736 = vsub.f32 %v2299, %v3735
    %v3737 = vand.u32 %v3736, 4294901760
    %3738 = vmatmul.mubr.f32.gmra.mrb[0].mxu0 %v3737
    %v3739 = vpop.f32.mrb[0].mxu0
    %v3740 = vadd.f32 %v3656, %v3739
    %v3741 = vpop.f32.mrb[0].mxu0
    %3742 = vmatprep.mubr.f32.mxu0 0.0
    %v3743 = vand.u32 %v2302, 4294901760
    %v3744 = vsub.f32 %v2302, %v3743
    %v3745 = vand.u32 %v3744, 4294901760
    %3746 = vmatmul.mubr.f32.gmra.mrb[0].mxu0 %v3745
    %v3747 = vpop.f32.mrb[0].mxu0
    %v3748 = vadd.f32 %v3663, %v3747
    %v3749 = vpop.f32.mrb[0].mxu0
    %3750 = vdwg.mxu0
    %3751 = vmatprep.subr.mxu0 0.0
    %v3752 = vand.u32 %v3389, 4294901760
    %v3753 = vsub.f32 %v3389, %v3752
    %v3754 = vand.u32 %v3753, 4294901760
    %3755 = vmatpush1.msra.mxu0 %v3754
    %3756 = vmatprep.subr.mxu0 0.0
    %v3757 = vand.u32 %v3390, 4294901760
    %v3758 = vsub.f32 %v3390, %v3757
    %v3759 = vand.u32 %v3758, 4294901760
    %3760 = vmatpush1.msra.mxu0 %v3759
    %3761 = vmatprep.subr.mxu0 0.0
    %v3762 = vand.u32 %v3391, 4294901760
    %v3763 = vsub.f32 %v3391, %v3762
    %v3764 = vand.u32 %v3763, 4294901760
    %3765 = vmatpush1.msra.mxu0 %v3764
    %3766 = vmatprep.subr.mxu0 0.0
    %v3767 = vand.u32 %v3392, 4294901760
    %v3768 = vsub.f32 %v3392, %v3767
    %v3769 = vand.u32 %v3768, 4294901760
    %3770 = vmatpush1.msra.mxu0 %v3769
    %3771 = vmatprep.subr.mxu0 0.0
    %3772 = vmatpush1.msra.mxu0 0.0
    %3773 = vmatprep.subr.mxu0 0.0
    %3774 = vmatpush1.msra.mxu0 0.0
    %3775 = vmatprep.subr.mxu0 0.0
    %3776 = vmatpush1.msra.mxu0 0.0
    %3777 = vmatprep.subr.mxu0 0.0
    %3778 = vmatpush1.msra.mxu0 0.0
    %3779 = vmatprep.subr.mxu0 0.0
    %3780 = vmatpush1.msra.mxu0 0.0
    %3781 = vmatprep.subr.mxu0 0.0
    %3782 = vmatpush1.msra.mxu0 0.0
    %3783 = vmatprep.subr.mxu0 0.0
    %3784 = vmatpush1.msra.mxu0 0.0
    %3785 = vmatprep.subr.mxu0 0.0
    %3786 = vmatpush1.msra.mxu0 0.0
    %3787 = vmatprep.subr.mxu0 0.0
    %3788 = vmatpush1.msra.mxu0 0.0
    %3789 = vmatprep.subr.mxu0 0.0
    %3790 = vmatpush1.msra.mxu0 0.0
    %3791 = vmatprep.subr.mxu0 0.0
    %3792 = vmatpush1.msra.mxu0 0.0
    %3793 = vmatprep.subr.mxu0 0.0
    %3794 = vmatpush1.msra.mxu0 0.0
    %3795 = vmatprep.subr.mxu0 0.0
    %3796 = vmatpush1.msra.mxu0 0.0
    %3797 = vmatprep.subr.mxu0 0.0
    %3798 = vmatpush1.msra.mxu0 0.0
    %3799 = vmatprep.subr.mxu0 0.0
    %3800 = vmatpush1.msra.mxu0 0.0
    %3801 = vmatprep.subr.mxu0 0.0
    %3802 = vmatpush1.msra.mxu0 0.0
    %3803 = vmatprep.subr.mxu0 0.0
    %3804 = vmatpush1.msra.mxu0 0.0
    %3805 = vmatprep.subr.mxu0 0.0
    %3806 = vmatpush1.msra.mxu0 0.0
    %3807 = vmatprep.subr.mxu0 0.0
    %3808 = vmatpush1.msra.mxu0 0.0
    %3809 = vmatprep.subr.mxu0 0.0
    %3810 = vmatpush1.msra.mxu0 0.0
    %3811 = vmatprep.subr.mxu0 0.0
    %3812 = vmatpush1.msra.mxu0 0.0
    %3813 = vmatprep.subr.mxu0 0.0
    %3814 = vmatpush1.msra.mxu0 0.0
    %3815 = vmatprep.subr.mxu0 0.0
    %3816 = vmatpush1.msra.mxu0 0.0
    %3817 = vmatprep.subr.mxu0 0.0
    %3818 = vmatpush1.msra.mxu0 0.0
    %3819 = vmatprep.subr.mxu0 0.0
    %3820 = vmatpush1.msra.mxu0 0.0
    %3821 = vmatprep.subr.mxu0 0.0
    %3822 = vmatpush1.msra.mxu0 0.0
    %3823 = vmatprep.subr.mxu0 0.0
    %3824 = vmatpush1.msra.mxu0 0.0
    %3825 = vmatprep.subr.mxu0 0.0
    %3826 = vmatpush1.msra.mxu0 0.0
    %3827 = vmatprep.mubr.f32.mxu0 0.0
    %v3828 = vand.u32 %v2299, 4294901760
    %3829 = vmatmul.mubr.f32.gmra.mrb[0].mxu0 %v3828
    %v3830 = vpop.f32.mrb[0].mxu0
    %v3831 = vadd.f32 %v3740, %v3830
    %v3832 = vpop.f32.mrb[0].mxu0
    %3833 = vmatprep.mubr.f32.mxu0 0.0
    %v3834 = vand.u32 %v2302, 4294901760
    %3835 = vmatmul.mubr.f32.gmra.mrb[0].mxu0 %v3834
    %v3836 = vpop.f32.mrb[0].mxu0
    %v3837 = vadd.f32 %v3748, %v3836
    %v3838 = vpop.f32.mrb[0].mxu0
    %3839 = vdwg.mxu0
    %3840 = vmatprep.subr.mxu0 0.0
    %v3841 = vand.u32 %v3389, 4294901760
    %3842 = vmatpush1.msra.mxu0 %v3841
    %3843 = vmatprep.subr.mxu0 0.0
    %v3844 = vand.u32 %v3390, 4294901760
    %3845 = vmatpush1.msra.mxu0 %v3844
    %3846 = vmatprep.subr.mxu0 0.0
    %v3847 = vand.u32 %v3391, 4294901760
    %3848 = vmatpush1.msra.mxu0 %v3847
    %3849 = vmatprep.subr.mxu0 0.0
    %v3850 = vand.u32 %v3392, 4294901760
    %3851 = vmatpush1.msra.mxu0 %v3850
    %3852 = vmatprep.subr.mxu0 0.0
    %3853 = vmatpush1.msra.mxu0 0.0
    %3854 = vmatprep.subr.mxu0 0.0
    %3855 = vmatpush1.msra.mxu0 0.0
    %3856 = vmatprep.subr.mxu0 0.0
    %3857 = vmatpush1.msra.mxu0 0.0
    %3858 = vmatprep.subr.mxu0 0.0
    %3859 = vmatpush1.msra.mxu0 0.0
    %3860 = vmatprep.subr.mxu0 0.0
    %3861 = vmatpush1.msra.mxu0 0.0
    %3862 = vmatprep.subr.mxu0 0.0
    %3863 = vmatpush1.msra.mxu0 0.0
    %3864 = vmatprep.subr.mxu0 0.0
    %3865 = vmatpush1.msra.mxu0 0.0
    %3866 = vmatprep.subr.mxu0 0.0
    %3867 = vmatpush1.msra.mxu0 0.0
    %3868 = vmatprep.subr.mxu0 0.0
    %3869 = vmatpush1.msra.mxu0 0.0
    %3870 = vmatprep.subr.mxu0 0.0
    %3871 = vmatpush1.msra.mxu0 0.0
    %3872 = vmatprep.subr.mxu0 0.0
    %3873 = vmatpush1.msra.mxu0 0.0
    %3874 = vmatprep.subr.mxu0 0.0
    %3875 = vmatpush1.msra.mxu0 0.0
    %3876 = vmatprep.subr.mxu0 0.0
    %3877 = vmatpush1.msra.mxu0 0.0
    %3878 = vmatprep.subr.mxu0 0.0
    %3879 = vmatpush1.msra.mxu0 0.0
    %3880 = vmatprep.subr.mxu0 0.0
    %3881 = vmatpush1.msra.mxu0 0.0
    %3882 = vmatprep.subr.mxu0 0.0
    %3883 = vmatpush1.msra.mxu0 0.0
    %3884 = vmatprep.subr.mxu0 0.0
    %3885 = vmatpush1.msra.mxu0 0.0
    %3886 = vmatprep.subr.mxu0 0.0
    %3887 = vmatpush1.msra.mxu0 0.0
    %3888 = vmatprep.subr.mxu0 0.0
    %3889 = vmatpush1.msra.mxu0 0.0
    %3890 = vmatprep.subr.mxu0 0.0
    %3891 = vmatpush1.msra.mxu0 0.0
    %3892 = vmatprep.subr.mxu0 0.0
    %3893 = vmatpush1.msra.mxu0 0.0
    %3894 = vmatprep.subr.mxu0 0.0
    %3895 = vmatpush1.msra.mxu0 0.0
    %3896 = vmatprep.subr.mxu0 0.0
    %3897 = vmatpush1.msra.mxu0 0.0
    %3898 = vmatprep.subr.mxu0 0.0
    %3899 = vmatpush1.msra.mxu0 0.0
    %3900 = vmatprep.subr.mxu0 0.0
    %3901 = vmatpush1.msra.mxu0 0.0
    %3902 = vmatprep.subr.mxu0 0.0
    %3903 = vmatpush1.msra.mxu0 0.0
    %3904 = vmatprep.subr.mxu0 0.0
    %3905 = vmatpush1.msra.mxu0 0.0
    %3906 = vmatprep.subr.mxu0 0.0
    %3907 = vmatpush1.msra.mxu0 0.0
    %3908 = vmatprep.mubr.f32.mxu0 0.0
    %v3909 = vand.u32 %v2299, 4294901760
    %3910 = vmatmul.mubr.f32.gmra.mrb[0].mxu0 %v3909
    %v3911 = vpop.f32.mrb[0].mxu0
    %v3912 = vadd.f32 %v3831, %v3911
    %v3913 = vpop.f32.mrb[0].mxu0
    %3914 = vmatprep.mubr.f32.mxu0 0.0
    %v3915 = vand.u32 %v2302, 4294901760
    %3916 = vmatmul.mubr.f32.gmra.mrb[0].mxu0 %v3915
    %v3917 = vpop.f32.mrb[0].mxu0
    %v3918 = vadd.f32 %v3837, %v3917
    %v3919 = vpop.f32.mrb[0].mxu0
    %3920 = vdwg.mxu0
    %v3922 = vsel %vm75, %v3387, 0
    %v3925 = vsel %vm75, %v3388, 0
    %3927 = vmatprep.subr.mxu0 0.0
    %v3928 = vand.u32 %v3389, 4294901760
    %3929 = vmatpush1.msra.mxu0 %v3928
    %3930 = vmatprep.subr.mxu0 0.0
    %v3931 = vand.u32 %v3390, 4294901760
    %3932 = vmatpush1.msra.mxu0 %v3931
    %3933 = vmatprep.subr.mxu0 0.0
    %v3934 = vand.u32 %v3391, 4294901760
    %3935 = vmatpush1.msra.mxu0 %v3934
    %3936 = vmatprep.subr.mxu0 0.0
    %v3937 = vand.u32 %v3392, 4294901760
    %3938 = vmatpush1.msra.mxu0 %v3937
    %3939 = vmatprep.subr.mxu0 0.0
    %3940 = vmatpush1.msra.mxu0 0.0
    %3941 = vmatprep.subr.mxu0 0.0
    %3942 = vmatpush1.msra.mxu0 0.0
    %3943 = vmatprep.subr.mxu0 0.0
    %3944 = vmatpush1.msra.mxu0 0.0
    %3945 = vmatprep.subr.mxu0 0.0
    %3946 = vmatpush1.msra.mxu0 0.0
    %3947 = vmatprep.subr.mxu0 0.0
    %3948 = vmatpush1.msra.mxu0 0.0
    %3949 = vmatprep.subr.mxu0 0.0
    %3950 = vmatpush1.msra.mxu0 0.0
    %3951 = vmatprep.subr.mxu0 0.0
    %3952 = vmatpush1.msra.mxu0 0.0
    %3953 = vmatprep.subr.mxu0 0.0
    %3954 = vmatpush1.msra.mxu0 0.0
    %3955 = vmatprep.subr.mxu0 0.0
    %3956 = vmatpush1.msra.mxu0 0.0
    %3957 = vmatprep.subr.mxu0 0.0
    %3958 = vmatpush1.msra.mxu0 0.0
    %3959 = vmatprep.subr.mxu0 0.0
    %3960 = vmatpush1.msra.mxu0 0.0
    %3961 = vmatprep.subr.mxu0 0.0
    %3962 = vmatpush1.msra.mxu0 0.0
    %3963 = vmatprep.subr.mxu0 0.0
    %3964 = vmatpush1.msra.mxu0 0.0
    %3965 = vmatprep.subr.mxu0 0.0
    %3966 = vmatpush1.msra.mxu0 0.0
    %3967 = vmatprep.subr.mxu0 0.0
    %3968 = vmatpush1.msra.mxu0 0.0
    %3969 = vmatprep.subr.mxu0 0.0
    %3970 = vmatpush1.msra.mxu0 0.0
    %3971 = vmatprep.subr.mxu0 0.0
    %3972 = vmatpush1.msra.mxu0 0.0
    %3973 = vmatprep.subr.mxu0 0.0
    %3974 = vmatpush1.msra.mxu0 0.0
    %3975 = vmatprep.subr.mxu0 0.0
    %3976 = vmatpush1.msra.mxu0 0.0
    %3977 = vmatprep.subr.mxu0 0.0
    %3978 = vmatpush1.msra.mxu0 0.0
    %3979 = vmatprep.subr.mxu0 0.0
    %3980 = vmatpush1.msra.mxu0 0.0
    %3981 = vmatprep.subr.mxu0 0.0
    %3982 = vmatpush1.msra.mxu0 0.0
    %3983 = vmatprep.subr.mxu0 0.0
    %3984 = vmatpush1.msra.mxu0 0.0
    %3985 = vmatprep.subr.mxu0 0.0
    %3986 = vmatpush1.msra.mxu0 0.0
    %3987 = vmatprep.subr.mxu0 0.0
    %3988 = vmatpush1.msra.mxu0 0.0
    %3989 = vmatprep.subr.mxu0 0.0
    %3990 = vmatpush1.msra.mxu0 0.0
    %3991 = vmatprep.subr.mxu0 0.0
    %3992 = vmatpush1.msra.mxu0 0.0
    %3993 = vmatprep.subr.mxu0 0.0
    %3994 = vmatpush1.msra.mxu0 0.0
    %3995 = vmatprep.mubr.f32.mxu0 0.0
    %v3996 = vand.u32 %v3922, 4294901760
    %v3997 = vsub.f32 %v3922, %v3996
    %v3998 = vand.u32 %v3997, 4294901760
    %v3999 = vsub.f32 %v3997, %v3998
    %v4000 = vand.u32 %v3999, 4294901760
    %4001 = vmatmul.mubr.f32.gmra.mrb[0].mxu0 %v4000
    %v4002 = vpop.f32.mrb[0].mxu0
    %v4003 = vadd.f32 %v3912, %v4002
    %v4004 = vpop.f32.mrb[0].mxu0
    %4005 = vmatprep.mubr.f32.mxu0 0.0
    %v4006 = vand.u32 %v3925, 4294901760
    %v4007 = vsub.f32 %v3925, %v4006
    %v4008 = vand.u32 %v4007, 4294901760
    %v4009 = vsub.f32 %v4007, %v4008
    %v4010 = vand.u32 %v4009, 4294901760
    %4011 = vmatmul.mubr.f32.gmra.mrb[0].mxu0 %v4010
    %v4012 = vpop.f32.mrb[0].mxu0
    %v4013 = vadd.f32 %v3918, %v4012
    %v4014 = vpop.f32.mrb[0].mxu0
    %4015 = vdwg.mxu0
    %4016 = vmatprep.subr.mxu0 0.0
    %v4017 = vand.u32 %v3389, 4294901760
    %v4018 = vsub.f32 %v3389, %v4017
    %v4019 = vand.u32 %v4018, 4294901760
    %v4020 = vsub.f32 %v4018, %v4019
    %v4021 = vand.u32 %v4020, 4294901760
    %4022 = vmatpush1.msra.mxu0 %v4021
    %4023 = vmatprep.subr.mxu0 0.0
    %v4024 = vand.u32 %v3390, 4294901760
    %v4025 = vsub.f32 %v3390, %v4024
    %v4026 = vand.u32 %v4025, 4294901760
    %v4027 = vsub.f32 %v4025, %v4026
    %v4028 = vand.u32 %v4027, 4294901760
    %4029 = vmatpush1.msra.mxu0 %v4028
    %4030 = vmatprep.subr.mxu0 0.0
    %v4031 = vand.u32 %v3391, 4294901760
    %v4032 = vsub.f32 %v3391, %v4031
    %v4033 = vand.u32 %v4032, 4294901760
    %v4034 = vsub.f32 %v4032, %v4033
    %v4035 = vand.u32 %v4034, 4294901760
    %4036 = vmatpush1.msra.mxu0 %v4035
    %4037 = vmatprep.subr.mxu0 0.0
    %v4038 = vand.u32 %v3392, 4294901760
    %v4039 = vsub.f32 %v3392, %v4038
    %v4040 = vand.u32 %v4039, 4294901760
    %v4041 = vsub.f32 %v4039, %v4040
    %v4042 = vand.u32 %v4041, 4294901760
    %4043 = vmatpush1.msra.mxu0 %v4042
    %4044 = vmatprep.subr.mxu0 0.0
    %4045 = vmatpush1.msra.mxu0 0.0
    %4046 = vmatprep.subr.mxu0 0.0
    %4047 = vmatpush1.msra.mxu0 0.0
    %4048 = vmatprep.subr.mxu0 0.0
    %4049 = vmatpush1.msra.mxu0 0.0
    %4050 = vmatprep.subr.mxu0 0.0
    %4051 = vmatpush1.msra.mxu0 0.0
    %4052 = vmatprep.subr.mxu0 0.0
    %4053 = vmatpush1.msra.mxu0 0.0
    %4054 = vmatprep.subr.mxu0 0.0
    %4055 = vmatpush1.msra.mxu0 0.0
    %4056 = vmatprep.subr.mxu0 0.0
    %4057 = vmatpush1.msra.mxu0 0.0
    %4058 = vmatprep.subr.mxu0 0.0
    %4059 = vmatpush1.msra.mxu0 0.0
    %4060 = vmatprep.subr.mxu0 0.0
    %4061 = vmatpush1.msra.mxu0 0.0
    %4062 = vmatprep.subr.mxu0 0.0
    %4063 = vmatpush1.msra.mxu0 0.0
    %4064 = vmatprep.subr.mxu0 0.0
    %4065 = vmatpush1.msra.mxu0 0.0
    %4066 = vmatprep.subr.mxu0 0.0
    %4067 = vmatpush1.msra.mxu0 0.0
    %4068 = vmatprep.subr.mxu0 0.0
    %4069 = vmatpush1.msra.mxu0 0.0
    %4070 = vmatprep.subr.mxu0 0.0
    %4071 = vmatpush1.msra.mxu0 0.0
    %4072 = vmatprep.subr.mxu0 0.0
    %4073 = vmatpush1.msra.mxu0 0.0
    %4074 = vmatprep.subr.mxu0 0.0
    %4075 = vmatpush1.msra.mxu0 0.0
    %4076 = vmatprep.subr.mxu0 0.0
    %4077 = vmatpush1.msra.mxu0 0.0
    %4078 = vmatprep.subr.mxu0 0.0
    %4079 = vmatpush1.msra.mxu0 0.0
    %4080 = vmatprep.subr.mxu0 0.0
    %4081 = vmatpush1.msra.mxu0 0.0
    %4082 = vmatprep.subr.mxu0 0.0
    %4083 = vmatpush1.msra.mxu0 0.0
    %4084 = vmatprep.subr.mxu0 0.0
    %4085 = vmatpush1.msra.mxu0 0.0
    %4086 = vmatprep.subr.mxu0 0.0
    %4087 = vmatpush1.msra.mxu0 0.0
    %4088 = vmatprep.subr.mxu0 0.0
    %4089 = vmatpush1.msra.mxu0 0.0
    %4090 = vmatprep.subr.mxu0 0.0
    %4091 = vmatpush1.msra.mxu0 0.0
    %4092 = vmatprep.subr.mxu0 0.0
    %4093 = vmatpush1.msra.mxu0 0.0
    %4094 = vmatprep.subr.mxu0 0.0
    %4095 = vmatpush1.msra.mxu0 0.0
    %4096 = vmatprep.subr.mxu0 0.0
    %4097 = vmatpush1.msra.mxu0 0.0
    %4098 = vmatprep.subr.mxu0 0.0
    %4099 = vmatpush1.msra.mxu0 0.0
    %4100 = vmatprep.mubr.f32.mxu0 0.0
    %v4101 = vand.u32 %v3922, 4294901760
    %4102 = vmatmul.mubr.f32.gmra.mrb[0].mxu0 %v4101
    %v4103 = vpop.f32.mrb[0].mxu0
    %v4104 = vadd.f32 %v4003, %v4103
    %v4105 = vpop.f32.mrb[0].mxu0
    %4106 = vmatprep.mubr.f32.mxu0 0.0
    %v4107 = vand.u32 %v3925, 4294901760
    %4108 = vmatmul.mubr.f32.gmra.mrb[0].mxu0 %v4107
    %v4109 = vpop.f32.mrb[0].mxu0
    %v4110 = vadd.f32 %v4013, %v4109
    %v4111 = vpop.f32.mrb[0].mxu0
    %4112 = vdwg.mxu0
    %4113 = vmatprep.subr.mxu0 0.0
    %v4114 = vand.u32 %v3389, 4294901760
    %v4115 = vsub.f32 %v3389, %v4114
    %4116 = vmatpush1.msra.mxu0 %v4115
    %4117 = vmatprep.subr.mxu0 0.0
    %v4118 = vand.u32 %v3390, 4294901760
    %v4119 = vsub.f32 %v3390, %v4118
    %4120 = vmatpush1.msra.mxu0 %v4119
    %4121 = vmatprep.subr.mxu0 0.0
    %v4122 = vand.u32 %v3391, 4294901760
    %v4123 = vsub.f32 %v3391, %v4122
    %4124 = vmatpush1.msra.mxu0 %v4123
    %4125 = vmatprep.subr.mxu0 0.0
    %v4126 = vand.u32 %v3392, 4294901760
    %v4127 = vsub.f32 %v3392, %v4126
    %4128 = vmatpush1.msra.mxu0 %v4127
    %4129 = vmatprep.subr.mxu0 0.0
    %4130 = vmatpush1.msra.mxu0 0.0
    %4131 = vmatprep.subr.mxu0 0.0
    %4132 = vmatpush1.msra.mxu0 0.0
    %4133 = vmatprep.subr.mxu0 0.0
    %4134 = vmatpush1.msra.mxu0 0.0
    %4135 = vmatprep.subr.mxu0 0.0
    %4136 = vmatpush1.msra.mxu0 0.0
    %4137 = vmatprep.subr.mxu0 0.0
    %4138 = vmatpush1.msra.mxu0 0.0
    %4139 = vmatprep.subr.mxu0 0.0
    %4140 = vmatpush1.msra.mxu0 0.0
    %4141 = vmatprep.subr.mxu0 0.0
    %4142 = vmatpush1.msra.mxu0 0.0
    %4143 = vmatprep.subr.mxu0 0.0
    %4144 = vmatpush1.msra.mxu0 0.0
    %4145 = vmatprep.subr.mxu0 0.0
    %4146 = vmatpush1.msra.mxu0 0.0
    %4147 = vmatprep.subr.mxu0 0.0
    %4148 = vmatpush1.msra.mxu0 0.0
    %4149 = vmatprep.subr.mxu0 0.0
    %4150 = vmatpush1.msra.mxu0 0.0
    %4151 = vmatprep.subr.mxu0 0.0
    %4152 = vmatpush1.msra.mxu0 0.0
    %4153 = vmatprep.subr.mxu0 0.0
    %4154 = vmatpush1.msra.mxu0 0.0
    %4155 = vmatprep.subr.mxu0 0.0
    %4156 = vmatpush1.msra.mxu0 0.0
    %4157 = vmatprep.subr.mxu0 0.0
    %4158 = vmatpush1.msra.mxu0 0.0
    %4159 = vmatprep.subr.mxu0 0.0
    %4160 = vmatpush1.msra.mxu0 0.0
    %4161 = vmatprep.subr.mxu0 0.0
    %4162 = vmatpush1.msra.mxu0 0.0
    %4163 = vmatprep.subr.mxu0 0.0
    %4164 = vmatpush1.msra.mxu0 0.0
    %4165 = vmatprep.subr.mxu0 0.0
    %4166 = vmatpush1.msra.mxu0 0.0
    %4167 = vmatprep.subr.mxu0 0.0
    %4168 = vmatpush1.msra.mxu0 0.0
    %4169 = vmatprep.subr.mxu0 0.0
    %4170 = vmatpush1.msra.mxu0 0.0
    %4171 = vmatprep.subr.mxu0 0.0
    %4172 = vmatpush1.msra.mxu0 0.0
    %4173 = vmatprep.subr.mxu0 0.0
    %4174 = vmatpush1.msra.mxu0 0.0
    %4175 = vmatprep.subr.mxu0 0.0
    %4176 = vmatpush1.msra.mxu0 0.0
    %4177 = vmatprep.subr.mxu0 0.0
    %4178 = vmatpush1.msra.mxu0 0.0
    %4179 = vmatprep.subr.mxu0 0.0
    %4180 = vmatpush1.msra.mxu0 0.0
    %4181 = vmatprep.subr.mxu0 0.0
    %4182 = vmatpush1.msra.mxu0 0.0
    %4183 = vmatprep.subr.mxu0 0.0
    %4184 = vmatpush1.msra.mxu0 0.0
    %4185 = vmatprep.mubr.f32.mxu0 0.0
    %v4186 = vand.u32 %v3922, 4294901760
    %v4187 = vsub.f32 %v3922, %v4186
    %4188 = vmatmul.mubr.f32.gmra.mrb[0].mxu0 %v4187
    %v4189 = vpop.f32.mrb[0].mxu0
    %v4190 = vadd.f32 %v4104, %v4189
    %v4191 = vpop.f32.mrb[0].mxu0
    %4192 = vmatprep.mubr.f32.mxu0 0.0
    %v4193 = vand.u32 %v3925, 4294901760
    %v4194 = vsub.f32 %v3925, %v4193
    %4195 = vmatmul.mubr.f32.gmra.mrb[0].mxu0 %v4194
    %v4196 = vpop.f32.mrb[0].mxu0
    %v4197 = vadd.f32 %v4110, %v4196
    %v4198 = vpop.f32.mrb[0].mxu0
    %4199 = vdwg.mxu0
    %4200 = vmatprep.subr.mxu0 0.0
    %v4201 = vand.u32 %v3389, 4294901760
    %4202 = vmatpush1.msra.mxu0 %v4201
    %4203 = vmatprep.subr.mxu0 0.0
    %v4204 = vand.u32 %v3390, 4294901760
    %4205 = vmatpush1.msra.mxu0 %v4204
    %4206 = vmatprep.subr.mxu0 0.0
    %v4207 = vand.u32 %v3391, 4294901760
    %4208 = vmatpush1.msra.mxu0 %v4207
    %4209 = vmatprep.subr.mxu0 0.0
    %v4210 = vand.u32 %v3392, 4294901760
    %4211 = vmatpush1.msra.mxu0 %v4210
    %4212 = vmatprep.subr.mxu0 0.0
    %4213 = vmatpush1.msra.mxu0 0.0
    %4214 = vmatprep.subr.mxu0 0.0
    %4215 = vmatpush1.msra.mxu0 0.0
    %4216 = vmatprep.subr.mxu0 0.0
    %4217 = vmatpush1.msra.mxu0 0.0
    %4218 = vmatprep.subr.mxu0 0.0
    %4219 = vmatpush1.msra.mxu0 0.0
    %4220 = vmatprep.subr.mxu0 0.0
    %4221 = vmatpush1.msra.mxu0 0.0
    %4222 = vmatprep.subr.mxu0 0.0
    %4223 = vmatpush1.msra.mxu0 0.0
    %4224 = vmatprep.subr.mxu0 0.0
    %4225 = vmatpush1.msra.mxu0 0.0
    %4226 = vmatprep.subr.mxu0 0.0
    %4227 = vmatpush1.msra.mxu0 0.0
    %4228 = vmatprep.subr.mxu0 0.0
    %4229 = vmatpush1.msra.mxu0 0.0
    %4230 = vmatprep.subr.mxu0 0.0
    %4231 = vmatpush1.msra.mxu0 0.0
    %4232 = vmatprep.subr.mxu0 0.0
    %4233 = vmatpush1.msra.mxu0 0.0
    %4234 = vmatprep.subr.mxu0 0.0
    %4235 = vmatpush1.msra.mxu0 0.0
    %4236 = vmatprep.subr.mxu0 0.0
    %4237 = vmatpush1.msra.mxu0 0.0
    %4238 = vmatprep.subr.mxu0 0.0
    %4239 = vmatpush1.msra.mxu0 0.0
    %4240 = vmatprep.subr.mxu0 0.0
    %4241 = vmatpush1.msra.mxu0 0.0
    %4242 = vmatprep.subr.mxu0 0.0
    %4243 = vmatpush1.msra.mxu0 0.0
    %4244 = vmatprep.subr.mxu0 0.0
    %4245 = vmatpush1.msra.mxu0 0.0
    %4246 = vmatprep.subr.mxu0 0.0
    %4247 = vmatpush1.msra.mxu0 0.0
    %4248 = vmatprep.subr.mxu0 0.0
    %4249 = vmatpush1.msra.mxu0 0.0
    %4250 = vmatprep.subr.mxu0 0.0
    %4251 = vmatpush1.msra.mxu0 0.0
    %4252 = vmatprep.subr.mxu0 0.0
    %4253 = vmatpush1.msra.mxu0 0.0
    %4254 = vmatprep.subr.mxu0 0.0
    %4255 = vmatpush1.msra.mxu0 0.0
    %4256 = vmatprep.subr.mxu0 0.0
    %4257 = vmatpush1.msra.mxu0 0.0
    %4258 = vmatprep.subr.mxu0 0.0
    %4259 = vmatpush1.msra.mxu0 0.0
    %4260 = vmatprep.subr.mxu0 0.0
    %4261 = vmatpush1.msra.mxu0 0.0
    %4262 = vmatprep.subr.mxu0 0.0
    %4263 = vmatpush1.msra.mxu0 0.0
    %4264 = vmatprep.subr.mxu0 0.0
    %4265 = vmatpush1.msra.mxu0 0.0
    %4266 = vmatprep.subr.mxu0 0.0
    %4267 = vmatpush1.msra.mxu0 0.0
    %4268 = vmatprep.mubr.f32.mxu0 0.0
    %v4269 = vand.u32 %v3922, 4294901760
    %v4270 = vsub.f32 %v3922, %v4269
    %v4271 = vand.u32 %v4270, 4294901760
    %4272 = vmatmul.mubr.f32.gmra.mrb[0].mxu0 %v4271
    %v4273 = vpop.f32.mrb[0].mxu0
    %v4274 = vadd.f32 %v4190, %v4273
    %v4275 = vpop.f32.mrb[0].mxu0
    %4276 = vmatprep.mubr.f32.mxu0 0.0
    %v4277 = vand.u32 %v3925, 4294901760
    %v4278 = vsub.f32 %v3925, %v4277
    %v4279 = vand.u32 %v4278, 4294901760
    %4280 = vmatmul.mubr.f32.gmra.mrb[0].mxu0 %v4279
    %v4281 = vpop.f32.mrb[0].mxu0
    %v4282 = vadd.f32 %v4197, %v4281
    %v4283 = vpop.f32.mrb[0].mxu0
    %4284 = vdwg.mxu0
    %4285 = vmatprep.subr.mxu0 0.0
    %v4286 = vand.u32 %v3389, 4294901760
    %v4287 = vsub.f32 %v3389, %v4286
    %v4288 = vand.u32 %v4287, 4294901760
    %4289 = vmatpush1.msra.mxu0 %v4288
    %4290 = vmatprep.subr.mxu0 0.0
    %v4291 = vand.u32 %v3390, 4294901760
    %v4292 = vsub.f32 %v3390, %v4291
    %v4293 = vand.u32 %v4292, 4294901760
    %4294 = vmatpush1.msra.mxu0 %v4293
    %4295 = vmatprep.subr.mxu0 0.0
    %v4296 = vand.u32 %v3391, 4294901760
    %v4297 = vsub.f32 %v3391, %v4296
    %v4298 = vand.u32 %v4297, 4294901760
    %4299 = vmatpush1.msra.mxu0 %v4298
    %4300 = vmatprep.subr.mxu0 0.0
    %v4301 = vand.u32 %v3392, 4294901760
    %v4302 = vsub.f32 %v3392, %v4301
    %v4303 = vand.u32 %v4302, 4294901760
    %4304 = vmatpush1.msra.mxu0 %v4303
    %4305 = vmatprep.subr.mxu0 0.0
    %4306 = vmatpush1.msra.mxu0 0.0
    %4307 = vmatprep.subr.mxu0 0.0
    %4308 = vmatpush1.msra.mxu0 0.0
    %4309 = vmatprep.subr.mxu0 0.0
    %4310 = vmatpush1.msra.mxu0 0.0
    %4311 = vmatprep.subr.mxu0 0.0
    %4312 = vmatpush1.msra.mxu0 0.0
    %4313 = vmatprep.subr.mxu0 0.0
    %4314 = vmatpush1.msra.mxu0 0.0
    %4315 = vmatprep.subr.mxu0 0.0
    %4316 = vmatpush1.msra.mxu0 0.0
    %4317 = vmatprep.subr.mxu0 0.0
    %4318 = vmatpush1.msra.mxu0 0.0
    %4319 = vmatprep.subr.mxu0 0.0
    %4320 = vmatpush1.msra.mxu0 0.0
    %4321 = vmatprep.subr.mxu0 0.0
    %4322 = vmatpush1.msra.mxu0 0.0
    %4323 = vmatprep.subr.mxu0 0.0
    %4324 = vmatpush1.msra.mxu0 0.0
    %4325 = vmatprep.subr.mxu0 0.0
    %4326 = vmatpush1.msra.mxu0 0.0
    %4327 = vmatprep.subr.mxu0 0.0
    %4328 = vmatpush1.msra.mxu0 0.0
    %4329 = vmatprep.subr.mxu0 0.0
    %4330 = vmatpush1.msra.mxu0 0.0
    %4331 = vmatprep.subr.mxu0 0.0
    %4332 = vmatpush1.msra.mxu0 0.0
    %4333 = vmatprep.subr.mxu0 0.0
    %4334 = vmatpush1.msra.mxu0 0.0
    %4335 = vmatprep.subr.mxu0 0.0
    %4336 = vmatpush1.msra.mxu0 0.0
    %4337 = vmatprep.subr.mxu0 0.0
    %4338 = vmatpush1.msra.mxu0 0.0
    %4339 = vmatprep.subr.mxu0 0.0
    %4340 = vmatpush1.msra.mxu0 0.0
    %4341 = vmatprep.subr.mxu0 0.0
    %4342 = vmatpush1.msra.mxu0 0.0
    %4343 = vmatprep.subr.mxu0 0.0
    %4344 = vmatpush1.msra.mxu0 0.0
    %4345 = vmatprep.subr.mxu0 0.0
    %4346 = vmatpush1.msra.mxu0 0.0
    %4347 = vmatprep.subr.mxu0 0.0
    %4348 = vmatpush1.msra.mxu0 0.0
    %4349 = vmatprep.subr.mxu0 0.0
    %4350 = vmatpush1.msra.mxu0 0.0
    %4351 = vmatprep.subr.mxu0 0.0
    %4352 = vmatpush1.msra.mxu0 0.0
    %4353 = vmatprep.subr.mxu0 0.0
    %4354 = vmatpush1.msra.mxu0 0.0
    %4355 = vmatprep.subr.mxu0 0.0
    %4356 = vmatpush1.msra.mxu0 0.0
    %4357 = vmatprep.subr.mxu0 0.0
    %4358 = vmatpush1.msra.mxu0 0.0
    %4359 = vmatprep.subr.mxu0 0.0
    %4360 = vmatpush1.msra.mxu0 0.0
    %4361 = vmatprep.mubr.f32.mxu0 0.0
    %v4362 = vand.u32 %v3922, 4294901760
    %4363 = vmatmul.mubr.f32.gmra.mrb[0].mxu0 %v4362
    %v4364 = vpop.f32.mrb[0].mxu0
    %v4365 = vadd.f32 %v4274, %v4364
    %v4366 = vpop.f32.mrb[0].mxu0
    %4367 = vmatprep.mubr.f32.mxu0 0.0
    %v4368 = vand.u32 %v3925, 4294901760
    %4369 = vmatmul.mubr.f32.gmra.mrb[0].mxu0 %v4368
    %v4370 = vpop.f32.mrb[0].mxu0
    %v4371 = vadd.f32 %v4282, %v4370
    %v4372 = vpop.f32.mrb[0].mxu0
    %4373 = vdwg.mxu0
    %4374 = vmatprep.subr.mxu0 0.0
    %v4375 = vand.u32 %v3389, 4294901760
    %4376 = vmatpush1.msra.mxu0 %v4375
    %4377 = vmatprep.subr.mxu0 0.0
    %v4378 = vand.u32 %v3390, 4294901760
    %4379 = vmatpush1.msra.mxu0 %v4378
    %4380 = vmatprep.subr.mxu0 0.0
    %v4381 = vand.u32 %v3391, 4294901760
    %4382 = vmatpush1.msra.mxu0 %v4381
    %4383 = vmatprep.subr.mxu0 0.0
    %v4384 = vand.u32 %v3392, 4294901760
    %4385 = vmatpush1.msra.mxu0 %v4384
    %4386 = vmatprep.subr.mxu0 0.0
    %4387 = vmatpush1.msra.mxu0 0.0
    %4388 = vmatprep.subr.mxu0 0.0
    %4389 = vmatpush1.msra.mxu0 0.0
    %4390 = vmatprep.subr.mxu0 0.0
    %4391 = vmatpush1.msra.mxu0 0.0
    %4392 = vmatprep.subr.mxu0 0.0
    %4393 = vmatpush1.msra.mxu0 0.0
    %4394 = vmatprep.subr.mxu0 0.0
    %4395 = vmatpush1.msra.mxu0 0.0
    %4396 = vmatprep.subr.mxu0 0.0
    %4397 = vmatpush1.msra.mxu0 0.0
    %4398 = vmatprep.subr.mxu0 0.0
    %4399 = vmatpush1.msra.mxu0 0.0
    %4400 = vmatprep.subr.mxu0 0.0
    %4401 = vmatpush1.msra.mxu0 0.0
    %4402 = vmatprep.subr.mxu0 0.0
    %4403 = vmatpush1.msra.mxu0 0.0
    %4404 = vmatprep.subr.mxu0 0.0
    %4405 = vmatpush1.msra.mxu0 0.0
    %4406 = vmatprep.subr.mxu0 0.0
    %4407 = vmatpush1.msra.mxu0 0.0
    %4408 = vmatprep.subr.mxu0 0.0
    %4409 = vmatpush1.msra.mxu0 0.0
    %4410 = vmatprep.subr.mxu0 0.0
    %4411 = vmatpush1.msra.mxu0 0.0
    %4412 = vmatprep.subr.mxu0 0.0
    %4413 = vmatpush1.msra.mxu0 0.0
    %4414 = vmatprep.subr.mxu0 0.0
    %4415 = vmatpush1.msra.mxu0 0.0
    %4416 = vmatprep.subr.mxu0 0.0
    %4417 = vmatpush1.msra.mxu0 0.0
    %4418 = vmatprep.subr.mxu0 0.0
    %4419 = vmatpush1.msra.mxu0 0.0
    %4420 = vmatprep.subr.mxu0 0.0
    %4421 = vmatpush1.msra.mxu0 0.0
    %4422 = vmatprep.subr.mxu0 0.0
    %4423 = vmatpush1.msra.mxu0 0.0
    %4424 = vmatprep.subr.mxu0 0.0
    %4425 = vmatpush1.msra.mxu0 0.0
    %4426 = vmatprep.subr.mxu0 0.0
    %4427 = vmatpush1.msra.mxu0 0.0
    %4428 = vmatprep.subr.mxu0 0.0
    %4429 = vmatpush1.msra.mxu0 0.0
    %4430 = vmatprep.subr.mxu0 0.0
    %4431 = vmatpush1.msra.mxu0 0.0
    %4432 = vmatprep.subr.mxu0 0.0
    %4433 = vmatpush1.msra.mxu0 0.0
    %4434 = vmatprep.subr.mxu0 0.0
    %4435 = vmatpush1.msra.mxu0 0.0
    %4436 = vmatprep.subr.mxu0 0.0
    %4437 = vmatpush1.msra.mxu0 0.0
    %4438 = vmatprep.subr.mxu0 0.0
    %4439 = vmatpush1.msra.mxu0 0.0
    %4440 = vmatprep.subr.mxu0 0.0
    %4441 = vmatpush1.msra.mxu0 0.0
    %4442 = vmatprep.mubr.f32.mxu0 0.0
    %v4443 = vand.u32 %v3922, 4294901760
    %4444 = vmatmul.mubr.f32.gmra.mrb[0].mxu0 %v4443
    %v4445 = vpop.f32.mrb[0].mxu0
    %v4446 = vadd.f32 %v4365, %v4445
    %v4447 = vpop.f32.mrb[0].mxu0
    %4448 = vmatprep.mubr.f32.mxu0 0.0
    %v4449 = vand.u32 %v3925, 4294901760
    %4450 = vmatmul.mubr.f32.gmra.mrb[0].mxu0 %v4449
    %v4451 = vpop.f32.mrb[0].mxu0
    %v4452 = vadd.f32 %v4371, %v4451
    %v4453 = vpop.f32.mrb[0].mxu0
    %4454 = vdwg.mxu0
    %v4455 = vld [vmem:[%s2236] sm:$0x1]
    %v4457 = vlaneseq
    %v4458 = vshrl.u32 %v4457, 7
    %v4459 = vsub.s32 0, %v4458
    %v4460 = vrot.slane %v4455, %v4459
    %v4462 = vadd.f32 %v4446, %v4460
    %v4463 = vadd.f32 %v4452, %v4460
    %s4464 = scalar_lea.vmem %s3, 16
    %4465 = vst.msk [vmem:[%s4464] sm:$0xff] %vm2246, %v4462
    %4466 = vst.msk [vmem:[%s4464 + $0x8] sm:$0x7] %vm2248, %v4463
    // Predicated region
    $region18: #{tpu_custom_call.1} parent=1 // pred_check
      _
    $region19: #{tpu_custom_call.1} parent=1 // pred_check_branch
      %4468 = sbr.rel (0) target = $region21
    $region20: #{tpu_custom_call.1} parent=1 // pred_region
      _
    $region21: #{tpu_custom_call.1} parent=1 // pred_fallthru
      _
    // Predicated region
    $region22: #{tpu_custom_call.1} parent=1 // pred_check
      _
    $region23: #{tpu_custom_call.1} parent=1 // pred_check_branch
      %4470 = sbr.rel (0) target = $region25
    $region24: #{tpu_custom_call.1} parent=1 // pred_region
      _
    $region25: #{tpu_custom_call.1} parent=1 // pred_fallthru
      _
    %4471 = vsyncpa [#allocation3], 1

</llo_original>
